<compile_context>
chip_gen: v7x
topology: tpu7x:2x2x1
jax: 0.10.0
libtpu: 0.0.40
codegen_flags: <defaults>
</compile_context>

<pallas_src>
import functools
import math

import jax
import jax.numpy as jnp
from jax.experimental import pallas as pl
from jax.experimental.pallas import tpu as pltpu


# bf16 MXU inputs + f32 accumulation (fast path on v6e/v7x, supported on v5e).
# Set to jnp.float32 for bit-closer parity with an all-f32 PyTorch reference.
_MXU_DTYPE = jnp.bfloat16


# ----------------------------------------------------------------------------
# Fused decoder kernel: one grid step == one batch element, everything in VMEM
# ----------------------------------------------------------------------------
def _decoder_kernel(
    z_ref,                                   # (1, T, Ld)
    quant_w_ref, quant_b_ref,                # (Ld, C), (1, C)
    patch_w_ref, patch_b_ref,                # (C, C),  (1, C)
    pos_ref,                                 # (1, T, C)
    ln1_g_ref, ln1_b_ref,                    # (L, 1, C)
    qkv_w_ref, qkv_b_ref,                    # (L, C, 3C), (L, 1, 3C)
    proj_w_ref, proj_b_ref,                  # (L, C, C),  (L, 1, C)
    ln2_g_ref, ln2_b_ref,                    # (L, 1, C)
    fc1_w_ref, fc1_b_ref,                    # (L, C, 4C), (L, 1, 4C)
    fc2_w_ref, fc2_b_ref,                    # (L, 4C, C), (L, 1, C)
    lnf_g_ref, lnf_b_ref,                    # (1, C)
    out_w_ref, out_b_ref,                    # (C, 3*p*p), (1, 3*p*p)
    o_ref,                                   # (1, T, 3*p*p)
    *, n_layers, n_heads,
):
    f32 = jnp.float32

    def mm(x, w, b):
        # bf16 MXU inputs, f32 accumulation, bias fused in epilogue.
        acc = jnp.dot(x.astype(_MXU_DTYPE), w.astype(_MXU_DTYPE),
                      preferred_element_type=f32)
        return acc + b.astype(f32)

    def ln(x, g, b, eps=1e-5):
        # x: (T, C) f32 ; g, b: (1, C)
        mu = jnp.mean(x, axis=-1, keepdims=True)
        var = jnp.mean(jnp.square(x - mu), axis=-1, keepdims=True)
        xhat = (x - mu) * jax.lax.rsqrt(var + eps)
        return xhat * g.astype(f32) + b.astype(f32)

    # quant_proj (Linear latent_dim -> C) + ViT 1x1 patch embed + pos embed
    x = mm(z_ref[0].astype(f32), quant_w_ref[...], quant_b_ref[...])   # (T, C)
    x = mm(x, patch_w_ref[...], patch_b_ref[...])
    x = x + pos_ref[0].astype(f32)

    T, C = x.shape
    Dh = C // n_heads
    scale = 1.0 / math.sqrt(Dh)

    for l in range(n_layers):
        # ---------------- MHSA (pre-norm), fully in-VMEM ----------------
        h = ln(x, ln1_g_ref[l], ln1_b_ref[l])
        qkv = mm(h, qkv_w_ref[l], qkv_b_ref[l])                         # (T, 3C)
        # Fold the attention scale into q (T*Dh elements instead of T*T
        # scores) and cast each slab to bf16 once rather than per head.
        q = (qkv[:, :C] * scale).astype(_MXU_DTYPE)
        k = qkv[:, C:2 * C].astype(_MXU_DTYPE)
        v = qkv[:, 2 * C:].astype(_MXU_DTYPE)

        heads = []
        for hd in range(n_heads):
            c0 = hd * Dh
            qh = q[:, c0:c0 + Dh]
            kh = k[:, c0:c0 + Dh]
            vh = v[:, c0:c0 + Dh]
            # q @ k^T without materialising a transpose (contract last dims).
            s = jax.lax.dot_general(
                qh, kh, (((1,), (1,)), ((), ())),
                preferred_element_type=f32)                             # (T, T)
            s = s - jnp.max(s, axis=-1, keepdims=True)
            ps = jnp.exp(s)
            denom = jnp.sum(ps, axis=-1, keepdims=True)
            ps = ps * pl.reciprocal(denom, approx=True)
            heads.append(jnp.dot(ps.astype(_MXU_DTYPE), vh,
                                 preferred_element_type=f32))           # (T, Dh)
        # heads concatenated back along lanes -> (T, C), stays in vregs
        attn = jnp.concatenate(heads, axis=-1)
        x = x + mm(attn, proj_w_ref[l], proj_b_ref[l])                  # residual

        # ---------------- MLP (pre-norm) ----------------
        h2 = ln(x, ln2_g_ref[l], ln2_b_ref[l])
        m = jax.nn.gelu(mm(h2, fc1_w_ref[l], fc1_b_ref[l]),
                        approximate=True)                               # (T, 4C)
        x = x + mm(m, fc2_w_ref[l], fc2_b_ref[l])                       # residual

    # final LN + embd_proj (1x1 Conv == per-token linear)
    x = ln(x, lnf_g_ref[...], lnf_b_ref[...])
    y = mm(x, out_w_ref[...], out_b_ref[...])                           # (T, 3*p*p)
    o_ref[0] = y.astype(o_ref.dtype)


# ----------------------------------------------------------------------------
# Wrapper: single pallas_call + pure-layout pixel rearrange in XLA glue
# ----------------------------------------------------------------------------
def decoder_forward(params, z, cfg):
    """z: (B, n_patches, latent_dim) -> image (B, 3, image_size, image_size)."""
    B, T, Ld = z.shape
    p = cfg["patch_size"]
    pd = cfg["patch_dim"]
    out_dim = 3 * p * p

    weights = (
        params["quant_proj_w"], params["quant_proj_b"],
        params["patch_embed_w"], params["patch_embed_b"],
        params["pos_embed"],
        params["ln1_g"], params["ln1_b"],
        params["qkv_w"], params["qkv_b"],
        params["proj_w"], params["proj_b"],
        params["ln2_g"], params["ln2_b"],
        params["fc1_w"], params["fc1_b"],
        params["fc2_w"], params["fc2_b"],
        params["ln_f_g"], params["ln_f_b"],
        params["embd_proj_w"], params["embd_proj_b"],
    )

    # Weight arrays: full-shape blocks with a constant block index -> DMA'd
    # once and VMEM-resident across all grid steps.
    def _resident_spec(a):
        nd = a.ndim
        return pl.BlockSpec(a.shape, lambda b, _nd=nd: (0,) * _nd)

    in_specs = [pl.BlockSpec((1, T, Ld), lambda b: (b, 0, 0))]
    in_specs += [_resident_spec(w) for w in weights]

    kernel = functools.partial(
        _decoder_kernel, n_layers=cfg["n_layers"], n_heads=cfg["n_heads"])

    y = pl.pallas_call(
        kernel,
        out_shape=jax.ShapeDtypeStruct((B, T, out_dim), jnp.float32),
        grid=(B,),
        in_specs=in_specs,
        out_specs=pl.BlockSpec((1, T, out_dim), lambda b: (b, 0, 0)),
        compiler_params=pltpu.CompilerParams(
            dimension_semantics=("parallel",)),
    )(z, *weights)

    # rearrange 'b (h w) c -> b c h w' then 'b (p1 p2 c) h w -> b c (h p1) (w p2)'
    # TODO(synk): the (p1, p2, c) packed-channel order must match the PyTorch
    #             Conv2d weight layout of embd_proj.
    y = y.reshape(B, pd, pd, p, p, 3)                 # (B, h, w, p1, p2, c)
    img = jnp.transpose(y, (0, 5, 1, 3, 2, 4))        # (B, c, h, p1, w, p2)
    img = img.reshape(B, 3, pd * p, pd * p)
    return img


# ----------------------------------------------------------------------------
# Deterministic synthetic parameter init (per-layer weights stacked on axis 0)
# ----------------------------------------------------------------------------
def init_params(key, cfg):
    C = cfg["n_embd"]
    Ld = cfg["latent_dim"]
    T = cfg["n_patches"]
    p = cfg["patch_size"]
    L = cfg["n_layers"]
    mlp = 4 * C

    def w(k, shape, scale=0.02):
        return (scale * jax.random.normal(k, shape)).astype(jnp.float32)

    keys = iter(jax.random.split(key, 16))
    return {
        "quant_proj_w": w(next(keys), (Ld, C)),
        "quant_proj_b": jnp.zeros((1, C), jnp.float32),
        "patch_embed_w": w(next(keys), (C, C)),
        "patch_embed_b": jnp.zeros((1, C), jnp.float32),
        "pos_embed": w(next(keys), (1, T, C)),
        "ln_f_g": jnp.ones((1, C), jnp.float32),
        "ln_f_b": jnp.zeros((1, C), jnp.float32),
        "embd_proj_w": w(next(keys), (C, 3 * p * p)),
        "embd_proj_b": jnp.zeros((1, 3 * p * p), jnp.float32),
        # stacked per-layer transformer weights (leading dim = n_layers)
        "ln1_g": jnp.ones((L, 1, C), jnp.float32),
        "ln1_b": jnp.zeros((L, 1, C), jnp.float32),
        "qkv_w": w(next(keys), (L, C, 3 * C)),
        "qkv_b": jnp.zeros((L, 1, 3 * C), jnp.float32),
        "proj_w": w(next(keys), (L, C, C)),
        "proj_b": jnp.zeros((L, 1, C), jnp.float32),
        "ln2_g": jnp.ones((L, 1, C), jnp.float32),
        "ln2_b": jnp.zeros((L, 1, C), jnp.float32),
        "fc1_w": w(next(keys), (L, C, mlp)),
        "fc1_b": jnp.zeros((L, 1, mlp), jnp.float32),
        "fc2_w": w(next(keys), (L, mlp, C)),
        "fc2_b": jnp.zeros((L, 1, C), jnp.float32),
    }


# ----------------------------------------------------------------------------
if __name__ == "__main__":
    cfg = {
        "image_size": 16,
        "patch_size": 4,
        "latent_dim": 8,
        "n_embd": 32,
        "n_layers": 2,
        "n_heads": 4,
    }
    cfg["patch_dim"] = cfg["image_size"] // cfg["patch_size"]      # 4
    cfg["n_patches"] = cfg["patch_dim"] ** 2                       # 16 latent tokens

    root = jax.random.PRNGKey(0)
    k_params, k_z = jax.random.split(root)
    params = init_params(k_params, cfg)

    batch = 2
    z = jax.random.normal(k_z, (batch, cfg["n_patches"], cfg["latent_dim"]),
                          dtype=jnp.float32)

    fwd = jax.jit(lambda prm, inp: decoder_forward(prm, inp, cfg))
    img = fwd(params, z)
    jax.block_until_ready(img)

    assert img.shape == (batch, 3, cfg["image_size"], cfg["image_size"]), img.shape
    assert img.dtype == jnp.float32
    assert bool(jnp.all(jnp.isfinite(img)))
    print("KERNEL_OK")
</pallas_src>

<mosaic_0001>
module attributes {stable_mosaic.version = 11 : i64} {
  func.func @_decoder_kernel(%arg0: i32, %arg1: memref<1x16x8xf32, #tpu.memory_space<vmem>>, %arg2: memref<8x32xf32, #tpu.memory_space<vmem>>, %arg3: memref<1x32xf32, #tpu.memory_space<vmem>>, %arg4: memref<32x32xf32, #tpu.memory_space<vmem>>, %arg5: memref<1x32xf32, #tpu.memory_space<vmem>>, %arg6: memref<1x16x32xf32, #tpu.memory_space<vmem>>, %arg7: memref<2x1x32xf32, #tpu.memory_space<vmem>>, %arg8: memref<2x1x32xf32, #tpu.memory_space<vmem>>, %arg9: memref<2x32x96xf32, #tpu.memory_space<vmem>>, %arg10: memref<2x1x96xf32, #tpu.memory_space<vmem>>, %arg11: memref<2x32x32xf32, #tpu.memory_space<vmem>>, %arg12: memref<2x1x32xf32, #tpu.memory_space<vmem>>, %arg13: memref<2x1x32xf32, #tpu.memory_space<vmem>>, %arg14: memref<2x1x32xf32, #tpu.memory_space<vmem>>, %arg15: memref<2x32x128xf32, #tpu.memory_space<vmem>>, %arg16: memref<2x1x128xf32, #tpu.memory_space<vmem>>, %arg17: memref<2x128x32xf32, #tpu.memory_space<vmem>>, %arg18: memref<2x1x32xf32, #tpu.memory_space<vmem>>, %arg19: memref<1x32xf32, #tpu.memory_space<vmem>>, %arg20: memref<1x32xf32, #tpu.memory_space<vmem>>, %arg21: memref<32x48xf32, #tpu.memory_space<vmem>>, %arg22: memref<1x48xf32, #tpu.memory_space<vmem>>, %arg23: memref<1x16x48xf32, #tpu.memory_space<vmem>>) attributes {dimension_semantics = [#tpu.dimension_semantics<parallel>], iteration_bounds = array<i64: 2>, scalar_prefetch = 0 : i64, scratch_operands = 0 : i64, tpu.core_type = #tpu.core_type<tc>, window_params = [{transform_indices = @transform_0, window_bounds = array<i64: 1, 16, 8>}, {pipeline_mode = #tpu.pipeline_mode<synchronous>, transform_indices = @transform_1, window_bounds = array<i64: 8, 32>}, {pipeline_mode = #tpu.pipeline_mode<synchronous>, transform_indices = @transform_2, window_bounds = array<i64: 1, 32>}, {pipeline_mode = #tpu.pipeline_mode<synchronous>, transform_indices = @transform_3, window_bounds = array<i64: 32, 32>}, {pipeline_mode = #tpu.pipeline_mode<synchronous>, transform_indices = @transform_4, window_bounds = array<i64: 1, 32>}, {pipeline_mode = #tpu.pipeline_mode<synchronous>, transform_indices = @transform_5, window_bounds = array<i64: 1, 16, 32>}, {pipeline_mode = #tpu.pipeline_mode<synchronous>, transform_indices = @transform_6, window_bounds = array<i64: 2, 1, 32>}, {pipeline_mode = #tpu.pipeline_mode<synchronous>, transform_indices = @transform_7, window_bounds = array<i64: 2, 1, 32>}, {pipeline_mode = #tpu.pipeline_mode<synchronous>, transform_indices = @transform_8, window_bounds = array<i64: 2, 32, 96>}, {pipeline_mode = #tpu.pipeline_mode<synchronous>, transform_indices = @transform_9, window_bounds = array<i64: 2, 1, 96>}, {pipeline_mode = #tpu.pipeline_mode<synchronous>, transform_indices = @transform_10, window_bounds = array<i64: 2, 32, 32>}, {pipeline_mode = #tpu.pipeline_mode<synchronous>, transform_indices = @transform_11, window_bounds = array<i64: 2, 1, 32>}, {pipeline_mode = #tpu.pipeline_mode<synchronous>, transform_indices = @transform_12, window_bounds = array<i64: 2, 1, 32>}, {pipeline_mode = #tpu.pipeline_mode<synchronous>, transform_indices = @transform_13, window_bounds = array<i64: 2, 1, 32>}, {pipeline_mode = #tpu.pipeline_mode<synchronous>, transform_indices = @transform_14, window_bounds = array<i64: 2, 32, 128>}, {pipeline_mode = #tpu.pipeline_mode<synchronous>, transform_indices = @transform_15, window_bounds = array<i64: 2, 1, 128>}, {pipeline_mode = #tpu.pipeline_mode<synchronous>, transform_indices = @transform_16, window_bounds = array<i64: 2, 128, 32>}, {pipeline_mode = #tpu.pipeline_mode<synchronous>, transform_indices = @transform_17, window_bounds = array<i64: 2, 1, 32>}, {pipeline_mode = #tpu.pipeline_mode<synchronous>, transform_indices = @transform_18, window_bounds = array<i64: 1, 32>}, {pipeline_mode = #tpu.pipeline_mode<synchronous>, transform_indices = @transform_19, window_bounds = array<i64: 1, 32>}, {pipeline_mode = #tpu.pipeline_mode<synchronous>, transform_indices = @transform_20, window_bounds = array<i64: 32, 48>}, {pipeline_mode = #tpu.pipeline_mode<synchronous>, transform_indices = @transform_21, window_bounds = array<i64: 1, 48>}, {transform_indices = @transform_22, window_bounds = array<i64: 1, 16, 48>}]} {
    %c0 = arith.constant 0 : index
    %c0_0 = arith.constant 0 : index
    %c0_1 = arith.constant 0 : index
    %0 = vector.load %arg1[%c0, %c0_0, %c0_1] : memref<1x16x8xf32, #tpu.memory_space<vmem>>, vector<1x16x8xf32>
    %1 = vector.shape_cast %0 : vector<1x16x8xf32> to vector<16x8xf32>
    %c0_2 = arith.constant 0 : index
    %c0_3 = arith.constant 0 : index
    %2 = vector.load %arg2[%c0_2, %c0_3] : memref<8x32xf32, #tpu.memory_space<vmem>>, vector<8x32xf32>
    %c0_4 = arith.constant 0 : index
    %c0_5 = arith.constant 0 : index
    %3 = vector.load %arg3[%c0_4, %c0_5] : memref<1x32xf32, #tpu.memory_space<vmem>>, vector<1x32xf32>
    %4 = arith.truncf %1 : vector<16x8xf32> to vector<16x8xbf16>
    %5 = arith.truncf %2 : vector<8x32xf32> to vector<8x32xbf16>
    %cst = arith.constant dense<0.000000e+00> : vector<16x32xf32>
    %6 = tpu.matmul %4, %5, %cst {dimension_numbers = #tpu.dot_dimension_numbers<[1], [0], [0], [1], [0, 0, 1, 1], [], []>} : vector<16x8xbf16>, vector<8x32xbf16>, vector<16x32xf32> -> vector<16x32xf32>
    %7 = vector.broadcast %3 : vector<1x32xf32> to vector<16x32xf32>
    %8 = arith.addf %6, %7 : vector<16x32xf32>
    %c0_6 = arith.constant 0 : index
    %c0_7 = arith.constant 0 : index
    %9 = vector.load %arg4[%c0_6, %c0_7] : memref<32x32xf32, #tpu.memory_space<vmem>>, vector<32x32xf32>
    %c0_8 = arith.constant 0 : index
    %c0_9 = arith.constant 0 : index
    %10 = vector.load %arg5[%c0_8, %c0_9] : memref<1x32xf32, #tpu.memory_space<vmem>>, vector<1x32xf32>
    %11 = arith.truncf %8 : vector<16x32xf32> to vector<16x32xbf16>
    %12 = arith.truncf %9 : vector<32x32xf32> to vector<32x32xbf16>
    %cst_10 = arith.constant dense<0.000000e+00> : vector<16x32xf32>
    %13 = tpu.matmul %11, %12, %cst_10 {dimension_numbers = #tpu.dot_dimension_numbers<[1], [0], [0], [1], [0, 0, 1, 1], [], []>} : vector<16x32xbf16>, vector<32x32xbf16>, vector<16x32xf32> -> vector<16x32xf32>
    %14 = vector.broadcast %10 : vector<1x32xf32> to vector<16x32xf32>
    %15 = arith.addf %13, %14 : vector<16x32xf32>
    %c0_11 = arith.constant 0 : index
    %c0_12 = arith.constant 0 : index
    %c0_13 = arith.constant 0 : index
    %16 = vector.load %arg6[%c0_11, %c0_12, %c0_13] : memref<1x16x32xf32, #tpu.memory_space<vmem>>, vector<1x16x32xf32>
    %17 = vector.shape_cast %16 : vector<1x16x32xf32> to vector<16x32xf32>
    %18 = arith.addf %15, %17 : vector<16x32xf32>
    %c0_14 = arith.constant 0 : index
    %c0_15 = arith.constant 0 : index
    %c0_16 = arith.constant 0 : index
    %19 = vector.load %arg7[%c0_14, %c0_15, %c0_16] : memref<2x1x32xf32, #tpu.memory_space<vmem>>, vector<1x1x32xf32>
    %20 = vector.shape_cast %19 : vector<1x1x32xf32> to vector<1x32xf32>
    %c0_17 = arith.constant 0 : index
    %c0_18 = arith.constant 0 : index
    %c0_19 = arith.constant 0 : index
    %21 = vector.load %arg8[%c0_17, %c0_18, %c0_19] : memref<2x1x32xf32, #tpu.memory_space<vmem>>, vector<1x1x32xf32>
    %22 = vector.shape_cast %21 : vector<1x1x32xf32> to vector<1x32xf32>
    %cst_20 = arith.constant dense<0.000000e+00> : vector<16xf32>
    %23 = vector.multi_reduction <add>, %18, %cst_20 [1] : vector<16x32xf32> to vector<16xf32>
    %24 = vector.shape_cast %23 : vector<16xf32> to vector<16x1xf32>
    %cst_21 = arith.constant 3.200000e+01 : f32
    %25 = vector.broadcast %cst_21 : f32 to vector<16x1xf32>
    %26 = arith.divf %24, %25 : vector<16x1xf32>
    %27 = vector.broadcast %26 : vector<16x1xf32> to vector<16x32xf32>
    %28 = arith.subf %18, %27 : vector<16x32xf32>
    %29 = arith.mulf %28, %28 : vector<16x32xf32>
    %cst_22 = arith.constant dense<0.000000e+00> : vector<16xf32>
    %30 = vector.multi_reduction <add>, %29, %cst_22 [1] : vector<16x32xf32> to vector<16xf32>
    %31 = vector.shape_cast %30 : vector<16xf32> to vector<16x1xf32>
    %cst_23 = arith.constant 3.200000e+01 : f32
    %32 = vector.broadcast %cst_23 : f32 to vector<16x1xf32>
    %33 = arith.divf %31, %32 : vector<16x1xf32>
    %34 = vector.broadcast %26 : vector<16x1xf32> to vector<16x32xf32>
    %35 = arith.subf %18, %34 : vector<16x32xf32>
    %cst_24 = arith.constant 9.99999974E-6 : f32
    %36 = vector.broadcast %cst_24 : f32 to vector<16x1xf32>
    %37 = arith.addf %33, %36 : vector<16x1xf32>
    %38 = math.rsqrt %37 : vector<16x1xf32>
    %39 = vector.broadcast %38 : vector<16x1xf32> to vector<16x32xf32>
    %40 = arith.mulf %35, %39 : vector<16x32xf32>
    %41 = vector.broadcast %20 : vector<1x32xf32> to vector<16x32xf32>
    %42 = arith.mulf %40, %41 : vector<16x32xf32>
    %43 = vector.broadcast %22 : vector<1x32xf32> to vector<16x32xf32>
    %44 = arith.addf %42, %43 : vector<16x32xf32>
    %c0_25 = arith.constant 0 : index
    %c0_26 = arith.constant 0 : index
    %c0_27 = arith.constant 0 : index
    %45 = vector.load %arg9[%c0_25, %c0_26, %c0_27] : memref<2x32x96xf32, #tpu.memory_space<vmem>>, vector<1x32x96xf32>
    %46 = vector.shape_cast %45 : vector<1x32x96xf32> to vector<32x96xf32>
    %c0_28 = arith.constant 0 : index
    %c0_29 = arith.constant 0 : index
    %c0_30 = arith.constant 0 : index
    %47 = vector.load %arg10[%c0_28, %c0_29, %c0_30] : memref<2x1x96xf32, #tpu.memory_space<vmem>>, vector<1x1x96xf32>
    %48 = vector.shape_cast %47 : vector<1x1x96xf32> to vector<1x96xf32>
    %49 = arith.truncf %44 : vector<16x32xf32> to vector<16x32xbf16>
    %50 = arith.truncf %46 : vector<32x96xf32> to vector<32x96xbf16>
    %cst_31 = arith.constant dense<0.000000e+00> : vector<16x96xf32>
    %51 = tpu.matmul %49, %50, %cst_31 {dimension_numbers = #tpu.dot_dimension_numbers<[1], [0], [0], [1], [0, 0, 1, 1], [], []>} : vector<16x32xbf16>, vector<32x96xbf16>, vector<16x96xf32> -> vector<16x96xf32>
    %52 = vector.broadcast %48 : vector<1x96xf32> to vector<16x96xf32>
    %53 = arith.addf %51, %52 : vector<16x96xf32>
    %54 = vector.extract_strided_slice %53 {offsets = [0, 0], sizes = [16, 32], strides = [1, 1]} : vector<16x96xf32> to vector<16x32xf32>
    %cst_32 = arith.constant 0.353553385 : f32
    %55 = vector.broadcast %cst_32 : f32 to vector<16x32xf32>
    %56 = arith.mulf %54, %55 : vector<16x32xf32>
    %57 = arith.truncf %56 : vector<16x32xf32> to vector<16x32xbf16>
    %58 = vector.extract_strided_slice %53 {offsets = [0, 32], sizes = [16, 32], strides = [1, 1]} : vector<16x96xf32> to vector<16x32xf32>
    %59 = arith.truncf %58 : vector<16x32xf32> to vector<16x32xbf16>
    %60 = vector.extract_strided_slice %53 {offsets = [0, 64], sizes = [16, 32], strides = [1, 1]} : vector<16x96xf32> to vector<16x32xf32>
    %61 = arith.truncf %60 : vector<16x32xf32> to vector<16x32xbf16>
    %62 = vector.extract_strided_slice %57 {offsets = [0, 0], sizes = [16, 8], strides = [1, 1]} : vector<16x32xbf16> to vector<16x8xbf16>
    %63 = vector.extract_strided_slice %59 {offsets = [0, 0], sizes = [16, 8], strides = [1, 1]} : vector<16x32xbf16> to vector<16x8xbf16>
    %64 = vector.extract_strided_slice %61 {offsets = [0, 0], sizes = [16, 8], strides = [1, 1]} : vector<16x32xbf16> to vector<16x8xbf16>
    %cst_33 = arith.constant dense<0.000000e+00> : vector<16x16xf32>
    %65 = tpu.matmul %62, %63, %cst_33 {dimension_numbers = #tpu.dot_dimension_numbers<[1], [1], [0], [0], [0, 0, 1, 0], [], []>} : vector<16x8xbf16>, vector<16x8xbf16>, vector<16x16xf32> -> vector<16x16xf32>
    %cst_34 = arith.constant dense<0xFF800000> : vector<16xf32>
    %66 = vector.multi_reduction <maximumf>, %65, %cst_34 [1] : vector<16x16xf32> to vector<16xf32>
    %67 = vector.shape_cast %66 : vector<16xf32> to vector<16x1xf32>
    %68 = vector.broadcast %67 : vector<16x1xf32> to vector<16x16xf32>
    %69 = arith.subf %65, %68 : vector<16x16xf32>
    %70 = math.exp %69 : vector<16x16xf32>
    %cst_35 = arith.constant dense<0.000000e+00> : vector<16xf32>
    %71 = vector.multi_reduction <add>, %70, %cst_35 [1] : vector<16x16xf32> to vector<16xf32>
    %72 = vector.shape_cast %71 : vector<16xf32> to vector<16x1xf32>
    %73 = tpu.reciprocal %72 {approx = true} : vector<16x1xf32> -> vector<16x1xf32>
    %74 = vector.broadcast %73 : vector<16x1xf32> to vector<16x16xf32>
    %75 = arith.mulf %70, %74 : vector<16x16xf32>
    %76 = arith.truncf %75 : vector<16x16xf32> to vector<16x16xbf16>
    %cst_36 = arith.constant dense<0.000000e+00> : vector<16x8xf32>
    %77 = tpu.matmul %76, %64, %cst_36 {dimension_numbers = #tpu.dot_dimension_numbers<[1], [0], [0], [1], [0, 0, 1, 1], [], []>} : vector<16x16xbf16>, vector<16x8xbf16>, vector<16x8xf32> -> vector<16x8xf32>
    %78 = vector.extract_strided_slice %57 {offsets = [0, 8], sizes = [16, 8], strides = [1, 1]} : vector<16x32xbf16> to vector<16x8xbf16>
    %79 = vector.extract_strided_slice %59 {offsets = [0, 8], sizes = [16, 8], strides = [1, 1]} : vector<16x32xbf16> to vector<16x8xbf16>
    %80 = vector.extract_strided_slice %61 {offsets = [0, 8], sizes = [16, 8], strides = [1, 1]} : vector<16x32xbf16> to vector<16x8xbf16>
    %cst_37 = arith.constant dense<0.000000e+00> : vector<16x16xf32>
    %81 = tpu.matmul %78, %79, %cst_37 {dimension_numbers = #tpu.dot_dimension_numbers<[1], [1], [0], [0], [0, 0, 1, 0], [], []>} : vector<16x8xbf16>, vector<16x8xbf16>, vector<16x16xf32> -> vector<16x16xf32>
    %cst_38 = arith.constant dense<0xFF800000> : vector<16xf32>
    %82 = vector.multi_reduction <maximumf>, %81, %cst_38 [1] : vector<16x16xf32> to vector<16xf32>
    %83 = vector.shape_cast %82 : vector<16xf32> to vector<16x1xf32>
    %84 = vector.broadcast %83 : vector<16x1xf32> to vector<16x16xf32>
    %85 = arith.subf %81, %84 : vector<16x16xf32>
    %86 = math.exp %85 : vector<16x16xf32>
    %cst_39 = arith.constant dense<0.000000e+00> : vector<16xf32>
    %87 = vector.multi_reduction <add>, %86, %cst_39 [1] : vector<16x16xf32> to vector<16xf32>
    %88 = vector.shape_cast %87 : vector<16xf32> to vector<16x1xf32>
    %89 = tpu.reciprocal %88 {approx = true} : vector<16x1xf32> -> vector<16x1xf32>
    %90 = vector.broadcast %89 : vector<16x1xf32> to vector<16x16xf32>
    %91 = arith.mulf %86, %90 : vector<16x16xf32>
    %92 = arith.truncf %91 : vector<16x16xf32> to vector<16x16xbf16>
    %cst_40 = arith.constant dense<0.000000e+00> : vector<16x8xf32>
    %93 = tpu.matmul %92, %80, %cst_40 {dimension_numbers = #tpu.dot_dimension_numbers<[1], [0], [0], [1], [0, 0, 1, 1], [], []>} : vector<16x16xbf16>, vector<16x8xbf16>, vector<16x8xf32> -> vector<16x8xf32>
    %94 = vector.extract_strided_slice %57 {offsets = [0, 16], sizes = [16, 8], strides = [1, 1]} : vector<16x32xbf16> to vector<16x8xbf16>
    %95 = vector.extract_strided_slice %59 {offsets = [0, 16], sizes = [16, 8], strides = [1, 1]} : vector<16x32xbf16> to vector<16x8xbf16>
    %96 = vector.extract_strided_slice %61 {offsets = [0, 16], sizes = [16, 8], strides = [1, 1]} : vector<16x32xbf16> to vector<16x8xbf16>
    %cst_41 = arith.constant dense<0.000000e+00> : vector<16x16xf32>
    %97 = tpu.matmul %94, %95, %cst_41 {dimension_numbers = #tpu.dot_dimension_numbers<[1], [1], [0], [0], [0, 0, 1, 0], [], []>} : vector<16x8xbf16>, vector<16x8xbf16>, vector<16x16xf32> -> vector<16x16xf32>
    %cst_42 = arith.constant dense<0xFF800000> : vector<16xf32>
    %98 = vector.multi_reduction <maximumf>, %97, %cst_42 [1] : vector<16x16xf32> to vector<16xf32>
    %99 = vector.shape_cast %98 : vector<16xf32> to vector<16x1xf32>
    %100 = vector.broadcast %99 : vector<16x1xf32> to vector<16x16xf32>
    %101 = arith.subf %97, %100 : vector<16x16xf32>
    %102 = math.exp %101 : vector<16x16xf32>
    %cst_43 = arith.constant dense<0.000000e+00> : vector<16xf32>
    %103 = vector.multi_reduction <add>, %102, %cst_43 [1] : vector<16x16xf32> to vector<16xf32>
    %104 = vector.shape_cast %103 : vector<16xf32> to vector<16x1xf32>
    %105 = tpu.reciprocal %104 {approx = true} : vector<16x1xf32> -> vector<16x1xf32>
    %106 = vector.broadcast %105 : vector<16x1xf32> to vector<16x16xf32>
    %107 = arith.mulf %102, %106 : vector<16x16xf32>
    %108 = arith.truncf %107 : vector<16x16xf32> to vector<16x16xbf16>
    %cst_44 = arith.constant dense<0.000000e+00> : vector<16x8xf32>
    %109 = tpu.matmul %108, %96, %cst_44 {dimension_numbers = #tpu.dot_dimension_numbers<[1], [0], [0], [1], [0, 0, 1, 1], [], []>} : vector<16x16xbf16>, vector<16x8xbf16>, vector<16x8xf32> -> vector<16x8xf32>
    %110 = vector.extract_strided_slice %57 {offsets = [0, 24], sizes = [16, 8], strides = [1, 1]} : vector<16x32xbf16> to vector<16x8xbf16>
    %111 = vector.extract_strided_slice %59 {offsets = [0, 24], sizes = [16, 8], strides = [1, 1]} : vector<16x32xbf16> to vector<16x8xbf16>
    %112 = vector.extract_strided_slice %61 {offsets = [0, 24], sizes = [16, 8], strides = [1, 1]} : vector<16x32xbf16> to vector<16x8xbf16>
    %cst_45 = arith.constant dense<0.000000e+00> : vector<16x16xf32>
    %113 = tpu.matmul %110, %111, %cst_45 {dimension_numbers = #tpu.dot_dimension_numbers<[1], [1], [0], [0], [0, 0, 1, 0], [], []>} : vector<16x8xbf16>, vector<16x8xbf16>, vector<16x16xf32> -> vector<16x16xf32>
    %cst_46 = arith.constant dense<0xFF800000> : vector<16xf32>
    %114 = vector.multi_reduction <maximumf>, %113, %cst_46 [1] : vector<16x16xf32> to vector<16xf32>
    %115 = vector.shape_cast %114 : vector<16xf32> to vector<16x1xf32>
    %116 = vector.broadcast %115 : vector<16x1xf32> to vector<16x16xf32>
    %117 = arith.subf %113, %116 : vector<16x16xf32>
    %118 = math.exp %117 : vector<16x16xf32>
    %cst_47 = arith.constant dense<0.000000e+00> : vector<16xf32>
    %119 = vector.multi_reduction <add>, %118, %cst_47 [1] : vector<16x16xf32> to vector<16xf32>
    %120 = vector.shape_cast %119 : vector<16xf32> to vector<16x1xf32>
    %121 = tpu.reciprocal %120 {approx = true} : vector<16x1xf32> -> vector<16x1xf32>
    %122 = vector.broadcast %121 : vector<16x1xf32> to vector<16x16xf32>
    %123 = arith.mulf %118, %122 : vector<16x16xf32>
    %124 = arith.truncf %123 : vector<16x16xf32> to vector<16x16xbf16>
    %cst_48 = arith.constant dense<0.000000e+00> : vector<16x8xf32>
    %125 = tpu.matmul %124, %112, %cst_48 {dimension_numbers = #tpu.dot_dimension_numbers<[1], [0], [0], [1], [0, 0, 1, 1], [], []>} : vector<16x16xbf16>, vector<16x8xbf16>, vector<16x8xf32> -> vector<16x8xf32>
    %126 = tpu.concatenate %77, %93, %109, %125 in 1 : vector<16x8xf32>, vector<16x8xf32>, vector<16x8xf32>, vector<16x8xf32> -> vector<16x32xf32>
    %c0_49 = arith.constant 0 : index
    %c0_50 = arith.constant 0 : index
    %c0_51 = arith.constant 0 : index
    %127 = vector.load %arg11[%c0_49, %c0_50, %c0_51] : memref<2x32x32xf32, #tpu.memory_space<vmem>>, vector<1x32x32xf32>
    %128 = vector.shape_cast %127 : vector<1x32x32xf32> to vector<32x32xf32>
    %c0_52 = arith.constant 0 : index
    %c0_53 = arith.constant 0 : index
    %c0_54 = arith.constant 0 : index
    %129 = vector.load %arg12[%c0_52, %c0_53, %c0_54] : memref<2x1x32xf32, #tpu.memory_space<vmem>>, vector<1x1x32xf32>
    %130 = vector.shape_cast %129 : vector<1x1x32xf32> to vector<1x32xf32>
    %131 = arith.truncf %126 : vector<16x32xf32> to vector<16x32xbf16>
    %132 = arith.truncf %128 : vector<32x32xf32> to vector<32x32xbf16>
    %cst_55 = arith.constant dense<0.000000e+00> : vector<16x32xf32>
    %133 = tpu.matmul %131, %132, %cst_55 {dimension_numbers = #tpu.dot_dimension_numbers<[1], [0], [0], [1], [0, 0, 1, 1], [], []>} : vector<16x32xbf16>, vector<32x32xbf16>, vector<16x32xf32> -> vector<16x32xf32>
    %134 = vector.broadcast %130 : vector<1x32xf32> to vector<16x32xf32>
    %135 = arith.addf %133, %134 : vector<16x32xf32>
    %136 = arith.addf %18, %135 : vector<16x32xf32>
    %c0_56 = arith.constant 0 : index
    %c0_57 = arith.constant 0 : index
    %c0_58 = arith.constant 0 : index
    %137 = vector.load %arg13[%c0_56, %c0_57, %c0_58] : memref<2x1x32xf32, #tpu.memory_space<vmem>>, vector<1x1x32xf32>
    %138 = vector.shape_cast %137 : vector<1x1x32xf32> to vector<1x32xf32>
    %c0_59 = arith.constant 0 : index
    %c0_60 = arith.constant 0 : index
    %c0_61 = arith.constant 0 : index
    %139 = vector.load %arg14[%c0_59, %c0_60, %c0_61] : memref<2x1x32xf32, #tpu.memory_space<vmem>>, vector<1x1x32xf32>
    %140 = vector.shape_cast %139 : vector<1x1x32xf32> to vector<1x32xf32>
    %cst_62 = arith.constant dense<0.000000e+00> : vector<16xf32>
    %141 = vector.multi_reduction <add>, %136, %cst_62 [1] : vector<16x32xf32> to vector<16xf32>
    %142 = vector.shape_cast %141 : vector<16xf32> to vector<16x1xf32>
    %cst_63 = arith.constant 3.200000e+01 : f32
    %143 = vector.broadcast %cst_63 : f32 to vector<16x1xf32>
    %144 = arith.divf %142, %143 : vector<16x1xf32>
    %145 = vector.broadcast %144 : vector<16x1xf32> to vector<16x32xf32>
    %146 = arith.subf %136, %145 : vector<16x32xf32>
    %147 = arith.mulf %146, %146 : vector<16x32xf32>
    %cst_64 = arith.constant dense<0.000000e+00> : vector<16xf32>
    %148 = vector.multi_reduction <add>, %147, %cst_64 [1] : vector<16x32xf32> to vector<16xf32>
    %149 = vector.shape_cast %148 : vector<16xf32> to vector<16x1xf32>
    %cst_65 = arith.constant 3.200000e+01 : f32
    %150 = vector.broadcast %cst_65 : f32 to vector<16x1xf32>
    %151 = arith.divf %149, %150 : vector<16x1xf32>
    %152 = vector.broadcast %144 : vector<16x1xf32> to vector<16x32xf32>
    %153 = arith.subf %136, %152 : vector<16x32xf32>
    %cst_66 = arith.constant 9.99999974E-6 : f32
    %154 = vector.broadcast %cst_66 : f32 to vector<16x1xf32>
    %155 = arith.addf %151, %154 : vector<16x1xf32>
    %156 = math.rsqrt %155 : vector<16x1xf32>
    %157 = vector.broadcast %156 : vector<16x1xf32> to vector<16x32xf32>
    %158 = arith.mulf %153, %157 : vector<16x32xf32>
    %159 = vector.broadcast %138 : vector<1x32xf32> to vector<16x32xf32>
    %160 = arith.mulf %158, %159 : vector<16x32xf32>
    %161 = vector.broadcast %140 : vector<1x32xf32> to vector<16x32xf32>
    %162 = arith.addf %160, %161 : vector<16x32xf32>
    %c0_67 = arith.constant 0 : index
    %c0_68 = arith.constant 0 : index
    %c0_69 = arith.constant 0 : index
    %163 = vector.load %arg15[%c0_67, %c0_68, %c0_69] : memref<2x32x128xf32, #tpu.memory_space<vmem>>, vector<1x32x128xf32>
    %164 = vector.shape_cast %163 : vector<1x32x128xf32> to vector<32x128xf32>
    %c0_70 = arith.constant 0 : index
    %c0_71 = arith.constant 0 : index
    %c0_72 = arith.constant 0 : index
    %165 = vector.load %arg16[%c0_70, %c0_71, %c0_72] : memref<2x1x128xf32, #tpu.memory_space<vmem>>, vector<1x1x128xf32>
    %166 = vector.shape_cast %165 : vector<1x1x128xf32> to vector<1x128xf32>
    %167 = arith.truncf %162 : vector<16x32xf32> to vector<16x32xbf16>
    %168 = arith.truncf %164 : vector<32x128xf32> to vector<32x128xbf16>
    %cst_73 = arith.constant dense<0.000000e+00> : vector<16x128xf32>
    %169 = tpu.matmul %167, %168, %cst_73 {dimension_numbers = #tpu.dot_dimension_numbers<[1], [0], [0], [1], [0, 0, 1, 1], [], []>} : vector<16x32xbf16>, vector<32x128xbf16>, vector<16x128xf32> -> vector<16x128xf32>
    %170 = vector.broadcast %166 : vector<1x128xf32> to vector<16x128xf32>
    %171 = arith.addf %169, %170 : vector<16x128xf32>
    %172 = arith.mulf %171, %171 : vector<16x128xf32>
    %173 = arith.mulf %171, %172 : vector<16x128xf32>
    %cst_74 = arith.constant 4.471500e-02 : f32
    %174 = vector.broadcast %cst_74 : f32 to vector<16x128xf32>
    %175 = arith.mulf %174, %173 : vector<16x128xf32>
    %176 = arith.addf %171, %175 : vector<16x128xf32>
    %cst_75 = arith.constant 0.797884583 : f32
    %177 = vector.broadcast %cst_75 : f32 to vector<16x128xf32>
    %178 = arith.mulf %177, %176 : vector<16x128xf32>
    %179 = math.tanh %178 : vector<16x128xf32>
    %cst_76 = arith.constant 1.000000e+00 : f32
    %180 = vector.broadcast %cst_76 : f32 to vector<16x128xf32>
    %181 = arith.addf %180, %179 : vector<16x128xf32>
    %cst_77 = arith.constant 5.000000e-01 : f32
    %182 = vector.broadcast %cst_77 : f32 to vector<16x128xf32>
    %183 = arith.mulf %182, %181 : vector<16x128xf32>
    %184 = arith.mulf %171, %183 : vector<16x128xf32>
    %c0_78 = arith.constant 0 : index
    %c0_79 = arith.constant 0 : index
    %c0_80 = arith.constant 0 : index
    %185 = vector.load %arg17[%c0_78, %c0_79, %c0_80] : memref<2x128x32xf32, #tpu.memory_space<vmem>>, vector<1x128x32xf32>
    %186 = vector.shape_cast %185 : vector<1x128x32xf32> to vector<128x32xf32>
    %c0_81 = arith.constant 0 : index
    %c0_82 = arith.constant 0 : index
    %c0_83 = arith.constant 0 : index
    %187 = vector.load %arg18[%c0_81, %c0_82, %c0_83] : memref<2x1x32xf32, #tpu.memory_space<vmem>>, vector<1x1x32xf32>
    %188 = vector.shape_cast %187 : vector<1x1x32xf32> to vector<1x32xf32>
    %189 = arith.truncf %184 : vector<16x128xf32> to vector<16x128xbf16>
    %190 = arith.truncf %186 : vector<128x32xf32> to vector<128x32xbf16>
    %cst_84 = arith.constant dense<0.000000e+00> : vector<16x32xf32>
    %191 = tpu.matmul %189, %190, %cst_84 {dimension_numbers = #tpu.dot_dimension_numbers<[1], [0], [0], [1], [0, 0, 1, 1], [], []>} : vector<16x128xbf16>, vector<128x32xbf16>, vector<16x32xf32> -> vector<16x32xf32>
    %192 = vector.broadcast %188 : vector<1x32xf32> to vector<16x32xf32>
    %193 = arith.addf %191, %192 : vector<16x32xf32>
    %194 = arith.addf %136, %193 : vector<16x32xf32>
    %c1 = arith.constant 1 : index
    %c0_85 = arith.constant 0 : index
    %c0_86 = arith.constant 0 : index
    %195 = vector.load %arg7[%c1, %c0_85, %c0_86] : memref<2x1x32xf32, #tpu.memory_space<vmem>>, vector<1x1x32xf32>
    %196 = vector.shape_cast %195 : vector<1x1x32xf32> to vector<1x32xf32>
    %c1_87 = arith.constant 1 : index
    %c0_88 = arith.constant 0 : index
    %c0_89 = arith.constant 0 : index
    %197 = vector.load %arg8[%c1_87, %c0_88, %c0_89] : memref<2x1x32xf32, #tpu.memory_space<vmem>>, vector<1x1x32xf32>
    %198 = vector.shape_cast %197 : vector<1x1x32xf32> to vector<1x32xf32>
    %cst_90 = arith.constant dense<0.000000e+00> : vector<16xf32>
    %199 = vector.multi_reduction <add>, %194, %cst_90 [1] : vector<16x32xf32> to vector<16xf32>
    %200 = vector.shape_cast %199 : vector<16xf32> to vector<16x1xf32>
    %cst_91 = arith.constant 3.200000e+01 : f32
    %201 = vector.broadcast %cst_91 : f32 to vector<16x1xf32>
    %202 = arith.divf %200, %201 : vector<16x1xf32>
    %203 = vector.broadcast %202 : vector<16x1xf32> to vector<16x32xf32>
    %204 = arith.subf %194, %203 : vector<16x32xf32>
    %205 = arith.mulf %204, %204 : vector<16x32xf32>
    %cst_92 = arith.constant dense<0.000000e+00> : vector<16xf32>
    %206 = vector.multi_reduction <add>, %205, %cst_92 [1] : vector<16x32xf32> to vector<16xf32>
    %207 = vector.shape_cast %206 : vector<16xf32> to vector<16x1xf32>
    %cst_93 = arith.constant 3.200000e+01 : f32
    %208 = vector.broadcast %cst_93 : f32 to vector<16x1xf32>
    %209 = arith.divf %207, %208 : vector<16x1xf32>
    %210 = vector.broadcast %202 : vector<16x1xf32> to vector<16x32xf32>
    %211 = arith.subf %194, %210 : vector<16x32xf32>
    %cst_94 = arith.constant 9.99999974E-6 : f32
    %212 = vector.broadcast %cst_94 : f32 to vector<16x1xf32>
    %213 = arith.addf %209, %212 : vector<16x1xf32>
    %214 = math.rsqrt %213 : vector<16x1xf32>
    %215 = vector.broadcast %214 : vector<16x1xf32> to vector<16x32xf32>
    %216 = arith.mulf %211, %215 : vector<16x32xf32>
    %217 = vector.broadcast %196 : vector<1x32xf32> to vector<16x32xf32>
    %218 = arith.mulf %216, %217 : vector<16x32xf32>
    %219 = vector.broadcast %198 : vector<1x32xf32> to vector<16x32xf32>
    %220 = arith.addf %218, %219 : vector<16x32xf32>
    %c1_95 = arith.constant 1 : index
    %c0_96 = arith.constant 0 : index
    %c0_97 = arith.constant 0 : index
    %221 = vector.load %arg9[%c1_95, %c0_96, %c0_97] : memref<2x32x96xf32, #tpu.memory_space<vmem>>, vector<1x32x96xf32>
    %222 = vector.shape_cast %221 : vector<1x32x96xf32> to vector<32x96xf32>
    %c1_98 = arith.constant 1 : index
    %c0_99 = arith.constant 0 : index
    %c0_100 = arith.constant 0 : index
    %223 = vector.load %arg10[%c1_98, %c0_99, %c0_100] : memref<2x1x96xf32, #tpu.memory_space<vmem>>, vector<1x1x96xf32>
    %224 = vector.shape_cast %223 : vector<1x1x96xf32> to vector<1x96xf32>
    %225 = arith.truncf %220 : vector<16x32xf32> to vector<16x32xbf16>
    %226 = arith.truncf %222 : vector<32x96xf32> to vector<32x96xbf16>
    %cst_101 = arith.constant dense<0.000000e+00> : vector<16x96xf32>
    %227 = tpu.matmul %225, %226, %cst_101 {dimension_numbers = #tpu.dot_dimension_numbers<[1], [0], [0], [1], [0, 0, 1, 1], [], []>} : vector<16x32xbf16>, vector<32x96xbf16>, vector<16x96xf32> -> vector<16x96xf32>
    %228 = vector.broadcast %224 : vector<1x96xf32> to vector<16x96xf32>
    %229 = arith.addf %227, %228 : vector<16x96xf32>
    %230 = vector.extract_strided_slice %229 {offsets = [0, 0], sizes = [16, 32], strides = [1, 1]} : vector<16x96xf32> to vector<16x32xf32>
    %cst_102 = arith.constant 0.353553385 : f32
    %231 = vector.broadcast %cst_102 : f32 to vector<16x32xf32>
    %232 = arith.mulf %230, %231 : vector<16x32xf32>
    %233 = arith.truncf %232 : vector<16x32xf32> to vector<16x32xbf16>
    %234 = vector.extract_strided_slice %229 {offsets = [0, 32], sizes = [16, 32], strides = [1, 1]} : vector<16x96xf32> to vector<16x32xf32>
    %235 = arith.truncf %234 : vector<16x32xf32> to vector<16x32xbf16>
    %236 = vector.extract_strided_slice %229 {offsets = [0, 64], sizes = [16, 32], strides = [1, 1]} : vector<16x96xf32> to vector<16x32xf32>
    %237 = arith.truncf %236 : vector<16x32xf32> to vector<16x32xbf16>
    %238 = vector.extract_strided_slice %233 {offsets = [0, 0], sizes = [16, 8], strides = [1, 1]} : vector<16x32xbf16> to vector<16x8xbf16>
    %239 = vector.extract_strided_slice %235 {offsets = [0, 0], sizes = [16, 8], strides = [1, 1]} : vector<16x32xbf16> to vector<16x8xbf16>
    %240 = vector.extract_strided_slice %237 {offsets = [0, 0], sizes = [16, 8], strides = [1, 1]} : vector<16x32xbf16> to vector<16x8xbf16>
    %cst_103 = arith.constant dense<0.000000e+00> : vector<16x16xf32>
    %241 = tpu.matmul %238, %239, %cst_103 {dimension_numbers = #tpu.dot_dimension_numbers<[1], [1], [0], [0], [0, 0, 1, 0], [], []>} : vector<16x8xbf16>, vector<16x8xbf16>, vector<16x16xf32> -> vector<16x16xf32>
    %cst_104 = arith.constant dense<0xFF800000> : vector<16xf32>
    %242 = vector.multi_reduction <maximumf>, %241, %cst_104 [1] : vector<16x16xf32> to vector<16xf32>
    %243 = vector.shape_cast %242 : vector<16xf32> to vector<16x1xf32>
    %244 = vector.broadcast %243 : vector<16x1xf32> to vector<16x16xf32>
    %245 = arith.subf %241, %244 : vector<16x16xf32>
    %246 = math.exp %245 : vector<16x16xf32>
    %cst_105 = arith.constant dense<0.000000e+00> : vector<16xf32>
    %247 = vector.multi_reduction <add>, %246, %cst_105 [1] : vector<16x16xf32> to vector<16xf32>
    %248 = vector.shape_cast %247 : vector<16xf32> to vector<16x1xf32>
    %249 = tpu.reciprocal %248 {approx = true} : vector<16x1xf32> -> vector<16x1xf32>
    %250 = vector.broadcast %249 : vector<16x1xf32> to vector<16x16xf32>
    %251 = arith.mulf %246, %250 : vector<16x16xf32>
    %252 = arith.truncf %251 : vector<16x16xf32> to vector<16x16xbf16>
    %cst_106 = arith.constant dense<0.000000e+00> : vector<16x8xf32>
    %253 = tpu.matmul %252, %240, %cst_106 {dimension_numbers = #tpu.dot_dimension_numbers<[1], [0], [0], [1], [0, 0, 1, 1], [], []>} : vector<16x16xbf16>, vector<16x8xbf16>, vector<16x8xf32> -> vector<16x8xf32>
    %254 = vector.extract_strided_slice %233 {offsets = [0, 8], sizes = [16, 8], strides = [1, 1]} : vector<16x32xbf16> to vector<16x8xbf16>
    %255 = vector.extract_strided_slice %235 {offsets = [0, 8], sizes = [16, 8], strides = [1, 1]} : vector<16x32xbf16> to vector<16x8xbf16>
    %256 = vector.extract_strided_slice %237 {offsets = [0, 8], sizes = [16, 8], strides = [1, 1]} : vector<16x32xbf16> to vector<16x8xbf16>
    %cst_107 = arith.constant dense<0.000000e+00> : vector<16x16xf32>
    %257 = tpu.matmul %254, %255, %cst_107 {dimension_numbers = #tpu.dot_dimension_numbers<[1], [1], [0], [0], [0, 0, 1, 0], [], []>} : vector<16x8xbf16>, vector<16x8xbf16>, vector<16x16xf32> -> vector<16x16xf32>
    %cst_108 = arith.constant dense<0xFF800000> : vector<16xf32>
    %258 = vector.multi_reduction <maximumf>, %257, %cst_108 [1] : vector<16x16xf32> to vector<16xf32>
    %259 = vector.shape_cast %258 : vector<16xf32> to vector<16x1xf32>
    %260 = vector.broadcast %259 : vector<16x1xf32> to vector<16x16xf32>
    %261 = arith.subf %257, %260 : vector<16x16xf32>
    %262 = math.exp %261 : vector<16x16xf32>
    %cst_109 = arith.constant dense<0.000000e+00> : vector<16xf32>
    %263 = vector.multi_reduction <add>, %262, %cst_109 [1] : vector<16x16xf32> to vector<16xf32>
    %264 = vector.shape_cast %263 : vector<16xf32> to vector<16x1xf32>
    %265 = tpu.reciprocal %264 {approx = true} : vector<16x1xf32> -> vector<16x1xf32>
    %266 = vector.broadcast %265 : vector<16x1xf32> to vector<16x16xf32>
    %267 = arith.mulf %262, %266 : vector<16x16xf32>
    %268 = arith.truncf %267 : vector<16x16xf32> to vector<16x16xbf16>
    %cst_110 = arith.constant dense<0.000000e+00> : vector<16x8xf32>
    %269 = tpu.matmul %268, %256, %cst_110 {dimension_numbers = #tpu.dot_dimension_numbers<[1], [0], [0], [1], [0, 0, 1, 1], [], []>} : vector<16x16xbf16>, vector<16x8xbf16>, vector<16x8xf32> -> vector<16x8xf32>
    %270 = vector.extract_strided_slice %233 {offsets = [0, 16], sizes = [16, 8], strides = [1, 1]} : vector<16x32xbf16> to vector<16x8xbf16>
    %271 = vector.extract_strided_slice %235 {offsets = [0, 16], sizes = [16, 8], strides = [1, 1]} : vector<16x32xbf16> to vector<16x8xbf16>
    %272 = vector.extract_strided_slice %237 {offsets = [0, 16], sizes = [16, 8], strides = [1, 1]} : vector<16x32xbf16> to vector<16x8xbf16>
    %cst_111 = arith.constant dense<0.000000e+00> : vector<16x16xf32>
    %273 = tpu.matmul %270, %271, %cst_111 {dimension_numbers = #tpu.dot_dimension_numbers<[1], [1], [0], [0], [0, 0, 1, 0], [], []>} : vector<16x8xbf16>, vector<16x8xbf16>, vector<16x16xf32> -> vector<16x16xf32>
    %cst_112 = arith.constant dense<0xFF800000> : vector<16xf32>
    %274 = vector.multi_reduction <maximumf>, %273, %cst_112 [1] : vector<16x16xf32> to vector<16xf32>
    %275 = vector.shape_cast %274 : vector<16xf32> to vector<16x1xf32>
    %276 = vector.broadcast %275 : vector<16x1xf32> to vector<16x16xf32>
    %277 = arith.subf %273, %276 : vector<16x16xf32>
    %278 = math.exp %277 : vector<16x16xf32>
    %cst_113 = arith.constant dense<0.000000e+00> : vector<16xf32>
    %279 = vector.multi_reduction <add>, %278, %cst_113 [1] : vector<16x16xf32> to vector<16xf32>
    %280 = vector.shape_cast %279 : vector<16xf32> to vector<16x1xf32>
    %281 = tpu.reciprocal %280 {approx = true} : vector<16x1xf32> -> vector<16x1xf32>
    %282 = vector.broadcast %281 : vector<16x1xf32> to vector<16x16xf32>
    %283 = arith.mulf %278, %282 : vector<16x16xf32>
    %284 = arith.truncf %283 : vector<16x16xf32> to vector<16x16xbf16>
    %cst_114 = arith.constant dense<0.000000e+00> : vector<16x8xf32>
    %285 = tpu.matmul %284, %272, %cst_114 {dimension_numbers = #tpu.dot_dimension_numbers<[1], [0], [0], [1], [0, 0, 1, 1], [], []>} : vector<16x16xbf16>, vector<16x8xbf16>, vector<16x8xf32> -> vector<16x8xf32>
    %286 = vector.extract_strided_slice %233 {offsets = [0, 24], sizes = [16, 8], strides = [1, 1]} : vector<16x32xbf16> to vector<16x8xbf16>
    %287 = vector.extract_strided_slice %235 {offsets = [0, 24], sizes = [16, 8], strides = [1, 1]} : vector<16x32xbf16> to vector<16x8xbf16>
    %288 = vector.extract_strided_slice %237 {offsets = [0, 24], sizes = [16, 8], strides = [1, 1]} : vector<16x32xbf16> to vector<16x8xbf16>
    %cst_115 = arith.constant dense<0.000000e+00> : vector<16x16xf32>
    %289 = tpu.matmul %286, %287, %cst_115 {dimension_numbers = #tpu.dot_dimension_numbers<[1], [1], [0], [0], [0, 0, 1, 0], [], []>} : vector<16x8xbf16>, vector<16x8xbf16>, vector<16x16xf32> -> vector<16x16xf32>
    %cst_116 = arith.constant dense<0xFF800000> : vector<16xf32>
    %290 = vector.multi_reduction <maximumf>, %289, %cst_116 [1] : vector<16x16xf32> to vector<16xf32>
    %291 = vector.shape_cast %290 : vector<16xf32> to vector<16x1xf32>
    %292 = vector.broadcast %291 : vector<16x1xf32> to vector<16x16xf32>
    %293 = arith.subf %289, %292 : vector<16x16xf32>
    %294 = math.exp %293 : vector<16x16xf32>
    %cst_117 = arith.constant dense<0.000000e+00> : vector<16xf32>
    %295 = vector.multi_reduction <add>, %294, %cst_117 [1] : vector<16x16xf32> to vector<16xf32>
    %296 = vector.shape_cast %295 : vector<16xf32> to vector<16x1xf32>
    %297 = tpu.reciprocal %296 {approx = true} : vector<16x1xf32> -> vector<16x1xf32>
    %298 = vector.broadcast %297 : vector<16x1xf32> to vector<16x16xf32>
    %299 = arith.mulf %294, %298 : vector<16x16xf32>
    %300 = arith.truncf %299 : vector<16x16xf32> to vector<16x16xbf16>
    %cst_118 = arith.constant dense<0.000000e+00> : vector<16x8xf32>
    %301 = tpu.matmul %300, %288, %cst_118 {dimension_numbers = #tpu.dot_dimension_numbers<[1], [0], [0], [1], [0, 0, 1, 1], [], []>} : vector<16x16xbf16>, vector<16x8xbf16>, vector<16x8xf32> -> vector<16x8xf32>
    %302 = tpu.concatenate %253, %269, %285, %301 in 1 : vector<16x8xf32>, vector<16x8xf32>, vector<16x8xf32>, vector<16x8xf32> -> vector<16x32xf32>
    %c1_119 = arith.constant 1 : index
    %c0_120 = arith.constant 0 : index
    %c0_121 = arith.constant 0 : index
    %303 = vector.load %arg11[%c1_119, %c0_120, %c0_121] : memref<2x32x32xf32, #tpu.memory_space<vmem>>, vector<1x32x32xf32>
    %304 = vector.shape_cast %303 : vector<1x32x32xf32> to vector<32x32xf32>
    %c1_122 = arith.constant 1 : index
    %c0_123 = arith.constant 0 : index
    %c0_124 = arith.constant 0 : index
    %305 = vector.load %arg12[%c1_122, %c0_123, %c0_124] : memref<2x1x32xf32, #tpu.memory_space<vmem>>, vector<1x1x32xf32>
    %306 = vector.shape_cast %305 : vector<1x1x32xf32> to vector<1x32xf32>
    %307 = arith.truncf %302 : vector<16x32xf32> to vector<16x32xbf16>
    %308 = arith.truncf %304 : vector<32x32xf32> to vector<32x32xbf16>
    %cst_125 = arith.constant dense<0.000000e+00> : vector<16x32xf32>
    %309 = tpu.matmul %307, %308, %cst_125 {dimension_numbers = #tpu.dot_dimension_numbers<[1], [0], [0], [1], [0, 0, 1, 1], [], []>} : vector<16x32xbf16>, vector<32x32xbf16>, vector<16x32xf32> -> vector<16x32xf32>
    %310 = vector.broadcast %306 : vector<1x32xf32> to vector<16x32xf32>
    %311 = arith.addf %309, %310 : vector<16x32xf32>
    %312 = arith.addf %194, %311 : vector<16x32xf32>
    %c1_126 = arith.constant 1 : index
    %c0_127 = arith.constant 0 : index
    %c0_128 = arith.constant 0 : index
    %313 = vector.load %arg13[%c1_126, %c0_127, %c0_128] : memref<2x1x32xf32, #tpu.memory_space<vmem>>, vector<1x1x32xf32>
    %314 = vector.shape_cast %313 : vector<1x1x32xf32> to vector<1x32xf32>
    %c1_129 = arith.constant 1 : index
    %c0_130 = arith.constant 0 : index
    %c0_131 = arith.constant 0 : index
    %315 = vector.load %arg14[%c1_129, %c0_130, %c0_131] : memref<2x1x32xf32, #tpu.memory_space<vmem>>, vector<1x1x32xf32>
    %316 = vector.shape_cast %315 : vector<1x1x32xf32> to vector<1x32xf32>
    %cst_132 = arith.constant dense<0.000000e+00> : vector<16xf32>
    %317 = vector.multi_reduction <add>, %312, %cst_132 [1] : vector<16x32xf32> to vector<16xf32>
    %318 = vector.shape_cast %317 : vector<16xf32> to vector<16x1xf32>
    %cst_133 = arith.constant 3.200000e+01 : f32
    %319 = vector.broadcast %cst_133 : f32 to vector<16x1xf32>
    %320 = arith.divf %318, %319 : vector<16x1xf32>
    %321 = vector.broadcast %320 : vector<16x1xf32> to vector<16x32xf32>
    %322 = arith.subf %312, %321 : vector<16x32xf32>
    %323 = arith.mulf %322, %322 : vector<16x32xf32>
    %cst_134 = arith.constant dense<0.000000e+00> : vector<16xf32>
    %324 = vector.multi_reduction <add>, %323, %cst_134 [1] : vector<16x32xf32> to vector<16xf32>
    %325 = vector.shape_cast %324 : vector<16xf32> to vector<16x1xf32>
    %cst_135 = arith.constant 3.200000e+01 : f32
    %326 = vector.broadcast %cst_135 : f32 to vector<16x1xf32>
    %327 = arith.divf %325, %326 : vector<16x1xf32>
    %328 = vector.broadcast %320 : vector<16x1xf32> to vector<16x32xf32>
    %329 = arith.subf %312, %328 : vector<16x32xf32>
    %cst_136 = arith.constant 9.99999974E-6 : f32
    %330 = vector.broadcast %cst_136 : f32 to vector<16x1xf32>
    %331 = arith.addf %327, %330 : vector<16x1xf32>
    %332 = math.rsqrt %331 : vector<16x1xf32>
    %333 = vector.broadcast %332 : vector<16x1xf32> to vector<16x32xf32>
    %334 = arith.mulf %329, %333 : vector<16x32xf32>
    %335 = vector.broadcast %314 : vector<1x32xf32> to vector<16x32xf32>
    %336 = arith.mulf %334, %335 : vector<16x32xf32>
    %337 = vector.broadcast %316 : vector<1x32xf32> to vector<16x32xf32>
    %338 = arith.addf %336, %337 : vector<16x32xf32>
    %c1_137 = arith.constant 1 : index
    %c0_138 = arith.constant 0 : index
    %c0_139 = arith.constant 0 : index
    %339 = vector.load %arg15[%c1_137, %c0_138, %c0_139] : memref<2x32x128xf32, #tpu.memory_space<vmem>>, vector<1x32x128xf32>
    %340 = vector.shape_cast %339 : vector<1x32x128xf32> to vector<32x128xf32>
    %c1_140 = arith.constant 1 : index
    %c0_141 = arith.constant 0 : index
    %c0_142 = arith.constant 0 : index
    %341 = vector.load %arg16[%c1_140, %c0_141, %c0_142] : memref<2x1x128xf32, #tpu.memory_space<vmem>>, vector<1x1x128xf32>
    %342 = vector.shape_cast %341 : vector<1x1x128xf32> to vector<1x128xf32>
    %343 = arith.truncf %338 : vector<16x32xf32> to vector<16x32xbf16>
    %344 = arith.truncf %340 : vector<32x128xf32> to vector<32x128xbf16>
    %cst_143 = arith.constant dense<0.000000e+00> : vector<16x128xf32>
    %345 = tpu.matmul %343, %344, %cst_143 {dimension_numbers = #tpu.dot_dimension_numbers<[1], [0], [0], [1], [0, 0, 1, 1], [], []>} : vector<16x32xbf16>, vector<32x128xbf16>, vector<16x128xf32> -> vector<16x128xf32>
    %346 = vector.broadcast %342 : vector<1x128xf32> to vector<16x128xf32>
    %347 = arith.addf %345, %346 : vector<16x128xf32>
    %348 = arith.mulf %347, %347 : vector<16x128xf32>
    %349 = arith.mulf %347, %348 : vector<16x128xf32>
    %cst_144 = arith.constant 4.471500e-02 : f32
    %350 = vector.broadcast %cst_144 : f32 to vector<16x128xf32>
    %351 = arith.mulf %350, %349 : vector<16x128xf32>
    %352 = arith.addf %347, %351 : vector<16x128xf32>
    %cst_145 = arith.constant 0.797884583 : f32
    %353 = vector.broadcast %cst_145 : f32 to vector<16x128xf32>
    %354 = arith.mulf %353, %352 : vector<16x128xf32>
    %355 = math.tanh %354 : vector<16x128xf32>
    %cst_146 = arith.constant 1.000000e+00 : f32
    %356 = vector.broadcast %cst_146 : f32 to vector<16x128xf32>
    %357 = arith.addf %356, %355 : vector<16x128xf32>
    %cst_147 = arith.constant 5.000000e-01 : f32
    %358 = vector.broadcast %cst_147 : f32 to vector<16x128xf32>
    %359 = arith.mulf %358, %357 : vector<16x128xf32>
    %360 = arith.mulf %347, %359 : vector<16x128xf32>
    %c1_148 = arith.constant 1 : index
    %c0_149 = arith.constant 0 : index
    %c0_150 = arith.constant 0 : index
    %361 = vector.load %arg17[%c1_148, %c0_149, %c0_150] : memref<2x128x32xf32, #tpu.memory_space<vmem>>, vector<1x128x32xf32>
    %362 = vector.shape_cast %361 : vector<1x128x32xf32> to vector<128x32xf32>
    %c1_151 = arith.constant 1 : index
    %c0_152 = arith.constant 0 : index
    %c0_153 = arith.constant 0 : index
    %363 = vector.load %arg18[%c1_151, %c0_152, %c0_153] : memref<2x1x32xf32, #tpu.memory_space<vmem>>, vector<1x1x32xf32>
    %364 = vector.shape_cast %363 : vector<1x1x32xf32> to vector<1x32xf32>
    %365 = arith.truncf %360 : vector<16x128xf32> to vector<16x128xbf16>
    %366 = arith.truncf %362 : vector<128x32xf32> to vector<128x32xbf16>
    %cst_154 = arith.constant dense<0.000000e+00> : vector<16x32xf32>
    %367 = tpu.matmul %365, %366, %cst_154 {dimension_numbers = #tpu.dot_dimension_numbers<[1], [0], [0], [1], [0, 0, 1, 1], [], []>} : vector<16x128xbf16>, vector<128x32xbf16>, vector<16x32xf32> -> vector<16x32xf32>
    %368 = vector.broadcast %364 : vector<1x32xf32> to vector<16x32xf32>
    %369 = arith.addf %367, %368 : vector<16x32xf32>
    %370 = arith.addf %312, %369 : vector<16x32xf32>
    %c0_155 = arith.constant 0 : index
    %c0_156 = arith.constant 0 : index
    %371 = vector.load %arg19[%c0_155, %c0_156] : memref<1x32xf32, #tpu.memory_space<vmem>>, vector<1x32xf32>
    %c0_157 = arith.constant 0 : index
    %c0_158 = arith.constant 0 : index
    %372 = vector.load %arg20[%c0_157, %c0_158] : memref<1x32xf32, #tpu.memory_space<vmem>>, vector<1x32xf32>
    %cst_159 = arith.constant dense<0.000000e+00> : vector<16xf32>
    %373 = vector.multi_reduction <add>, %370, %cst_159 [1] : vector<16x32xf32> to vector<16xf32>
    %374 = vector.shape_cast %373 : vector<16xf32> to vector<16x1xf32>
    %cst_160 = arith.constant 3.200000e+01 : f32
    %375 = vector.broadcast %cst_160 : f32 to vector<16x1xf32>
    %376 = arith.divf %374, %375 : vector<16x1xf32>
    %377 = vector.broadcast %376 : vector<16x1xf32> to vector<16x32xf32>
    %378 = arith.subf %370, %377 : vector<16x32xf32>
    %379 = arith.mulf %378, %378 : vector<16x32xf32>
    %cst_161 = arith.constant dense<0.000000e+00> : vector<16xf32>
    %380 = vector.multi_reduction <add>, %379, %cst_161 [1] : vector<16x32xf32> to vector<16xf32>
    %381 = vector.shape_cast %380 : vector<16xf32> to vector<16x1xf32>
    %cst_162 = arith.constant 3.200000e+01 : f32
    %382 = vector.broadcast %cst_162 : f32 to vector<16x1xf32>
    %383 = arith.divf %381, %382 : vector<16x1xf32>
    %384 = vector.broadcast %376 : vector<16x1xf32> to vector<16x32xf32>
    %385 = arith.subf %370, %384 : vector<16x32xf32>
    %cst_163 = arith.constant 9.99999974E-6 : f32
    %386 = vector.broadcast %cst_163 : f32 to vector<16x1xf32>
    %387 = arith.addf %383, %386 : vector<16x1xf32>
    %388 = math.rsqrt %387 : vector<16x1xf32>
    %389 = vector.broadcast %388 : vector<16x1xf32> to vector<16x32xf32>
    %390 = arith.mulf %385, %389 : vector<16x32xf32>
    %391 = vector.broadcast %371 : vector<1x32xf32> to vector<16x32xf32>
    %392 = arith.mulf %390, %391 : vector<16x32xf32>
    %393 = vector.broadcast %372 : vector<1x32xf32> to vector<16x32xf32>
    %394 = arith.addf %392, %393 : vector<16x32xf32>
    %c0_164 = arith.constant 0 : index
    %c0_165 = arith.constant 0 : index
    %395 = vector.load %arg21[%c0_164, %c0_165] : memref<32x48xf32, #tpu.memory_space<vmem>>, vector<32x48xf32>
    %c0_166 = arith.constant 0 : index
    %c0_167 = arith.constant 0 : index
    %396 = vector.load %arg22[%c0_166, %c0_167] : memref<1x48xf32, #tpu.memory_space<vmem>>, vector<1x48xf32>
    %397 = arith.truncf %394 : vector<16x32xf32> to vector<16x32xbf16>
    %398 = arith.truncf %395 : vector<32x48xf32> to vector<32x48xbf16>
    %cst_168 = arith.constant dense<0.000000e+00> : vector<16x48xf32>
    %399 = tpu.matmul %397, %398, %cst_168 {dimension_numbers = #tpu.dot_dimension_numbers<[1], [0], [0], [1], [0, 0, 1, 1], [], []>} : vector<16x32xbf16>, vector<32x48xbf16>, vector<16x48xf32> -> vector<16x48xf32>
    %400 = vector.broadcast %396 : vector<1x48xf32> to vector<16x48xf32>
    %401 = arith.addf %399, %400 : vector<16x48xf32>
    %c0_169 = arith.constant 0 : index
    %c0_170 = arith.constant 0 : index
    %c0_171 = arith.constant 0 : index
    %402 = vector.load %arg23[%c0_169, %c0_170, %c0_171] : memref<1x16x48xf32, #tpu.memory_space<vmem>>, vector<1x16x48xf32>
    %403 = vector.shape_cast %402 : vector<1x16x48xf32> to vector<16x48xf32>
    %404 = vector.shape_cast %401 : vector<16x48xf32> to vector<1x16x48xf32>
    tpu.vector_store %arg23[%c0_169, %c0_170, %c0_171], %404 {strides = array<i32>} : memref<1x16x48xf32, #tpu.memory_space<vmem>>, vector<1x16x48xf32>,
    return
  }
  func.func @transform_0(%arg0: i32) -> (i32, i32, i32) {
    %c0_i32 = arith.constant 0 : i32
    %c0_i32_0 = arith.constant 0 : i32
    %c0_i32_1 = arith.constant 0 : i32
    return %arg0, %c0_i32, %c0_i32_0 : i32, i32, i32
  }
  func.func @transform_1(%arg0: i32) -> (i32, i32) {
    %c0_i32 = arith.constant 0 : i32
    %c0_i32_0 = arith.constant 0 : i32
    %c0_i32_1 = arith.constant 0 : i32
    return %c0_i32, %c0_i32_0 : i32, i32
  }
  func.func @transform_2(%arg0: i32) -> (i32, i32) {
    %c0_i32 = arith.constant 0 : i32
    %c0_i32_0 = arith.constant 0 : i32
    %c0_i32_1 = arith.constant 0 : i32
    return %c0_i32, %c0_i32_0 : i32, i32
  }
  func.func @transform_3(%arg0: i32) -> (i32, i32) {
    %c0_i32 = arith.constant 0 : i32
    %c0_i32_0 = arith.constant 0 : i32
    %c0_i32_1 = arith.constant 0 : i32
    return %c0_i32, %c0_i32_0 : i32, i32
  }
  func.func @transform_4(%arg0: i32) -> (i32, i32) {
    %c0_i32 = arith.constant 0 : i32
    %c0_i32_0 = arith.constant 0 : i32
    %c0_i32_1 = arith.constant 0 : i32
    return %c0_i32, %c0_i32_0 : i32, i32
  }
  func.func @transform_5(%arg0: i32) -> (i32, i32, i32) {
    %c0_i32 = arith.constant 0 : i32
    %c0_i32_0 = arith.constant 0 : i32
    %c0_i32_1 = arith.constant 0 : i32
    %c0_i32_2 = arith.constant 0 : i32
    return %c0_i32, %c0_i32_0, %c0_i32_1 : i32, i32, i32
  }
  func.func @transform_6(%arg0: i32) -> (i32, i32, i32) {
    %c0_i32 = arith.constant 0 : i32
    %c0_i32_0 = arith.constant 0 : i32
    %c0_i32_1 = arith.constant 0 : i32
    %c0_i32_2 = arith.constant 0 : i32
    return %c0_i32, %c0_i32_0, %c0_i32_1 : i32, i32, i32
  }
  func.func @transform_7(%arg0: i32) -> (i32, i32, i32) {
    %c0_i32 = arith.constant 0 : i32
    %c0_i32_0 = arith.constant 0 : i32
    %c0_i32_1 = arith.constant 0 : i32
    %c0_i32_2 = arith.constant 0 : i32
    return %c0_i32, %c0_i32_0, %c0_i32_1 : i32, i32, i32
  }
  func.func @transform_8(%arg0: i32) -> (i32, i32, i32) {
    %c0_i32 = arith.constant 0 : i32
    %c0_i32_0 = arith.constant 0 : i32
    %c0_i32_1 = arith.constant 0 : i32
    %c0_i32_2 = arith.constant 0 : i32
    return %c0_i32, %c0_i32_0, %c0_i32_1 : i32, i32, i32
  }
  func.func @transform_9(%arg0: i32) -> (i32, i32, i32) {
    %c0_i32 = arith.constant 0 : i32
    %c0_i32_0 = arith.constant 0 : i32
    %c0_i32_1 = arith.constant 0 : i32
    %c0_i32_2 = arith.constant 0 : i32
    return %c0_i32, %c0_i32_0, %c0_i32_1 : i32, i32, i32
  }
  func.func @transform_10(%arg0: i32) -> (i32, i32, i32) {
    %c0_i32 = arith.constant 0 : i32
    %c0_i32_0 = arith.constant 0 : i32
    %c0_i32_1 = arith.constant 0 : i32
    %c0_i32_2 = arith.constant 0 : i32
    return %c0_i32, %c0_i32_0, %c0_i32_1 : i32, i32, i32
  }
  func.func @transform_11(%arg0: i32) -> (i32, i32, i32) {
    %c0_i32 = arith.constant 0 : i32
    %c0_i32_0 = arith.constant 0 : i32
    %c0_i32_1 = arith.constant 0 : i32
    %c0_i32_2 = arith.constant 0 : i32
    return %c0_i32, %c0_i32_0, %c0_i32_1 : i32, i32, i32
  }
  func.func @transform_12(%arg0: i32) -> (i32, i32, i32) {
    %c0_i32 = arith.constant 0 : i32
    %c0_i32_0 = arith.constant 0 : i32
    %c0_i32_1 = arith.constant 0 : i32
    %c0_i32_2 = arith.constant 0 : i32
    return %c0_i32, %c0_i32_0, %c0_i32_1 : i32, i32, i32
  }
  func.func @transform_13(%arg0: i32) -> (i32, i32, i32) {
    %c0_i32 = arith.constant 0 : i32
    %c0_i32_0 = arith.constant 0 : i32
    %c0_i32_1 = arith.constant 0 : i32
    %c0_i32_2 = arith.constant 0 : i32
    return %c0_i32, %c0_i32_0, %c0_i32_1 : i32, i32, i32
  }
  func.func @transform_14(%arg0: i32) -> (i32, i32, i32) {
    %c0_i32 = arith.constant 0 : i32
    %c0_i32_0 = arith.constant 0 : i32
    %c0_i32_1 = arith.constant 0 : i32
    %c0_i32_2 = arith.constant 0 : i32
    return %c0_i32, %c0_i32_0, %c0_i32_1 : i32, i32, i32
  }
  func.func @transform_15(%arg0: i32) -> (i32, i32, i32) {
    %c0_i32 = arith.constant 0 : i32
    %c0_i32_0 = arith.constant 0 : i32
    %c0_i32_1 = arith.constant 0 : i32
    %c0_i32_2 = arith.constant 0 : i32
    return %c0_i32, %c0_i32_0, %c0_i32_1 : i32, i32, i32
  }
  func.func @transform_16(%arg0: i32) -> (i32, i32, i32) {
    %c0_i32 = arith.constant 0 : i32
    %c0_i32_0 = arith.constant 0 : i32
    %c0_i32_1 = arith.constant 0 : i32
    %c0_i32_2 = arith.constant 0 : i32
    return %c0_i32, %c0_i32_0, %c0_i32_1 : i32, i32, i32
  }
  func.func @transform_17(%arg0: i32) -> (i32, i32, i32) {
    %c0_i32 = arith.constant 0 : i32
    %c0_i32_0 = arith.constant 0 : i32
    %c0_i32_1 = arith.constant 0 : i32
    %c0_i32_2 = arith.constant 0 : i32
    return %c0_i32, %c0_i32_0, %c0_i32_1 : i32, i32, i32
  }
  func.func @transform_18(%arg0: i32) -> (i32, i32) {
    %c0_i32 = arith.constant 0 : i32
    %c0_i32_0 = arith.constant 0 : i32
    %c0_i32_1 = arith.constant 0 : i32
    return %c0_i32, %c0_i32_0 : i32, i32
  }
  func.func @transform_19(%arg0: i32) -> (i32, i32) {
    %c0_i32 = arith.constant 0 : i32
    %c0_i32_0 = arith.constant 0 : i32
    %c0_i32_1 = arith.constant 0 : i32
    return %c0_i32, %c0_i32_0 : i32, i32
  }
  func.func @transform_20(%arg0: i32) -> (i32, i32) {
    %c0_i32 = arith.constant 0 : i32
    %c0_i32_0 = arith.constant 0 : i32
    %c0_i32_1 = arith.constant 0 : i32
    return %c0_i32, %c0_i32_0 : i32, i32
  }
  func.func @transform_21(%arg0: i32) -> (i32, i32) {
    %c0_i32 = arith.constant 0 : i32
    %c0_i32_0 = arith.constant 0 : i32
    %c0_i32_1 = arith.constant 0 : i32
    return %c0_i32, %c0_i32_0 : i32, i32
  }
  func.func @transform_22(%arg0: i32) -> (i32, i32, i32) {
    %c0_i32 = arith.constant 0 : i32
    %c0_i32_0 = arith.constant 0 : i32
    %c0_i32_1 = arith.constant 0 : i32
    return %arg0, %c0_i32, %c0_i32_0 : i32, i32, i32
  }
}

</mosaic_0001>

<llo_original>
// kernel: _lambda_.1
$region0: #{_lambda_.1}
  #allocation0 [shape = 'u32[]', space=smem, size = 0x4, offset = 0x4, fixed_abs, tag = 'smem constant byte address 0x4 - core index']
  #allocation1 [shape = 'u32[144,128]{1,0:T(1,128)}', space=vmem, size = 0x12000, scoped, tag = 'internal scratch']
  %s0 = inlined_call_operand.vmem [shape: f32[2,16,8], index: 0, kind: input, shape index: {}]
  %s1 = inlined_call_operand.vmem [shape: f32[8,32], index: 1, kind: input, shape index: {}]
  %s2 = inlined_call_operand.vmem [shape: f32[1,32], index: 2, kind: input, shape index: {}]
  %s3 = inlined_call_operand.vmem [shape: f32[32,32], index: 3, kind: input, shape index: {}]
  %s4 = inlined_call_operand.vmem [shape: f32[1,32], index: 4, kind: input, shape index: {}]
  %s5 = inlined_call_operand.vmem [shape: f32[1,16,32], index: 5, kind: input, shape index: {}]
  %s6 = inlined_call_operand.vmem [shape: f32[2,1,32], index: 6, kind: input, shape index: {}]
  %s7 = inlined_call_operand.vmem [shape: f32[2,1,32], index: 7, kind: input, shape index: {}]
  %s8 = inlined_call_operand.vmem [shape: f32[2,32,96], index: 8, kind: input, shape index: {}]
  %s9 = inlined_call_operand.vmem [shape: f32[2,1,96], index: 9, kind: input, shape index: {}]
  %s10 = inlined_call_operand.vmem [shape: f32[2,32,32], index: 10, kind: input, shape index: {}]
  %s11 = inlined_call_operand.vmem [shape: f32[2,1,32], index: 11, kind: input, shape index: {}]
  %s12 = inlined_call_operand.vmem [shape: f32[2,1,32], index: 12, kind: input, shape index: {}]
  %s13 = inlined_call_operand.vmem [shape: f32[2,1,32], index: 13, kind: input, shape index: {}]
  %s14 = inlined_call_operand.vmem [shape: f32[2,32,128], index: 14, kind: input, shape index: {}]
  %s15 = inlined_call_operand.vmem [shape: f32[2,1,128], index: 15, kind: input, shape index: {}]
  %s16 = inlined_call_operand.vmem [shape: f32[2,128,32], index: 16, kind: input, shape index: {}]
  %s17 = inlined_call_operand.vmem [shape: f32[2,1,32], index: 17, kind: input, shape index: {}]
  %s18 = inlined_call_operand.vmem [shape: f32[1,32], index: 18, kind: input, shape index: {}]
  %s19 = inlined_call_operand.vmem [shape: f32[1,32], index: 19, kind: input, shape index: {}]
  %s20 = inlined_call_operand.vmem [shape: f32[32,48], index: 20, kind: input, shape index: {}]
  %s21 = inlined_call_operand.vmem [shape: f32[1,48], index: 21, kind: input, shape index: {}]
  %s22 = inlined_call_operand.vmem [shape: f32[2,16,48], index: 22, kind: output, shape index: {}]
  %s23 = sld [smem:[#allocation0]]
  $region121: #{_lambda_.1} parent=0
    _
  %s25 = ssub.s32 1, %s23
  %s26 = scalar_select 0, %s25, %s23
  loop: start=0, step=1, limit=4
  $region2: #{_lambda_.1} parent=0 // loop_pre_header
    _
  $region3: #{_lambda_.1} parent=0 // loop_header
    %s28 = sphi 0, %s32
    %p29 = scmp.ge.s32.totalorder %s28, 4
    %s38 = sphi 0, %s40
    %s41 = sphi 0, %s38
    %s42 = sphi 0, %s41
    %s58 = sphi 0, %s42
    %s62 = sphi 0, %s62
    %s64 = sphi 0, %s62
    %s65 = sphi 0, %s64
    %s79 = sphi 0, %s65
    %s83 = sphi 0, %s83
    %s85 = sphi 0, %s83
    %s86 = sphi 0, %s85
    %s100 = sphi 0, %s86
    %s104 = sphi 0, %s104
    %s106 = sphi 0, %s104
    %s107 = sphi 0, %s106
    %s121 = sphi 0, %s107
    %s125 = sphi 0, %s125
    %s127 = sphi 0, %s125
    %s128 = sphi 0, %s127
    %s142 = sphi 0, %s128
    %s146 = sphi 0, %s146
    %s148 = sphi 0, %s146
    %s149 = sphi 0, %s148
    %s163 = sphi 0, %s149
    %s167 = sphi 0, %s167
    %s169 = sphi 0, %s167
    %s170 = sphi 0, %s169
    %s184 = sphi 0, %s170
    %s188 = sphi 0, %s188
    %s190 = sphi 0, %s188
    %s191 = sphi 0, %s190
    %s205 = sphi 0, %s191
    %s209 = sphi 0, %s209
    %s211 = sphi 0, %s209
    %s212 = sphi 0, %s211
    %s226 = sphi 0, %s212
    %s230 = sphi 0, %s230
    %s232 = sphi 0, %s230
    %s233 = sphi 0, %s232
    %s247 = sphi 0, %s233
    %s251 = sphi 0, %s251
    %s253 = sphi 0, %s251
    %s254 = sphi 0, %s253
    %s268 = sphi 0, %s254
    %s272 = sphi 0, %s272
    %s274 = sphi 0, %s272
    %s275 = sphi 0, %s274
    %s289 = sphi 0, %s275
    %s293 = sphi 0, %s293
    %s295 = sphi 0, %s293
    %s296 = sphi 0, %s295
    %s310 = sphi 0, %s296
    %s314 = sphi 0, %s314
    %s316 = sphi 0, %s314
    %s317 = sphi 0, %s316
    %s331 = sphi 0, %s317
    %s335 = sphi 0, %s335
    %s337 = sphi 0, %s335
    %s338 = sphi 0, %s337
    %s352 = sphi 0, %s338
    %s356 = sphi 0, %s356
    %s358 = sphi 0, %s356
    %s359 = sphi 0, %s358
    %s373 = sphi 0, %s359
    %s377 = sphi 0, %s377
    %s379 = sphi 0, %s377
    %s380 = sphi 0, %s379
    %s394 = sphi 0, %s380
    %s398 = sphi 0, %s398
    %s400 = sphi 0, %s398
    %s401 = sphi 0, %s400
    %s415 = sphi 0, %s401
    %s419 = sphi 0, %s419
    %s421 = sphi 0, %s419
    %s422 = sphi 0, %s421
    %s436 = sphi 0, %s422
    %s440 = sphi 0, %s440
    %s442 = sphi 0, %s440
    %s443 = sphi 0, %s442
    %s457 = sphi 0, %s443
    %s461 = sphi 0, %s461
    %s463 = sphi 0, %s461
    %s464 = sphi 0, %s463
    %s478 = sphi 0, %s464
    %s482 = sphi 0, %s482
    %s484 = sphi 0, %s482
    %s485 = sphi 0, %s484
    %s499 = sphi 0, %s485
    %s505 = sphi 0, %s507
    %s508 = sphi 0, %s505
    %s509 = sphi 0, %s508
    %s525 = sphi 0, %s509
  $region4: #{_lambda_.1} parent=0 // loop_header_branch
    %31 = sbr.rel (%p29) target = $region8
  $region5: #{_lambda_.1} parent=0 // loop_body
    %s33 = ssub.s32 %s28, 1
    %s34 = ssub.s32 %s28, 2
    %s35 = sadd.s32 %s28, 1
    %s36 = ssub.s32 %s28, %s35
    %p37 = scmp.eq.s32.totalorder %s36, 0
    %s39 = sadd.s32 %s38, 1
    %s40 = scalar_select %p37, %s38, %s39
    %p43 = pneg %p37
    %p44 = scmp.eq.s32.totalorder %s28, 1
    %p45 = por %p43, %p44
    %p46 = scmp.ne.s32.totalorder %s38, %s41
    %p47 = scmp.eq.s32.totalorder %s28, 0
    %p48 = por %p46, %p47
    %p49 = scmp.ne.s32.totalorder %s38, %s41
    %p50 = scmp.eq.s32.totalorder %s33, 1
    %p51 = por %p49, %p50
    %p52 = scmp.ne.s32.totalorder %s41, %s42
    %p53 = scmp.eq.s32.totalorder %s33, 0
    %p54 = por %p52, %p53
    %p55 = scmp.ne.s32.totalorder %s41, %s42
    %p56 = scmp.eq.s32.totalorder %s34, 1
    %p57 = por %p55, %p56
    %p59 = scmp.ne.s32.totalorder %s42, %s58
    %p60 = scmp.eq.s32.totalorder %s34, 0
    %p61 = por %p59, %p60
    %s63 = sadd.s32 %s62, 1
    %p66 = scmp.eq.s32.totalorder %s28, 1
    %p67 = scmp.ne.s32.totalorder %s62, %s64
    %p68 = scmp.eq.s32.totalorder %s28, 0
    %p69 = por %p67, %p68
    %p70 = scmp.ne.s32.totalorder %s62, %s64
    %p71 = scmp.eq.s32.totalorder %s33, 1
    %p72 = por %p70, %p71
    %p73 = scmp.ne.s32.totalorder %s64, %s65
    %p74 = scmp.eq.s32.totalorder %s33, 0
    %p75 = por %p73, %p74
    %p76 = scmp.ne.s32.totalorder %s64, %s65
    %p77 = scmp.eq.s32.totalorder %s34, 1
    %p78 = por %p76, %p77
    %p80 = scmp.ne.s32.totalorder %s65, %s79
    %p81 = scmp.eq.s32.totalorder %s34, 0
    %p82 = por %p80, %p81
    %s84 = sadd.s32 %s83, 1
    %p87 = scmp.eq.s32.totalorder %s28, 1
    %p88 = scmp.ne.s32.totalorder %s83, %s85
    %p89 = scmp.eq.s32.totalorder %s28, 0
    %p90 = por %p88, %p89
    %p91 = scmp.ne.s32.totalorder %s83, %s85
    %p92 = scmp.eq.s32.totalorder %s33, 1
    %p93 = por %p91, %p92
    %p94 = scmp.ne.s32.totalorder %s85, %s86
    %p95 = scmp.eq.s32.totalorder %s33, 0
    %p96 = por %p94, %p95
    %p97 = scmp.ne.s32.totalorder %s85, %s86
    %p98 = scmp.eq.s32.totalorder %s34, 1
    %p99 = por %p97, %p98
    %p101 = scmp.ne.s32.totalorder %s86, %s100
    %p102 = scmp.eq.s32.totalorder %s34, 0
    %p103 = por %p101, %p102
    %s105 = sadd.s32 %s104, 1
    %p108 = scmp.eq.s32.totalorder %s28, 1
    %p109 = scmp.ne.s32.totalorder %s104, %s106
    %p110 = scmp.eq.s32.totalorder %s28, 0
    %p111 = por %p109, %p110
    %p112 = scmp.ne.s32.totalorder %s104, %s106
    %p113 = scmp.eq.s32.totalorder %s33, 1
    %p114 = por %p112, %p113
    %p115 = scmp.ne.s32.totalorder %s106, %s107
    %p116 = scmp.eq.s32.totalorder %s33, 0
    %p117 = por %p115, %p116
    %p118 = scmp.ne.s32.totalorder %s106, %s107
    %p119 = scmp.eq.s32.totalorder %s34, 1
    %p120 = por %p118, %p119
    %p122 = scmp.ne.s32.totalorder %s107, %s121
    %p123 = scmp.eq.s32.totalorder %s34, 0
    %p124 = por %p122, %p123
    %s126 = sadd.s32 %s125, 1
    %p129 = scmp.eq.s32.totalorder %s28, 1
    %p130 = scmp.ne.s32.totalorder %s125, %s127
    %p131 = scmp.eq.s32.totalorder %s28, 0
    %p132 = por %p130, %p131
    %p133 = scmp.ne.s32.totalorder %s125, %s127
    %p134 = scmp.eq.s32.totalorder %s33, 1
    %p135 = por %p133, %p134
    %p136 = scmp.ne.s32.totalorder %s127, %s128
    %p137 = scmp.eq.s32.totalorder %s33, 0
    %p138 = por %p136, %p137
    %p139 = scmp.ne.s32.totalorder %s127, %s128
    %p140 = scmp.eq.s32.totalorder %s34, 1
    %p141 = por %p139, %p140
    %p143 = scmp.ne.s32.totalorder %s128, %s142
    %p144 = scmp.eq.s32.totalorder %s34, 0
    %p145 = por %p143, %p144
    %s147 = sadd.s32 %s146, 1
    %p150 = scmp.eq.s32.totalorder %s28, 1
    %p151 = scmp.ne.s32.totalorder %s146, %s148
    %p152 = scmp.eq.s32.totalorder %s28, 0
    %p153 = por %p151, %p152
    %p154 = scmp.ne.s32.totalorder %s146, %s148
    %p155 = scmp.eq.s32.totalorder %s33, 1
    %p156 = por %p154, %p155
    %p157 = scmp.ne.s32.totalorder %s148, %s149
    %p158 = scmp.eq.s32.totalorder %s33, 0
    %p159 = por %p157, %p158
    %p160 = scmp.ne.s32.totalorder %s148, %s149
    %p161 = scmp.eq.s32.totalorder %s34, 1
    %p162 = por %p160, %p161
    %p164 = scmp.ne.s32.totalorder %s149, %s163
    %p165 = scmp.eq.s32.totalorder %s34, 0
    %p166 = por %p164, %p165
    %s168 = sadd.s32 %s167, 1
    %p171 = scmp.eq.s32.totalorder %s28, 1
    %p172 = scmp.ne.s32.totalorder %s167, %s169
    %p173 = scmp.eq.s32.totalorder %s28, 0
    %p174 = por %p172, %p173
    %p175 = scmp.ne.s32.totalorder %s167, %s169
    %p176 = scmp.eq.s32.totalorder %s33, 1
    %p177 = por %p175, %p176
    %p178 = scmp.ne.s32.totalorder %s169, %s170
    %p179 = scmp.eq.s32.totalorder %s33, 0
    %p180 = por %p178, %p179
    %p181 = scmp.ne.s32.totalorder %s169, %s170
    %p182 = scmp.eq.s32.totalorder %s34, 1
    %p183 = por %p181, %p182
    %p185 = scmp.ne.s32.totalorder %s170, %s184
    %p186 = scmp.eq.s32.totalorder %s34, 0
    %p187 = por %p185, %p186
    %s189 = sadd.s32 %s188, 1
    %p192 = scmp.eq.s32.totalorder %s28, 1
    %p193 = scmp.ne.s32.totalorder %s188, %s190
    %p194 = scmp.eq.s32.totalorder %s28, 0
    %p195 = por %p193, %p194
    %p196 = scmp.ne.s32.totalorder %s188, %s190
    %p197 = scmp.eq.s32.totalorder %s33, 1
    %p198 = por %p196, %p197
    %p199 = scmp.ne.s32.totalorder %s190, %s191
    %p200 = scmp.eq.s32.totalorder %s33, 0
    %p201 = por %p199, %p200
    %p202 = scmp.ne.s32.totalorder %s190, %s191
    %p203 = scmp.eq.s32.totalorder %s34, 1
    %p204 = por %p202, %p203
    %p206 = scmp.ne.s32.totalorder %s191, %s205
    %p207 = scmp.eq.s32.totalorder %s34, 0
    %p208 = por %p206, %p207
    %s210 = sadd.s32 %s209, 1
    %p213 = scmp.eq.s32.totalorder %s28, 1
    %p214 = scmp.ne.s32.totalorder %s209, %s211
    %p215 = scmp.eq.s32.totalorder %s28, 0
    %p216 = por %p214, %p215
    %p217 = scmp.ne.s32.totalorder %s209, %s211
    %p218 = scmp.eq.s32.totalorder %s33, 1
    %p219 = por %p217, %p218
    %p220 = scmp.ne.s32.totalorder %s211, %s212
    %p221 = scmp.eq.s32.totalorder %s33, 0
    %p222 = por %p220, %p221
    %p223 = scmp.ne.s32.totalorder %s211, %s212
    %p224 = scmp.eq.s32.totalorder %s34, 1
    %p225 = por %p223, %p224
    %p227 = scmp.ne.s32.totalorder %s212, %s226
    %p228 = scmp.eq.s32.totalorder %s34, 0
    %p229 = por %p227, %p228
    %s231 = sadd.s32 %s230, 1
    %p234 = scmp.eq.s32.totalorder %s28, 1
    %p235 = scmp.ne.s32.totalorder %s230, %s232
    %p236 = scmp.eq.s32.totalorder %s28, 0
    %p237 = por %p235, %p236
    %p238 = scmp.ne.s32.totalorder %s230, %s232
    %p239 = scmp.eq.s32.totalorder %s33, 1
    %p240 = por %p238, %p239
    %p241 = scmp.ne.s32.totalorder %s232, %s233
    %p242 = scmp.eq.s32.totalorder %s33, 0
    %p243 = por %p241, %p242
    %p244 = scmp.ne.s32.totalorder %s232, %s233
    %p245 = scmp.eq.s32.totalorder %s34, 1
    %p246 = por %p244, %p245
    %p248 = scmp.ne.s32.totalorder %s233, %s247
    %p249 = scmp.eq.s32.totalorder %s34, 0
    %p250 = por %p248, %p249
    %s252 = sadd.s32 %s251, 1
    %p255 = scmp.eq.s32.totalorder %s28, 1
    %p256 = scmp.ne.s32.totalorder %s251, %s253
    %p257 = scmp.eq.s32.totalorder %s28, 0
    %p258 = por %p256, %p257
    %p259 = scmp.ne.s32.totalorder %s251, %s253
    %p260 = scmp.eq.s32.totalorder %s33, 1
    %p261 = por %p259, %p260
    %p262 = scmp.ne.s32.totalorder %s253, %s254
    %p263 = scmp.eq.s32.totalorder %s33, 0
    %p264 = por %p262, %p263
    %p265 = scmp.ne.s32.totalorder %s253, %s254
    %p266 = scmp.eq.s32.totalorder %s34, 1
    %p267 = por %p265, %p266
    %p269 = scmp.ne.s32.totalorder %s254, %s268
    %p270 = scmp.eq.s32.totalorder %s34, 0
    %p271 = por %p269, %p270
    %s273 = sadd.s32 %s272, 1
    %p276 = scmp.eq.s32.totalorder %s28, 1
    %p277 = scmp.ne.s32.totalorder %s272, %s274
    %p278 = scmp.eq.s32.totalorder %s28, 0
    %p279 = por %p277, %p278
    %p280 = scmp.ne.s32.totalorder %s272, %s274
    %p281 = scmp.eq.s32.totalorder %s33, 1
    %p282 = por %p280, %p281
    %p283 = scmp.ne.s32.totalorder %s274, %s275
    %p284 = scmp.eq.s32.totalorder %s33, 0
    %p285 = por %p283, %p284
    %p286 = scmp.ne.s32.totalorder %s274, %s275
    %p287 = scmp.eq.s32.totalorder %s34, 1
    %p288 = por %p286, %p287
    %p290 = scmp.ne.s32.totalorder %s275, %s289
    %p291 = scmp.eq.s32.totalorder %s34, 0
    %p292 = por %p290, %p291
    %s294 = sadd.s32 %s293, 1
    %p297 = scmp.eq.s32.totalorder %s28, 1
    %p298 = scmp.ne.s32.totalorder %s293, %s295
    %p299 = scmp.eq.s32.totalorder %s28, 0
    %p300 = por %p298, %p299
    %p301 = scmp.ne.s32.totalorder %s293, %s295
    %p302 = scmp.eq.s32.totalorder %s33, 1
    %p303 = por %p301, %p302
    %p304 = scmp.ne.s32.totalorder %s295, %s296
    %p305 = scmp.eq.s32.totalorder %s33, 0
    %p306 = por %p304, %p305
    %p307 = scmp.ne.s32.totalorder %s295, %s296
    %p308 = scmp.eq.s32.totalorder %s34, 1
    %p309 = por %p307, %p308
    %p311 = scmp.ne.s32.totalorder %s296, %s310
    %p312 = scmp.eq.s32.totalorder %s34, 0
    %p313 = por %p311, %p312
    %s315 = sadd.s32 %s314, 1
    %p318 = scmp.eq.s32.totalorder %s28, 1
    %p319 = scmp.ne.s32.totalorder %s314, %s316
    %p320 = scmp.eq.s32.totalorder %s28, 0
    %p321 = por %p319, %p320
    %p322 = scmp.ne.s32.totalorder %s314, %s316
    %p323 = scmp.eq.s32.totalorder %s33, 1
    %p324 = por %p322, %p323
    %p325 = scmp.ne.s32.totalorder %s316, %s317
    %p326 = scmp.eq.s32.totalorder %s33, 0
    %p327 = por %p325, %p326
    %p328 = scmp.ne.s32.totalorder %s316, %s317
    %p329 = scmp.eq.s32.totalorder %s34, 1
    %p330 = por %p328, %p329
    %p332 = scmp.ne.s32.totalorder %s317, %s331
    %p333 = scmp.eq.s32.totalorder %s34, 0
    %p334 = por %p332, %p333
    %s336 = sadd.s32 %s335, 1
    %p339 = scmp.eq.s32.totalorder %s28, 1
    %p340 = scmp.ne.s32.totalorder %s335, %s337
    %p341 = scmp.eq.s32.totalorder %s28, 0
    %p342 = por %p340, %p341
    %p343 = scmp.ne.s32.totalorder %s335, %s337
    %p344 = scmp.eq.s32.totalorder %s33, 1
    %p345 = por %p343, %p344
    %p346 = scmp.ne.s32.totalorder %s337, %s338
    %p347 = scmp.eq.s32.totalorder %s33, 0
    %p348 = por %p346, %p347
    %p349 = scmp.ne.s32.totalorder %s337, %s338
    %p350 = scmp.eq.s32.totalorder %s34, 1
    %p351 = por %p349, %p350
    %p353 = scmp.ne.s32.totalorder %s338, %s352
    %p354 = scmp.eq.s32.totalorder %s34, 0
    %p355 = por %p353, %p354
    %s357 = sadd.s32 %s356, 1
    %p360 = scmp.eq.s32.totalorder %s28, 1
    %p361 = scmp.ne.s32.totalorder %s356, %s358
    %p362 = scmp.eq.s32.totalorder %s28, 0
    %p363 = por %p361, %p362
    %p364 = scmp.ne.s32.totalorder %s356, %s358
    %p365 = scmp.eq.s32.totalorder %s33, 1
    %p366 = por %p364, %p365
    %p367 = scmp.ne.s32.totalorder %s358, %s359
    %p368 = scmp.eq.s32.totalorder %s33, 0
    %p369 = por %p367, %p368
    %p370 = scmp.ne.s32.totalorder %s358, %s359
    %p371 = scmp.eq.s32.totalorder %s34, 1
    %p372 = por %p370, %p371
    %p374 = scmp.ne.s32.totalorder %s359, %s373
    %p375 = scmp.eq.s32.totalorder %s34, 0
    %p376 = por %p374, %p375
    %s378 = sadd.s32 %s377, 1
    %p381 = scmp.eq.s32.totalorder %s28, 1
    %p382 = scmp.ne.s32.totalorder %s377, %s379
    %p383 = scmp.eq.s32.totalorder %s28, 0
    %p384 = por %p382, %p383
    %p385 = scmp.ne.s32.totalorder %s377, %s379
    %p386 = scmp.eq.s32.totalorder %s33, 1
    %p387 = por %p385, %p386
    %p388 = scmp.ne.s32.totalorder %s379, %s380
    %p389 = scmp.eq.s32.totalorder %s33, 0
    %p390 = por %p388, %p389
    %p391 = scmp.ne.s32.totalorder %s379, %s380
    %p392 = scmp.eq.s32.totalorder %s34, 1
    %p393 = por %p391, %p392
    %p395 = scmp.ne.s32.totalorder %s380, %s394
    %p396 = scmp.eq.s32.totalorder %s34, 0
    %p397 = por %p395, %p396
    %s399 = sadd.s32 %s398, 1
    %p402 = scmp.eq.s32.totalorder %s28, 1
    %p403 = scmp.ne.s32.totalorder %s398, %s400
    %p404 = scmp.eq.s32.totalorder %s28, 0
    %p405 = por %p403, %p404
    %p406 = scmp.ne.s32.totalorder %s398, %s400
    %p407 = scmp.eq.s32.totalorder %s33, 1
    %p408 = por %p406, %p407
    %p409 = scmp.ne.s32.totalorder %s400, %s401
    %p410 = scmp.eq.s32.totalorder %s33, 0
    %p411 = por %p409, %p410
    %p412 = scmp.ne.s32.totalorder %s400, %s401
    %p413 = scmp.eq.s32.totalorder %s34, 1
    %p414 = por %p412, %p413
    %p416 = scmp.ne.s32.totalorder %s401, %s415
    %p417 = scmp.eq.s32.totalorder %s34, 0
    %p418 = por %p416, %p417
    %s420 = sadd.s32 %s419, 1
    %p423 = scmp.eq.s32.totalorder %s28, 1
    %p424 = scmp.ne.s32.totalorder %s419, %s421
    %p425 = scmp.eq.s32.totalorder %s28, 0
    %p426 = por %p424, %p425
    %p427 = scmp.ne.s32.totalorder %s419, %s421
    %p428 = scmp.eq.s32.totalorder %s33, 1
    %p429 = por %p427, %p428
    %p430 = scmp.ne.s32.totalorder %s421, %s422
    %p431 = scmp.eq.s32.totalorder %s33, 0
    %p432 = por %p430, %p431
    %p433 = scmp.ne.s32.totalorder %s421, %s422
    %p434 = scmp.eq.s32.totalorder %s34, 1
    %p435 = por %p433, %p434
    %p437 = scmp.ne.s32.totalorder %s422, %s436
    %p438 = scmp.eq.s32.totalorder %s34, 0
    %p439 = por %p437, %p438
    %s441 = sadd.s32 %s440, 1
    %p444 = scmp.eq.s32.totalorder %s28, 1
    %p445 = scmp.ne.s32.totalorder %s440, %s442
    %p446 = scmp.eq.s32.totalorder %s28, 0
    %p447 = por %p445, %p446
    %p448 = scmp.ne.s32.totalorder %s440, %s442
    %p449 = scmp.eq.s32.totalorder %s33, 1
    %p450 = por %p448, %p449
    %p451 = scmp.ne.s32.totalorder %s442, %s443
    %p452 = scmp.eq.s32.totalorder %s33, 0
    %p453 = por %p451, %p452
    %p454 = scmp.ne.s32.totalorder %s442, %s443
    %p455 = scmp.eq.s32.totalorder %s34, 1
    %p456 = por %p454, %p455
    %p458 = scmp.ne.s32.totalorder %s443, %s457
    %p459 = scmp.eq.s32.totalorder %s34, 0
    %p460 = por %p458, %p459
    %s462 = sadd.s32 %s461, 1
    %p465 = scmp.eq.s32.totalorder %s28, 1
    %p466 = scmp.ne.s32.totalorder %s461, %s463
    %p467 = scmp.eq.s32.totalorder %s28, 0
    %p468 = por %p466, %p467
    %p469 = scmp.ne.s32.totalorder %s461, %s463
    %p470 = scmp.eq.s32.totalorder %s33, 1
    %p471 = por %p469, %p470
    %p472 = scmp.ne.s32.totalorder %s463, %s464
    %p473 = scmp.eq.s32.totalorder %s33, 0
    %p474 = por %p472, %p473
    %p475 = scmp.ne.s32.totalorder %s463, %s464
    %p476 = scmp.eq.s32.totalorder %s34, 1
    %p477 = por %p475, %p476
    %p479 = scmp.ne.s32.totalorder %s464, %s478
    %p480 = scmp.eq.s32.totalorder %s34, 0
    %p481 = por %p479, %p480
    %s483 = sadd.s32 %s482, 1
    %p486 = scmp.eq.s32.totalorder %s28, 1
    %p487 = scmp.ne.s32.totalorder %s482, %s484
    %p488 = scmp.eq.s32.totalorder %s28, 0
    %p489 = por %p487, %p488
    %p490 = scmp.ne.s32.totalorder %s482, %s484
    %p491 = scmp.eq.s32.totalorder %s33, 1
    %p492 = por %p490, %p491
    %p493 = scmp.ne.s32.totalorder %s484, %s485
    %p494 = scmp.eq.s32.totalorder %s33, 0
    %p495 = por %p493, %p494
    %p496 = scmp.ne.s32.totalorder %s484, %s485
    %p497 = scmp.eq.s32.totalorder %s34, 1
    %p498 = por %p496, %p497
    %p500 = scmp.ne.s32.totalorder %s485, %s499
    %p501 = scmp.eq.s32.totalorder %s34, 0
    %p502 = por %p500, %p501
    %s503 = ssub.s32 %s28, %s35
    %p504 = scmp.eq.s32.totalorder %s503, 0
    %s506 = sadd.s32 %s505, 1
    %s507 = scalar_select %p504, %s505, %s506
    %p510 = pneg %p504
    %p511 = scmp.eq.s32.totalorder %s28, 1
    %p512 = por %p510, %p511
    %p513 = scmp.ne.s32.totalorder %s505, %s508
    %p514 = scmp.eq.s32.totalorder %s28, 0
    %p515 = por %p513, %p514
    %p516 = scmp.ne.s32.totalorder %s505, %s508
    %p517 = scmp.eq.s32.totalorder %s33, 1
    %p518 = por %p516, %p517
    %p519 = scmp.ne.s32.totalorder %s508, %s509
    %p520 = scmp.eq.s32.totalorder %s33, 0
    %p521 = por %p519, %p520
    %p522 = scmp.ne.s32.totalorder %s508, %s509
    %p523 = scmp.eq.s32.totalorder %s34, 1
    %p524 = por %p522, %p523
    %p526 = scmp.ne.s32.totalorder %s509, %s525
    %p527 = scmp.eq.s32.totalorder %s34, 0
    %p528 = por %p526, %p527
    %p529 = scmp.le.s32.totalorder 1, %s28
    %p530 = scmp.lt.s32.totalorder %s28, 3
    %p531 = pnand %p529, %p530
    %p532 = pneg %p531
    // Predicated region
    $region9: #{_lambda_.1} parent=5 // pred_check
      _
    $region10: #{_lambda_.1} parent=5 // pred_check_branch
      %534 = sbr.rel (%p531) target = $region12
    $region11: #{_lambda_.1} parent=5 // pred_region
      %s535 = ssub.s32 %s28, 1
      // Predicated region
      $region13: #{_lambda_.1} parent=11 // pred_check
        %p536 = pneg %p75
      $region14: #{_lambda_.1} parent=11 // pred_check_branch
        %538 = sbr.rel (%p536) target = $region16
      $region15: #{_lambda_.1} parent=11 // pred_region
        _
      $region16: #{_lambda_.1} parent=11 // pred_fallthru
        _
      // Predicated region
      $region17: #{_lambda_.1} parent=11 // pred_check
        %p539 = pneg %p96
      $region18: #{_lambda_.1} parent=11 // pred_check_branch
        %541 = sbr.rel (%p539) target = $region20
      $region19: #{_lambda_.1} parent=11 // pred_region
        _
      $region20: #{_lambda_.1} parent=11 // pred_fallthru
        _
      // Predicated region
      $region21: #{_lambda_.1} parent=11 // pred_check
        %p542 = pneg %p117
      $region22: #{_lambda_.1} parent=11 // pred_check_branch
        %544 = sbr.rel (%p542) target = $region24
      $region23: #{_lambda_.1} parent=11 // pred_region
        _
      $region24: #{_lambda_.1} parent=11 // pred_fallthru
        _
      // Predicated region
      $region25: #{_lambda_.1} parent=11 // pred_check
        %p545 = pneg %p138
      $region26: #{_lambda_.1} parent=11 // pred_check_branch
        %547 = sbr.rel (%p545) target = $region28
      $region27: #{_lambda_.1} parent=11 // pred_region
        _
      $region28: #{_lambda_.1} parent=11 // pred_fallthru
        _
      // Predicated region
      $region29: #{_lambda_.1} parent=11 // pred_check
        %p548 = pneg %p159
      $region30: #{_lambda_.1} parent=11 // pred_check_branch
        %550 = sbr.rel (%p548) target = $region32
      $region31: #{_lambda_.1} parent=11 // pred_region
        _
      $region32: #{_lambda_.1} parent=11 // pred_fallthru
        _
      // Predicated region
      $region33: #{_lambda_.1} parent=11 // pred_check
        %p551 = pneg %p180
      $region34: #{_lambda_.1} parent=11 // pred_check_branch
        %553 = sbr.rel (%p551) target = $region36
      $region35: #{_lambda_.1} parent=11 // pred_region
        _
      $region36: #{_lambda_.1} parent=11 // pred_fallthru
        _
      // Predicated region
      $region37: #{_lambda_.1} parent=11 // pred_check
        %p554 = pneg %p201
      $region38: #{_lambda_.1} parent=11 // pred_check_branch
        %556 = sbr.rel (%p554) target = $region40
      $region39: #{_lambda_.1} parent=11 // pred_region
        _
      $region40: #{_lambda_.1} parent=11 // pred_fallthru
        _
      // Predicated region
      $region41: #{_lambda_.1} parent=11 // pred_check
        %p557 = pneg %p222
      $region42: #{_lambda_.1} parent=11 // pred_check_branch
        %559 = sbr.rel (%p557) target = $region44
      $region43: #{_lambda_.1} parent=11 // pred_region
        _
      $region44: #{_lambda_.1} parent=11 // pred_fallthru
        _
      // Predicated region
      $region45: #{_lambda_.1} parent=11 // pred_check
        %p560 = pneg %p243
      $region46: #{_lambda_.1} parent=11 // pred_check_branch
        %562 = sbr.rel (%p560) target = $region48
      $region47: #{_lambda_.1} parent=11 // pred_region
        _
      $region48: #{_lambda_.1} parent=11 // pred_fallthru
        _
      // Predicated region
      $region49: #{_lambda_.1} parent=11 // pred_check
        %p563 = pneg %p264
      $region50: #{_lambda_.1} parent=11 // pred_check_branch
        %565 = sbr.rel (%p563) target = $region52
      $region51: #{_lambda_.1} parent=11 // pred_region
        _
      $region52: #{_lambda_.1} parent=11 // pred_fallthru
        _
      // Predicated region
      $region53: #{_lambda_.1} parent=11 // pred_check
        %p566 = pneg %p285
      $region54: #{_lambda_.1} parent=11 // pred_check_branch
        %568 = sbr.rel (%p566) target = $region56
      $region55: #{_lambda_.1} parent=11 // pred_region
        _
      $region56: #{_lambda_.1} parent=11 // pred_fallthru
        _
      // Predicated region
      $region57: #{_lambda_.1} parent=11 // pred_check
        %p569 = pneg %p306
      $region58: #{_lambda_.1} parent=11 // pred_check_branch
        %571 = sbr.rel (%p569) target = $region60
      $region59: #{_lambda_.1} parent=11 // pred_region
        _
      $region60: #{_lambda_.1} parent=11 // pred_fallthru
        _
      // Predicated region
      $region61: #{_lambda_.1} parent=11 // pred_check
        %p572 = pneg %p327
      $region62: #{_lambda_.1} parent=11 // pred_check_branch
        %574 = sbr.rel (%p572) target = $region64
      $region63: #{_lambda_.1} parent=11 // pred_region
        _
      $region64: #{_lambda_.1} parent=11 // pred_fallthru
        _
      // Predicated region
      $region65: #{_lambda_.1} parent=11 // pred_check
        %p575 = pneg %p348
      $region66: #{_lambda_.1} parent=11 // pred_check_branch
        %577 = sbr.rel (%p575) target = $region68
      $region67: #{_lambda_.1} parent=11 // pred_region
        _
      $region68: #{_lambda_.1} parent=11 // pred_fallthru
        _
      // Predicated region
      $region69: #{_lambda_.1} parent=11 // pred_check
        %p578 = pneg %p369
      $region70: #{_lambda_.1} parent=11 // pred_check_branch
        %580 = sbr.rel (%p578) target = $region72
      $region71: #{_lambda_.1} parent=11 // pred_region
        _
      $region72: #{_lambda_.1} parent=11 // pred_fallthru
        _
      // Predicated region
      $region73: #{_lambda_.1} parent=11 // pred_check
        %p581 = pneg %p390
      $region74: #{_lambda_.1} parent=11 // pred_check_branch
        %583 = sbr.rel (%p581) target = $region76
      $region75: #{_lambda_.1} parent=11 // pred_region
        _
      $region76: #{_lambda_.1} parent=11 // pred_fallthru
        _
      // Predicated region
      $region77: #{_lambda_.1} parent=11 // pred_check
        %p584 = pneg %p411
      $region78: #{_lambda_.1} parent=11 // pred_check_branch
        %586 = sbr.rel (%p584) target = $region80
      $region79: #{_lambda_.1} parent=11 // pred_region
        _
      $region80: #{_lambda_.1} parent=11 // pred_fallthru
        _
      // Predicated region
      $region81: #{_lambda_.1} parent=11 // pred_check
        %p587 = pneg %p432
      $region82: #{_lambda_.1} parent=11 // pred_check_branch
        %589 = sbr.rel (%p587) target = $region84
      $region83: #{_lambda_.1} parent=11 // pred_region
        _
      $region84: #{_lambda_.1} parent=11 // pred_fallthru
        _
      // Predicated region
      $region85: #{_lambda_.1} parent=11 // pred_check
        %p590 = pneg %p453
      $region86: #{_lambda_.1} parent=11 // pred_check_branch
        %592 = sbr.rel (%p590) target = $region88
      $region87: #{_lambda_.1} parent=11 // pred_region
        _
      $region88: #{_lambda_.1} parent=11 // pred_fallthru
        _
      // Predicated region
      $region89: #{_lambda_.1} parent=11 // pred_check
        %p593 = pneg %p474
      $region90: #{_lambda_.1} parent=11 // pred_check_branch
        %595 = sbr.rel (%p593) target = $region92
      $region91: #{_lambda_.1} parent=11 // pred_region
        _
      $region92: #{_lambda_.1} parent=11 // pred_fallthru
        _
      // Predicated region
      $region93: #{_lambda_.1} parent=11 // pred_check
        %p596 = pneg %p495
      $region94: #{_lambda_.1} parent=11 // pred_check_branch
        %598 = sbr.rel (%p596) target = $region96
      $region95: #{_lambda_.1} parent=11 // pred_region
        _
      $region96: #{_lambda_.1} parent=11 // pred_fallthru
        _
    $region12: #{_lambda_.1} parent=5 // pred_fallthru
      _
    %p599 = scmp.lt.s32.totalorder %s28, 2
    // Predicated region
    $region97: #{_lambda_.1} parent=5 // pred_check
      %p600 = pneg %p599
    $region98: #{_lambda_.1} parent=5 // pred_check_branch
      %602 = sbr.rel (%p600) target = $region100
    $region99: #{_lambda_.1} parent=5 // pred_region
      // Predicated region
      $region101: #{_lambda_.1} parent=99 // pred_check
        %p603 = pneg %p48
      $region102: #{_lambda_.1} parent=99 // pred_check_branch
        %605 = sbr.rel (%p603) target = $region104
      $region103: #{_lambda_.1} parent=99 // pred_region
        %p606 = scmp.lt.s32.totalorder %s28, 1
        %s607 = scalar_select %p606, %s28, 1
        %s608 = smul.addr %s607, 2
        %s609 = smul.addr %s608, 8
        %s610 = scalar_lea.vmem %s0, %s609
      $region104: #{_lambda_.1} parent=99 // pred_fallthru
        _
    $region100: #{_lambda_.1} parent=5 // pred_fallthru
      _
    %p611 = scmp.le.s32.totalorder 1, %s28
    %p612 = scmp.lt.s32.totalorder %s28, 3
    %p613 = pnand %p611, %p612
    %p614 = pneg %p613
    // Predicated region
    $region105: #{_lambda_.1} parent=5 // pred_check
      _
    $region106: #{_lambda_.1} parent=5 // pred_check_branch
      %616 = sbr.rel (%p613) target = $region108
    $region107: #{_lambda_.1} parent=5 // pred_region
      %s617 = ssub.s32 %s28, 1
      %p618 = scmp.lt.s32.totalorder %s33, 1
      %s619 = scalar_select %p618, %s33, 1
      %s620 = smul.addr %s619, 2
      %s621 = smul.addr %s620, 8
      %s622 = scalar_lea.vmem %s0, %s621
      %p623 = pneg %p54
      %p624 = pneg %p51
      %p625 = pneg %p75
      %p626 = pneg %p72
      %p627 = pneg %p96
      %p628 = pneg %p93
      %p629 = pneg %p117
      %p630 = pneg %p114
      %p631 = pneg %p138
      %p632 = pneg %p135
      %p633 = pneg %p159
      %p634 = pneg %p156
      %p635 = pneg %p180
      %p636 = pneg %p177
      %p637 = pneg %p201
      %p638 = pneg %p198
      %p639 = pneg %p222
      %p640 = pneg %p219
      %p641 = pneg %p243
      %p642 = pneg %p240
      %p643 = pneg %p264
      %p644 = pneg %p261
      %p645 = pneg %p285
      %p646 = pneg %p282
      %p647 = pneg %p306
      %p648 = pneg %p303
      %p649 = pneg %p327
      %p650 = pneg %p324
      %p651 = pneg %p348
      %p652 = pneg %p345
      %p653 = pneg %p369
      %p654 = pneg %p366
      %p655 = pneg %p390
      %p656 = pneg %p387
      %p657 = pneg %p411
      %p658 = pneg %p408
      %p659 = pneg %p432
      %p660 = pneg %p429
      %p661 = pneg %p453
      %p662 = pneg %p450
      %p663 = pneg %p474
      %p664 = pneg %p471
      %p665 = pneg %p495
      %p666 = pneg %p492
      %p667 = pneg %p521
      %p668 = pneg %p518
      %p669 = scmp.lt.s32.totalorder %s33, 1
      %s670 = scalar_select %p669, %s33, 1
      %s671 = smul.addr %s670, 2
      %s672 = smul.addr %s671, 8
      %s673 = scalar_lea.vmem %s22, %s672
      %p674 = scmp.lt.s32.totalorder %s33, 1
      %s675 = scalar_select %p674, %s33, 1
      %s676 = smul.addr %s675, 2
      %s677 = smul.addr %s676, 8
      %s678 = scalar_lea.vmem %s0, %s677
      %p679 = scmp.lt.s32.totalorder %s33, 1
      %s680 = scalar_select %p679, %s33, 1
      %s681 = smul.addr %s680, 2
      %s682 = smul.addr %s681, 8
      %s683 = scalar_lea.vmem %s22, %s682
      %v685 = vld [vmem:[%s678] sm:$0xff]
      %v686 = vld [vmem:[%s678 + $0x8] sm:$0xff]
      %v687 = vld [vmem:[%s1] sm:$0xff]
      %v688 = vld [vmem:[%s2] sm:$0x1]
      %v689 = vpack.c.bf16 %v686, %v685
      %v690 = vpack.c.bf16 %v687, %v687
      %v692 = vlaneseq
      %v693 = vshrl.u32 %v692, 7
      %v694 = vsub.s32 0, %v693
      %v695 = vrot.slane %v688, %v694
      %vm697 = vcmask 64512
      %v699 = vsel %vm697, %v689, 0
      %vm701 = vcmask 1043456
      %v703 = vsel %vm701, %v690, 0
      %705 = vmatprep.subr.bf16.mxu0 0
      %706 = vmatpush1.bf16.msra.mxu0 %v703
      %707 = vmatprep.subr.bf16.mxu0 0
      %708 = vmatpush1.bf16.msra.mxu0 0
      %709 = vmatprep.subr.bf16.mxu0 0
      %710 = vmatpush1.bf16.msra.mxu0 0
      %711 = vmatprep.subr.bf16.mxu0 0
      %712 = vmatpush1.bf16.msra.mxu0 0
      %713 = vmatprep.subr.bf16.mxu0 0
      %714 = vmatpush1.bf16.msra.mxu0 0
      %715 = vmatprep.subr.bf16.mxu0 0
      %716 = vmatpush1.bf16.msra.mxu0 0
      %717 = vmatprep.subr.bf16.mxu0 0
      %718 = vmatpush1.bf16.msra.mxu0 0
      %719 = vmatprep.subr.bf16.mxu0 0
      %720 = vmatpush1.bf16.msra.mxu0 0
      %721 = vmatprep.subr.bf16.mxu0 0
      %722 = vmatpush1.bf16.msra.mxu0 0
      %723 = vmatprep.subr.bf16.mxu0 0
      %724 = vmatpush1.bf16.msra.mxu0 0
      %725 = vmatprep.subr.bf16.mxu0 0
      %726 = vmatpush1.bf16.msra.mxu0 0
      %727 = vmatprep.subr.bf16.mxu0 0
      %728 = vmatpush1.bf16.msra.mxu0 0
      %729 = vmatprep.subr.bf16.mxu0 0
      %730 = vmatpush1.bf16.msra.mxu0 0
      %731 = vmatprep.subr.bf16.mxu0 0
      %732 = vmatpush1.bf16.msra.mxu0 0
      %733 = vmatprep.subr.bf16.mxu0 0
      %734 = vmatpush1.bf16.msra.mxu0 0
      %735 = vmatprep.subr.bf16.mxu0 0
      %736 = vmatpush1.bf16.msra.mxu0 0
      %737 = vmatprep.mubr.bf16.mxu0 0
      %738 = vmatmul.mubr.bf16.gmra.mrb[0].mxu0 %v699
      %v739 = vpop.f32.mrb[0].mxu0
      %v740 = vadd.f32 %v695, %v739
      %v741 = vpop.f32.mrb[0].mxu0
      %v742 = vpop.f32.mrb[0].mxu0
      %v743 = vadd.f32 %v695, %v742
      %v744 = vpop.f32.mrb[0].mxu0
      %745 = vdwg.mxu0
      %v746 = vld [vmem:[%s3] sm:$0xff]
      %v747 = vld [vmem:[%s3 + $0x8] sm:$0xff]
      %v748 = vld [vmem:[%s3 + $0x10] sm:$0xff]
      %v749 = vld [vmem:[%s3 + $0x18] sm:$0xff]
      %v750 = vld [vmem:[%s4] sm:$0x1]
      %v751 = vpack.c.bf16 %v743, %v740
      %v752 = vpack.c.bf16 %v747, %v746
      %v753 = vpack.c.bf16 %v749, %v748
      %v755 = vlaneseq
      %v756 = vshrl.u32 %v755, 7
      %v757 = vsub.s32 0, %v756
      %v758 = vrot.slane %v750, %v757
      %vm760 = vcmask 261120
      %v762 = vsel %vm760, %v751, 0
      %764 = vmatprep.subr.bf16.mxu0 0
      %765 = vmatpush1.bf16.msra.mxu0 %v752
      %766 = vmatprep.subr.bf16.mxu0 0
      %767 = vmatpush1.bf16.msra.mxu0 %v753
      %768 = vmatprep.subr.bf16.mxu0 0
      %769 = vmatpush1.bf16.msra.mxu0 0
      %770 = vmatprep.subr.bf16.mxu0 0
      %771 = vmatpush1.bf16.msra.mxu0 0
      %772 = vmatprep.subr.bf16.mxu0 0
      %773 = vmatpush1.bf16.msra.mxu0 0
      %774 = vmatprep.subr.bf16.mxu0 0
      %775 = vmatpush1.bf16.msra.mxu0 0
      %776 = vmatprep.subr.bf16.mxu0 0
      %777 = vmatpush1.bf16.msra.mxu0 0
      %778 = vmatprep.subr.bf16.mxu0 0
      %779 = vmatpush1.bf16.msra.mxu0 0
      %780 = vmatprep.subr.bf16.mxu0 0
      %781 = vmatpush1.bf16.msra.mxu0 0
      %782 = vmatprep.subr.bf16.mxu0 0
      %783 = vmatpush1.bf16.msra.mxu0 0
      %784 = vmatprep.subr.bf16.mxu0 0
      %785 = vmatpush1.bf16.msra.mxu0 0
      %786 = vmatprep.subr.bf16.mxu0 0
      %787 = vmatpush1.bf16.msra.mxu0 0
      %788 = vmatprep.subr.bf16.mxu0 0
      %789 = vmatpush1.bf16.msra.mxu0 0
      %790 = vmatprep.subr.bf16.mxu0 0
      %791 = vmatpush1.bf16.msra.mxu0 0
      %792 = vmatprep.subr.bf16.mxu0 0
      %793 = vmatpush1.bf16.msra.mxu0 0
      %794 = vmatprep.subr.bf16.mxu0 0
      %795 = vmatpush1.bf16.msra.mxu0 0
      %796 = vmatprep.mubr.bf16.mxu0 0
      %797 = vmatmul.mubr.bf16.gmra.mrb[0].mxu0 %v762
      %v798 = vpop.f32.mrb[0].mxu0
      %v799 = vadd.f32 %v758, %v798
      %v800 = vpop.f32.mrb[0].mxu0
      %v801 = vpop.f32.mrb[0].mxu0
      %v802 = vadd.f32 %v758, %v801
      %v803 = vpop.f32.mrb[0].mxu0
      %804 = vdwg.mxu0
      %v805 = vld [vmem:[%s5] sm:$0xff]
      %v806 = vld [vmem:[%s5 + $0x8] sm:$0xff]
      %v807 = vadd.f32 %v799, %v805
      %v808 = vadd.f32 %v802, %v806
      %v809 = vld [vmem:[%s6] sm:$0x1]
      %v810 = vld [vmem:[%s7] sm:$0x1]
      %v811 = vsel %vm760, %v807, 0.0
      %812 = vadd.xlane.f32.xlu0 %v811
      %v813 = vpop.xlane.xlu0 %812
      %v814 = vsel %vm760, %v808, 0.0
      %815 = vadd.xlane.f32.xlu0 %v814
      %v816 = vpop.xlane.xlu0 %815
      %v817 = vrcp.pop 32.0
      %v818 = vmul.f32 %v813, %v817
      %v819 = vmul.f32 %v816, %v817
      %v820 = vsub.f32 %v807, %v818
      %v821 = vsub.f32 %v808, %v819
      %v822 = vmul.f32 %v820, %v820
      %v823 = vmul.f32 %v821, %v821
      %v824 = vsel %vm760, %v822, 0.0
      %825 = vadd.xlane.f32.xlu0 %v824
      %v826 = vpop.xlane.xlu0 %825
      %v827 = vsel %vm760, %v823, 0.0
      %828 = vadd.xlane.f32.xlu0 %v827
      %v829 = vpop.xlane.xlu0 %828
      %v830 = vmul.f32 %v826, %v817
      %v831 = vmul.f32 %v829, %v817
      %v832 = vadd.f32 %v830, 1e-05
      %v833 = vadd.f32 %v831, 1e-05
      %v834 = vrsqrt.pop %v832
      %v835 = vrsqrt.pop %v833
      %v836 = vmul.f32 %v820, %v834
      %v837 = vmul.f32 %v821, %v835
      %v839 = vlaneseq
      %v840 = vshrl.u32 %v839, 7
      %v841 = vsub.s32 0, %v840
      %v842 = vrot.slane %v809, %v841
      %v844 = vmul.f32 %v836, %v842
      %v845 = vmul.f32 %v837, %v842
      %v847 = vlaneseq
      %v848 = vshrl.u32 %v847, 7
      %v849 = vsub.s32 0, %v848
      %v850 = vrot.slane %v810, %v849
      %v852 = vadd.f32 %v844, %v850
      %v853 = vadd.f32 %v845, %v850
      %v854 = vld [vmem:[%s8] sm:$0xff]
      %v855 = vld [vmem:[%s8 + $0x8] sm:$0xff]
      %v856 = vld [vmem:[%s8 + $0x10] sm:$0xff]
      %v857 = vld [vmem:[%s8 + $0x18] sm:$0xff]
      %v858 = vld [vmem:[%s9] sm:$0x1]
      %v859 = vpack.c.bf16 %v853, %v852
      %v860 = vpack.c.bf16 %v855, %v854
      %v861 = vpack.c.bf16 %v857, %v856
      %v863 = vlaneseq
      %v864 = vshrl.u32 %v863, 7
      %v865 = vsub.s32 0, %v864
      %v866 = vrot.slane %v858, %v865
      %v869 = vsel %vm760, %v859, 0
      %871 = vmatprep.subr.bf16.mxu0 0
      %872 = vmatpush1.bf16.msra.mxu0 %v860
      %873 = vmatprep.subr.bf16.mxu0 0
      %874 = vmatpush1.bf16.msra.mxu0 %v861
      %875 = vmatprep.subr.bf16.mxu0 0
      %876 = vmatpush1.bf16.msra.mxu0 0
      %877 = vmatprep.subr.bf16.mxu0 0
      %878 = vmatpush1.bf16.msra.mxu0 0
      %879 = vmatprep.subr.bf16.mxu0 0
      %880 = vmatpush1.bf16.msra.mxu0 0
      %881 = vmatprep.subr.bf16.mxu0 0
      %882 = vmatpush1.bf16.msra.mxu0 0
      %883 = vmatprep.subr.bf16.mxu0 0
      %884 = vmatpush1.bf16.msra.mxu0 0
      %885 = vmatprep.subr.bf16.mxu0 0
      %886 = vmatpush1.bf16.msra.mxu0 0
      %887 = vmatprep.subr.bf16.mxu0 0
      %888 = vmatpush1.bf16.msra.mxu0 0
      %889 = vmatprep.subr.bf16.mxu0 0
      %890 = vmatpush1.bf16.msra.mxu0 0
      %891 = vmatprep.subr.bf16.mxu0 0
      %892 = vmatpush1.bf16.msra.mxu0 0
      %893 = vmatprep.subr.bf16.mxu0 0
      %894 = vmatpush1.bf16.msra.mxu0 0
      %895 = vmatprep.subr.bf16.mxu0 0
      %896 = vmatpush1.bf16.msra.mxu0 0
      %897 = vmatprep.subr.bf16.mxu0 0
      %898 = vmatpush1.bf16.msra.mxu0 0
      %899 = vmatprep.subr.bf16.mxu0 0
      %900 = vmatpush1.bf16.msra.mxu0 0
      %901 = vmatprep.subr.bf16.mxu0 0
      %902 = vmatpush1.bf16.msra.mxu0 0
      %903 = vmatprep.mubr.bf16.mxu0 0
      %904 = vmatmul.mubr.bf16.gmra.mrb[0].mxu0 %v869
      %v905 = vpop.f32.mrb[0].mxu0
      %v906 = vadd.f32 %v866, %v905
      %v907 = vpop.f32.mrb[0].mxu0
      %v908 = vpop.f32.mrb[0].mxu0
      %v909 = vadd.f32 %v866, %v908
      %v910 = vpop.f32.mrb[0].mxu0
      %911 = vdwg.mxu0
      %v912 = vmul.f32 %v906, 0.35355338
      %v913 = vmul.f32 %v909, 0.35355338
      %v914 = vpack.c.bf16 %v913, %v912
      %v915 = vpack.c.bf16 %v909, %v906
      %917 = vrot.lane.b32.xlu0 %v915, 96
      %v918 = vpop.permute.xlu0 %917
      %v920 = vsel %vm697, %v914, 0
      %v923 = vsel %vm697, %v918, 0
      %925 = vmatprep.subr.bf16.mxu0 0
      %926 = vmatpush1.bf16.xpose.msra.mxu0 %v923
      %927 = vmatprep.subr.bf16.mxu0 0
      %928 = vmatpush1.bf16.xpose.msra.mxu0 0
      %929 = vmatprep.subr.bf16.mxu0 0
      %930 = vmatpush1.bf16.xpose.msra.mxu0 0
      %931 = vmatprep.subr.bf16.mxu0 0
      %932 = vmatpush1.bf16.xpose.msra.mxu0 0
      %933 = vmatprep.subr.bf16.mxu0 0
      %934 = vmatpush1.bf16.xpose.msra.mxu0 0
      %935 = vmatprep.subr.bf16.mxu0 0
      %936 = vmatpush1.bf16.xpose.msra.mxu0 0
      %937 = vmatprep.subr.bf16.mxu0 0
      %938 = vmatpush1.bf16.xpose.msra.mxu0 0
      %939 = vmatprep.subr.bf16.mxu0 0
      %940 = vmatpush1.bf16.xpose.msra.mxu0 0
      %941 = vmatprep.subr.bf16.mxu0 0
      %942 = vmatpush1.bf16.xpose.msra.mxu0 0
      %943 = vmatprep.subr.bf16.mxu0 0
      %944 = vmatpush1.bf16.xpose.msra.mxu0 0
      %945 = vmatprep.subr.bf16.mxu0 0
      %946 = vmatpush1.bf16.xpose.msra.mxu0 0
      %947 = vmatprep.subr.bf16.mxu0 0
      %948 = vmatpush1.bf16.xpose.msra.mxu0 0
      %949 = vmatprep.subr.bf16.mxu0 0
      %950 = vmatpush1.bf16.xpose.msra.mxu0 0
      %951 = vmatprep.subr.bf16.mxu0 0
      %952 = vmatpush1.bf16.xpose.msra.mxu0 0
      %953 = vmatprep.subr.bf16.mxu0 0
      %954 = vmatpush1.bf16.xpose.msra.mxu0 0
      %955 = vmatprep.subr.bf16.mxu0 0
      %956 = vmatpush1.bf16.xpose.msra.mxu0 0
      %957 = vmatprep.mubr.bf16.mxu0 0
      %958 = vmatmul.mubr.bf16.gmra.mrb[0].mxu0 %v920
      %v959 = vpop.f32.mrb[0].mxu0
      %v960 = vadd.f32 0.0, %v959
      %v961 = vpop.f32.mrb[0].mxu0
      %v962 = vpop.f32.mrb[0].mxu0
      %v963 = vadd.f32 0.0, %v962
      %v964 = vpop.f32.mrb[0].mxu0
      %965 = vdwg.mxu0
      %vm966 = vcmask 130048
      %v967 = vsel %vm966, %v960, -inf
      %968 = vmax.xlane.f32.xlu0 %v967
      %v969 = vpop.xlane.xlu0 %968
      %v970 = vsel %vm966, %v963, -inf
      %971 = vmax.xlane.f32.xlu0 %v970
      %v972 = vpop.xlane.xlu0 %971
      %v973 = vsub.f32 %v960, %v969
      %v974 = vsub.f32 %v963, %v972
      %v975 = vmul.f32 %v973, 1.442695
      %v976 = vpow.pop %v975
      %v977 = vmul.f32 %v974, 1.442695
      %v978 = vpow.pop %v977
      %v979 = vsel %vm966, %v976, 0.0
      %980 = vadd.xlane.f32.xlu0 %v979
      %v981 = vpop.xlane.xlu0 %980
      %v982 = vsel %vm966, %v978, 0.0
      %983 = vadd.xlane.f32.xlu0 %v982
      %v984 = vpop.xlane.xlu0 %983
      %v985 = vrcp.pop %v981
      %v986 = vrcp.pop %v984
      %v987 = vmul.f32 %v976, %v985
      %v988 = vmul.f32 %v978, %v986
      %v989 = vpack.c.bf16 %v988, %v987
      %990 = vrot.lane.b32.xlu0 %v915, 64
      %v991 = vpop.permute.xlu0 %990
      %v994 = vsel %vm966, %v989, 0
      %996 = vmatprep.subr.bf16.mxu0 0
      %997 = vmatpush1.bf16.msra.mxu0 %v991
      %998 = vmatprep.subr.bf16.mxu0 0
      %999 = vmatpush1.bf16.msra.mxu0 0
      %1000 = vmatprep.subr.bf16.mxu0 0
      %1001 = vmatpush1.bf16.msra.mxu0 0
      %1002 = vmatprep.subr.bf16.mxu0 0
      %1003 = vmatpush1.bf16.msra.mxu0 0
      %1004 = vmatprep.subr.bf16.mxu0 0
      %1005 = vmatpush1.bf16.msra.mxu0 0
      %1006 = vmatprep.subr.bf16.mxu0 0
      %1007 = vmatpush1.bf16.msra.mxu0 0
      %1008 = vmatprep.subr.bf16.mxu0 0
      %1009 = vmatpush1.bf16.msra.mxu0 0
      %1010 = vmatprep.subr.bf16.mxu0 0
      %1011 = vmatpush1.bf16.msra.mxu0 0
      %1012 = vmatprep.subr.bf16.mxu0 0
      %1013 = vmatpush1.bf16.msra.mxu0 0
      %1014 = vmatprep.subr.bf16.mxu0 0
      %1015 = vmatpush1.bf16.msra.mxu0 0
      %1016 = vmatprep.subr.bf16.mxu0 0
      %1017 = vmatpush1.bf16.msra.mxu0 0
      %1018 = vmatprep.subr.bf16.mxu0 0
      %1019 = vmatpush1.bf16.msra.mxu0 0
      %1020 = vmatprep.subr.bf16.mxu0 0
      %1021 = vmatpush1.bf16.msra.mxu0 0
      %1022 = vmatprep.subr.bf16.mxu0 0
      %1023 = vmatpush1.bf16.msra.mxu0 0
      %1024 = vmatprep.subr.bf16.mxu0 0
      %1025 = vmatpush1.bf16.msra.mxu0 0
      %1026 = vmatprep.subr.bf16.mxu0 0
      %1027 = vmatpush1.bf16.msra.mxu0 0
      %1028 = vmatprep.mubr.bf16.mxu0 0
      %1029 = vmatmul.mubr.bf16.gmra.mrb[0].mxu0 %v994
      %v1030 = vpop.f32.mrb[0].mxu0
      %v1031 = vadd.f32 0.0, %v1030
      %v1032 = vpop.f32.mrb[0].mxu0
      %v1033 = vpop.f32.mrb[0].mxu0
      %v1034 = vadd.f32 0.0, %v1033
      %v1035 = vpop.f32.mrb[0].mxu0
      %1036 = vdwg.mxu0
      %1038 = vrot.lane.b32.xlu0 %v914, 120
      %v1039 = vpop.permute.xlu0 %1038
      %1040 = vrot.lane.b32.xlu0 %v915, 88
      %v1041 = vpop.permute.xlu0 %1040
      %v1043 = vsel %vm697, %v1039, 0
      %v1046 = vsel %vm697, %v1041, 0
      %1048 = vmatprep.subr.bf16.mxu0 0
      %1049 = vmatpush1.bf16.xpose.msra.mxu0 %v1046
      %1050 = vmatprep.subr.bf16.mxu0 0
      %1051 = vmatpush1.bf16.xpose.msra.mxu0 0
      %1052 = vmatprep.subr.bf16.mxu0 0
      %1053 = vmatpush1.bf16.xpose.msra.mxu0 0
      %1054 = vmatprep.subr.bf16.mxu0 0
      %1055 = vmatpush1.bf16.xpose.msra.mxu0 0
      %1056 = vmatprep.subr.bf16.mxu0 0
      %1057 = vmatpush1.bf16.xpose.msra.mxu0 0
      %1058 = vmatprep.subr.bf16.mxu0 0
      %1059 = vmatpush1.bf16.xpose.msra.mxu0 0
      %1060 = vmatprep.subr.bf16.mxu0 0
      %1061 = vmatpush1.bf16.xpose.msra.mxu0 0
      %1062 = vmatprep.subr.bf16.mxu0 0
      %1063 = vmatpush1.bf16.xpose.msra.mxu0 0
      %1064 = vmatprep.subr.bf16.mxu0 0
      %1065 = vmatpush1.bf16.xpose.msra.mxu0 0
      %1066 = vmatprep.subr.bf16.mxu0 0
      %1067 = vmatpush1.bf16.xpose.msra.mxu0 0
      %1068 = vmatprep.subr.bf16.mxu0 0
      %1069 = vmatpush1.bf16.xpose.msra.mxu0 0
      %1070 = vmatprep.subr.bf16.mxu0 0
      %1071 = vmatpush1.bf16.xpose.msra.mxu0 0
      %1072 = vmatprep.subr.bf16.mxu0 0
      %1073 = vmatpush1.bf16.xpose.msra.mxu0 0
      %1074 = vmatprep.subr.bf16.mxu0 0
      %1075 = vmatpush1.bf16.xpose.msra.mxu0 0
      %1076 = vmatprep.subr.bf16.mxu0 0
      %1077 = vmatpush1.bf16.xpose.msra.mxu0 0
      %1078 = vmatprep.subr.bf16.mxu0 0
      %1079 = vmatpush1.bf16.xpose.msra.mxu0 0
      %1080 = vmatprep.mubr.bf16.mxu0 0
      %1081 = vmatmul.mubr.bf16.gmra.mrb[0].mxu0 %v1043
      %v1082 = vpop.f32.mrb[0].mxu0
      %v1083 = vadd.f32 0.0, %v1082
      %v1084 = vpop.f32.mrb[0].mxu0
      %v1085 = vpop.f32.mrb[0].mxu0
      %v1086 = vadd.f32 0.0, %v1085
      %v1087 = vpop.f32.mrb[0].mxu0
      %1088 = vdwg.mxu0
      %v1089 = vsel %vm966, %v1083, -inf
      %1090 = vmax.xlane.f32.xlu0 %v1089
      %v1091 = vpop.xlane.xlu0 %1090
      %v1092 = vsel %vm966, %v1086, -inf
      %1093 = vmax.xlane.f32.xlu0 %v1092
      %v1094 = vpop.xlane.xlu0 %1093
      %v1095 = vsub.f32 %v1083, %v1091
      %v1096 = vsub.f32 %v1086, %v1094
      %v1097 = vmul.f32 %v1095, 1.442695
      %v1098 = vpow.pop %v1097
      %v1099 = vmul.f32 %v1096, 1.442695
      %v1100 = vpow.pop %v1099
      %v1101 = vsel %vm966, %v1098, 0.0
      %1102 = vadd.xlane.f32.xlu0 %v1101
      %v1103 = vpop.xlane.xlu0 %1102
      %v1104 = vsel %vm966, %v1100, 0.0
      %1105 = vadd.xlane.f32.xlu0 %v1104
      %v1106 = vpop.xlane.xlu0 %1105
      %v1107 = vrcp.pop %v1103
      %v1108 = vrcp.pop %v1106
      %v1109 = vmul.f32 %v1098, %v1107
      %v1110 = vmul.f32 %v1100, %v1108
      %v1111 = vpack.c.bf16 %v1110, %v1109
      %1112 = vrot.lane.b32.xlu0 %v915, 56
      %v1113 = vpop.permute.xlu0 %1112
      %v1116 = vsel %vm966, %v1111, 0
      %1118 = vmatprep.subr.bf16.mxu0 0
      %1119 = vmatpush1.bf16.msra.mxu0 %v1113
      %1120 = vmatprep.subr.bf16.mxu0 0
      %1121 = vmatpush1.bf16.msra.mxu0 0
      %1122 = vmatprep.subr.bf16.mxu0 0
      %1123 = vmatpush1.bf16.msra.mxu0 0
      %1124 = vmatprep.subr.bf16.mxu0 0
      %1125 = vmatpush1.bf16.msra.mxu0 0
      %1126 = vmatprep.subr.bf16.mxu0 0
      %1127 = vmatpush1.bf16.msra.mxu0 0
      %1128 = vmatprep.subr.bf16.mxu0 0
      %1129 = vmatpush1.bf16.msra.mxu0 0
      %1130 = vmatprep.subr.bf16.mxu0 0
      %1131 = vmatpush1.bf16.msra.mxu0 0
      %1132 = vmatprep.subr.bf16.mxu0 0
      %1133 = vmatpush1.bf16.msra.mxu0 0
      %1134 = vmatprep.subr.bf16.mxu0 0
      %1135 = vmatpush1.bf16.msra.mxu0 0
      %1136 = vmatprep.subr.bf16.mxu0 0
      %1137 = vmatpush1.bf16.msra.mxu0 0
      %1138 = vmatprep.subr.bf16.mxu0 0
      %1139 = vmatpush1.bf16.msra.mxu0 0
      %1140 = vmatprep.subr.bf16.mxu0 0
      %1141 = vmatpush1.bf16.msra.mxu0 0
      %1142 = vmatprep.subr.bf16.mxu0 0
      %1143 = vmatpush1.bf16.msra.mxu0 0
      %1144 = vmatprep.subr.bf16.mxu0 0
      %1145 = vmatpush1.bf16.msra.mxu0 0
      %1146 = vmatprep.subr.bf16.mxu0 0
      %1147 = vmatpush1.bf16.msra.mxu0 0
      %1148 = vmatprep.subr.bf16.mxu0 0
      %1149 = vmatpush1.bf16.msra.mxu0 0
      %1150 = vmatprep.mubr.bf16.mxu0 0
      %1151 = vmatmul.mubr.bf16.gmra.mrb[0].mxu0 %v1116
      %v1152 = vpop.f32.mrb[0].mxu0
      %v1153 = vadd.f32 0.0, %v1152
      %v1154 = vpop.f32.mrb[0].mxu0
      %v1155 = vpop.f32.mrb[0].mxu0
      %v1156 = vadd.f32 0.0, %v1155
      %v1157 = vpop.f32.mrb[0].mxu0
      %1158 = vdwg.mxu0
      %1159 = vrot.lane.b32.xlu0 %v914, 112
      %v1160 = vpop.permute.xlu0 %1159
      %1161 = vrot.lane.b32.xlu0 %v915, 80
      %v1162 = vpop.permute.xlu0 %1161
      %v1164 = vsel %vm697, %v1160, 0
      %v1167 = vsel %vm697, %v1162, 0
      %1169 = vmatprep.subr.bf16.mxu0 0
      %1170 = vmatpush1.bf16.xpose.msra.mxu0 %v1167
      %1171 = vmatprep.subr.bf16.mxu0 0
      %1172 = vmatpush1.bf16.xpose.msra.mxu0 0
      %1173 = vmatprep.subr.bf16.mxu0 0
      %1174 = vmatpush1.bf16.xpose.msra.mxu0 0
      %1175 = vmatprep.subr.bf16.mxu0 0
      %1176 = vmatpush1.bf16.xpose.msra.mxu0 0
      %1177 = vmatprep.subr.bf16.mxu0 0
      %1178 = vmatpush1.bf16.xpose.msra.mxu0 0
      %1179 = vmatprep.subr.bf16.mxu0 0
      %1180 = vmatpush1.bf16.xpose.msra.mxu0 0
      %1181 = vmatprep.subr.bf16.mxu0 0
      %1182 = vmatpush1.bf16.xpose.msra.mxu0 0
      %1183 = vmatprep.subr.bf16.mxu0 0
      %1184 = vmatpush1.bf16.xpose.msra.mxu0 0
      %1185 = vmatprep.subr.bf16.mxu0 0
      %1186 = vmatpush1.bf16.xpose.msra.mxu0 0
      %1187 = vmatprep.subr.bf16.mxu0 0
      %1188 = vmatpush1.bf16.xpose.msra.mxu0 0
      %1189 = vmatprep.subr.bf16.mxu0 0
      %1190 = vmatpush1.bf16.xpose.msra.mxu0 0
      %1191 = vmatprep.subr.bf16.mxu0 0
      %1192 = vmatpush1.bf16.xpose.msra.mxu0 0
      %1193 = vmatprep.subr.bf16.mxu0 0
      %1194 = vmatpush1.bf16.xpose.msra.mxu0 0
      %1195 = vmatprep.subr.bf16.mxu0 0
      %1196 = vmatpush1.bf16.xpose.msra.mxu0 0
      %1197 = vmatprep.subr.bf16.mxu0 0
      %1198 = vmatpush1.bf16.xpose.msra.mxu0 0
      %1199 = vmatprep.subr.bf16.mxu0 0
      %1200 = vmatpush1.bf16.xpose.msra.mxu0 0
      %1201 = vmatprep.mubr.bf16.mxu0 0
      %1202 = vmatmul.mubr.bf16.gmra.mrb[0].mxu0 %v1164
      %v1203 = vpop.f32.mrb[0].mxu0
      %v1204 = vadd.f32 0.0, %v1203
      %v1205 = vpop.f32.mrb[0].mxu0
      %v1206 = vpop.f32.mrb[0].mxu0
      %v1207 = vadd.f32 0.0, %v1206
      %v1208 = vpop.f32.mrb[0].mxu0
      %1209 = vdwg.mxu0
      %v1210 = vsel %vm966, %v1204, -inf
      %1211 = vmax.xlane.f32.xlu0 %v1210
      %v1212 = vpop.xlane.xlu0 %1211
      %v1213 = vsel %vm966, %v1207, -inf
      %1214 = vmax.xlane.f32.xlu0 %v1213
      %v1215 = vpop.xlane.xlu0 %1214
      %v1216 = vsub.f32 %v1204, %v1212
      %v1217 = vsub.f32 %v1207, %v1215
      %v1218 = vmul.f32 %v1216, 1.442695
      %v1219 = vpow.pop %v1218
      %v1220 = vmul.f32 %v1217, 1.442695
      %v1221 = vpow.pop %v1220
      %v1222 = vsel %vm966, %v1219, 0.0
      %1223 = vadd.xlane.f32.xlu0 %v1222
      %v1224 = vpop.xlane.xlu0 %1223
      %v1225 = vsel %vm966, %v1221, 0.0
      %1226 = vadd.xlane.f32.xlu0 %v1225
      %v1227 = vpop.xlane.xlu0 %1226
      %v1228 = vrcp.pop %v1224
      %v1229 = vrcp.pop %v1227
      %v1230 = vmul.f32 %v1219, %v1228
      %v1231 = vmul.f32 %v1221, %v1229
      %v1232 = vpack.c.bf16 %v1231, %v1230
      %1233 = vrot.lane.b32.xlu0 %v915, 48
      %v1234 = vpop.permute.xlu0 %1233
      %v1237 = vsel %vm966, %v1232, 0
      %1239 = vmatprep.subr.bf16.mxu0 0
      %1240 = vmatpush1.bf16.msra.mxu0 %v1234
      %1241 = vmatprep.subr.bf16.mxu0 0
      %1242 = vmatpush1.bf16.msra.mxu0 0
      %1243 = vmatprep.subr.bf16.mxu0 0
      %1244 = vmatpush1.bf16.msra.mxu0 0
      %1245 = vmatprep.subr.bf16.mxu0 0
      %1246 = vmatpush1.bf16.msra.mxu0 0
      %1247 = vmatprep.subr.bf16.mxu0 0
      %1248 = vmatpush1.bf16.msra.mxu0 0
      %1249 = vmatprep.subr.bf16.mxu0 0
      %1250 = vmatpush1.bf16.msra.mxu0 0
      %1251 = vmatprep.subr.bf16.mxu0 0
      %1252 = vmatpush1.bf16.msra.mxu0 0
      %1253 = vmatprep.subr.bf16.mxu0 0
      %1254 = vmatpush1.bf16.msra.mxu0 0
      %1255 = vmatprep.subr.bf16.mxu0 0
      %1256 = vmatpush1.bf16.msra.mxu0 0
      %1257 = vmatprep.subr.bf16.mxu0 0
      %1258 = vmatpush1.bf16.msra.mxu0 0
      %1259 = vmatprep.subr.bf16.mxu0 0
      %1260 = vmatpush1.bf16.msra.mxu0 0
      %1261 = vmatprep.subr.bf16.mxu0 0
      %1262 = vmatpush1.bf16.msra.mxu0 0
      %1263 = vmatprep.subr.bf16.mxu0 0
      %1264 = vmatpush1.bf16.msra.mxu0 0
      %1265 = vmatprep.subr.bf16.mxu0 0
      %1266 = vmatpush1.bf16.msra.mxu0 0
      %1267 = vmatprep.subr.bf16.mxu0 0
      %1268 = vmatpush1.bf16.msra.mxu0 0
      %1269 = vmatprep.subr.bf16.mxu0 0
      %1270 = vmatpush1.bf16.msra.mxu0 0
      %1271 = vmatprep.mubr.bf16.mxu0 0
      %1272 = vmatmul.mubr.bf16.gmra.mrb[0].mxu0 %v1237
      %v1273 = vpop.f32.mrb[0].mxu0
      %v1274 = vadd.f32 0.0, %v1273
      %v1275 = vpop.f32.mrb[0].mxu0
      %v1276 = vpop.f32.mrb[0].mxu0
      %v1277 = vadd.f32 0.0, %v1276
      %v1278 = vpop.f32.mrb[0].mxu0
      %1279 = vdwg.mxu0
      %1280 = vrot.lane.b32.xlu0 %v914, 104
      %v1281 = vpop.permute.xlu0 %1280
      %1282 = vrot.lane.b32.xlu0 %v915, 72
      %v1283 = vpop.permute.xlu0 %1282
      %v1285 = vsel %vm697, %v1281, 0
      %v1288 = vsel %vm697, %v1283, 0
      %1290 = vmatprep.subr.bf16.mxu0 0
      %1291 = vmatpush1.bf16.xpose.msra.mxu0 %v1288
      %1292 = vmatprep.subr.bf16.mxu0 0
      %1293 = vmatpush1.bf16.xpose.msra.mxu0 0
      %1294 = vmatprep.subr.bf16.mxu0 0
      %1295 = vmatpush1.bf16.xpose.msra.mxu0 0
      %1296 = vmatprep.subr.bf16.mxu0 0
      %1297 = vmatpush1.bf16.xpose.msra.mxu0 0
      %1298 = vmatprep.subr.bf16.mxu0 0
      %1299 = vmatpush1.bf16.xpose.msra.mxu0 0
      %1300 = vmatprep.subr.bf16.mxu0 0
      %1301 = vmatpush1.bf16.xpose.msra.mxu0 0
      %1302 = vmatprep.subr.bf16.mxu0 0
      %1303 = vmatpush1.bf16.xpose.msra.mxu0 0
      %1304 = vmatprep.subr.bf16.mxu0 0
      %1305 = vmatpush1.bf16.xpose.msra.mxu0 0
      %1306 = vmatprep.subr.bf16.mxu0 0
      %1307 = vmatpush1.bf16.xpose.msra.mxu0 0
      %1308 = vmatprep.subr.bf16.mxu0 0
      %1309 = vmatpush1.bf16.xpose.msra.mxu0 0
      %1310 = vmatprep.subr.bf16.mxu0 0
      %1311 = vmatpush1.bf16.xpose.msra.mxu0 0
      %1312 = vmatprep.subr.bf16.mxu0 0
      %1313 = vmatpush1.bf16.xpose.msra.mxu0 0
      %1314 = vmatprep.subr.bf16.mxu0 0
      %1315 = vmatpush1.bf16.xpose.msra.mxu0 0
      %1316 = vmatprep.subr.bf16.mxu0 0
      %1317 = vmatpush1.bf16.xpose.msra.mxu0 0
      %1318 = vmatprep.subr.bf16.mxu0 0
      %1319 = vmatpush1.bf16.xpose.msra.mxu0 0
      %1320 = vmatprep.subr.bf16.mxu0 0
      %1321 = vmatpush1.bf16.xpose.msra.mxu0 0
      %1322 = vmatprep.mubr.bf16.mxu0 0
      %1323 = vmatmul.mubr.bf16.gmra.mrb[0].mxu0 %v1285
      %v1324 = vpop.f32.mrb[0].mxu0
      %v1325 = vadd.f32 0.0, %v1324
      %v1326 = vpop.f32.mrb[0].mxu0
      %v1327 = vpop.f32.mrb[0].mxu0
      %v1328 = vadd.f32 0.0, %v1327
      %v1329 = vpop.f32.mrb[0].mxu0
      %1330 = vdwg.mxu0
      %v1331 = vsel %vm966, %v1325, -inf
      %1332 = vmax.xlane.f32.xlu0 %v1331
      %v1333 = vpop.xlane.xlu0 %1332
      %v1334 = vsel %vm966, %v1328, -inf
      %1335 = vmax.xlane.f32.xlu0 %v1334
      %v1336 = vpop.xlane.xlu0 %1335
      %v1337 = vsub.f32 %v1325, %v1333
      %v1338 = vsub.f32 %v1328, %v1336
      %v1339 = vmul.f32 %v1337, 1.442695
      %v1340 = vpow.pop %v1339
      %v1341 = vmul.f32 %v1338, 1.442695
      %v1342 = vpow.pop %v1341
      %v1343 = vsel %vm966, %v1340, 0.0
      %1344 = vadd.xlane.f32.xlu0 %v1343
      %v1345 = vpop.xlane.xlu0 %1344
      %v1346 = vsel %vm966, %v1342, 0.0
      %1347 = vadd.xlane.f32.xlu0 %v1346
      %v1348 = vpop.xlane.xlu0 %1347
      %v1349 = vrcp.pop %v1345
      %v1350 = vrcp.pop %v1348
      %v1351 = vmul.f32 %v1340, %v1349
      %v1352 = vmul.f32 %v1342, %v1350
      %v1353 = vpack.c.bf16 %v1352, %v1351
      %1354 = vrot.lane.b32.xlu0 %v915, 40
      %v1355 = vpop.permute.xlu0 %1354
      %v1358 = vsel %vm966, %v1353, 0
      %1360 = vmatprep.subr.bf16.mxu0 0
      %1361 = vmatpush1.bf16.msra.mxu0 %v1355
      %1362 = vmatprep.subr.bf16.mxu0 0
      %1363 = vmatpush1.bf16.msra.mxu0 0
      %1364 = vmatprep.subr.bf16.mxu0 0
      %1365 = vmatpush1.bf16.msra.mxu0 0
      %1366 = vmatprep.subr.bf16.mxu0 0
      %1367 = vmatpush1.bf16.msra.mxu0 0
      %1368 = vmatprep.subr.bf16.mxu0 0
      %1369 = vmatpush1.bf16.msra.mxu0 0
      %1370 = vmatprep.subr.bf16.mxu0 0
      %1371 = vmatpush1.bf16.msra.mxu0 0
      %1372 = vmatprep.subr.bf16.mxu0 0
      %1373 = vmatpush1.bf16.msra.mxu0 0
      %1374 = vmatprep.subr.bf16.mxu0 0
      %1375 = vmatpush1.bf16.msra.mxu0 0
      %1376 = vmatprep.subr.bf16.mxu0 0
      %1377 = vmatpush1.bf16.msra.mxu0 0
      %1378 = vmatprep.subr.bf16.mxu0 0
      %1379 = vmatpush1.bf16.msra.mxu0 0
      %1380 = vmatprep.subr.bf16.mxu0 0
      %1381 = vmatpush1.bf16.msra.mxu0 0
      %1382 = vmatprep.subr.bf16.mxu0 0
      %1383 = vmatpush1.bf16.msra.mxu0 0
      %1384 = vmatprep.subr.bf16.mxu0 0
      %1385 = vmatpush1.bf16.msra.mxu0 0
      %1386 = vmatprep.subr.bf16.mxu0 0
      %1387 = vmatpush1.bf16.msra.mxu0 0
      %1388 = vmatprep.subr.bf16.mxu0 0
      %1389 = vmatpush1.bf16.msra.mxu0 0
      %1390 = vmatprep.subr.bf16.mxu0 0
      %1391 = vmatpush1.bf16.msra.mxu0 0
      %1392 = vmatprep.mubr.bf16.mxu0 0
      %1393 = vmatmul.mubr.bf16.gmra.mrb[0].mxu0 %v1358
      %v1394 = vpop.f32.mrb[0].mxu0
      %v1395 = vadd.f32 0.0, %v1394
      %v1396 = vpop.f32.mrb[0].mxu0
      %v1397 = vpop.f32.mrb[0].mxu0
      %v1398 = vadd.f32 0.0, %v1397
      %v1399 = vpop.f32.mrb[0].mxu0
      %1400 = vdwg.mxu0
      %1403 = vrot.lane.b32.xlu0 %v1153, 8
      %v1404 = vpop.permute.xlu0 %1403
      %1405 = vrot.lane.b32.xlu0 %v1156, 8
      %v1406 = vpop.permute.xlu0 %1405
      %1411 = vrot.lane.b32.xlu0 %v1274, 16
      %v1412 = vpop.permute.xlu0 %1411
      %1413 = vrot.lane.b32.xlu0 %v1277, 16
      %v1414 = vpop.permute.xlu0 %1413
      %1419 = vrot.lane.b32.xlu0 %v1395, 24
      %v1420 = vpop.permute.xlu0 %1419
      %1421 = vrot.lane.b32.xlu0 %v1398, 24
      %v1422 = vpop.permute.xlu0 %1421
      %v1425 = vsel %vm697, %v1031, %v1404
      %v1426 = vsel %vm697, %v1034, %v1406
      %v1427 = vsel %vm966, %v1425, %v1412
      %v1428 = vsel %vm966, %v1426, %v1414
      %vm1429 = vcmask 195584
      %v1430 = vsel %vm1429, %v1427, %v1420
      %v1431 = vsel %vm1429, %v1428, %v1422
      %v1432 = vld [vmem:[%s10] sm:$0xff]
      %v1433 = vld [vmem:[%s10 + $0x8] sm:$0xff]
      %v1434 = vld [vmem:[%s10 + $0x10] sm:$0xff]
      %v1435 = vld [vmem:[%s10 + $0x18] sm:$0xff]
      %v1436 = vld [vmem:[%s11] sm:$0x1]
      %v1437 = vpack.c.bf16 %v1431, %v1430
      %v1438 = vpack.c.bf16 %v1433, %v1432
      %v1439 = vpack.c.bf16 %v1435, %v1434
      %v1441 = vlaneseq
      %v1442 = vshrl.u32 %v1441, 7
      %v1443 = vsub.s32 0, %v1442
      %v1444 = vrot.slane %v1436, %v1443
      %v1447 = vsel %vm760, %v1437, 0
      %1449 = vmatprep.subr.bf16.mxu0 0
      %1450 = vmatpush1.bf16.msra.mxu0 %v1438
      %1451 = vmatprep.subr.bf16.mxu0 0
      %1452 = vmatpush1.bf16.msra.mxu0 %v1439
      %1453 = vmatprep.subr.bf16.mxu0 0
      %1454 = vmatpush1.bf16.msra.mxu0 0
      %1455 = vmatprep.subr.bf16.mxu0 0
      %1456 = vmatpush1.bf16.msra.mxu0 0
      %1457 = vmatprep.subr.bf16.mxu0 0
      %1458 = vmatpush1.bf16.msra.mxu0 0
      %1459 = vmatprep.subr.bf16.mxu0 0
      %1460 = vmatpush1.bf16.msra.mxu0 0
      %1461 = vmatprep.subr.bf16.mxu0 0
      %1462 = vmatpush1.bf16.msra.mxu0 0
      %1463 = vmatprep.subr.bf16.mxu0 0
      %1464 = vmatpush1.bf16.msra.mxu0 0
      %1465 = vmatprep.subr.bf16.mxu0 0
      %1466 = vmatpush1.bf16.msra.mxu0 0
      %1467 = vmatprep.subr.bf16.mxu0 0
      %1468 = vmatpush1.bf16.msra.mxu0 0
      %1469 = vmatprep.subr.bf16.mxu0 0
      %1470 = vmatpush1.bf16.msra.mxu0 0
      %1471 = vmatprep.subr.bf16.mxu0 0
      %1472 = vmatpush1.bf16.msra.mxu0 0
      %1473 = vmatprep.subr.bf16.mxu0 0
      %1474 = vmatpush1.bf16.msra.mxu0 0
      %1475 = vmatprep.subr.bf16.mxu0 0
      %1476 = vmatpush1.bf16.msra.mxu0 0
      %1477 = vmatprep.subr.bf16.mxu0 0
      %1478 = vmatpush1.bf16.msra.mxu0 0
      %1479 = vmatprep.subr.bf16.mxu0 0
      %1480 = vmatpush1.bf16.msra.mxu0 0
      %1481 = vmatprep.mubr.bf16.mxu0 0
      %1482 = vmatmul.mubr.bf16.gmra.mrb[0].mxu0 %v1447
      %v1483 = vpop.f32.mrb[0].mxu0
      %v1484 = vadd.f32 %v1444, %v1483
      %v1485 = vpop.f32.mrb[0].mxu0
      %v1486 = vpop.f32.mrb[0].mxu0
      %v1487 = vadd.f32 %v1444, %v1486
      %v1488 = vpop.f32.mrb[0].mxu0
      %1489 = vdwg.mxu0
      %v1490 = vadd.f32 %v807, %v1484
      %v1491 = vadd.f32 %v808, %v1487
      %v1492 = vld [vmem:[%s12] sm:$0x1]
      %v1493 = vld [vmem:[%s13] sm:$0x1]
      %v1494 = vsel %vm760, %v1490, 0.0
      %1495 = vadd.xlane.f32.xlu0 %v1494
      %v1496 = vpop.xlane.xlu0 %1495
      %v1497 = vsel %vm760, %v1491, 0.0
      %1498 = vadd.xlane.f32.xlu0 %v1497
      %v1499 = vpop.xlane.xlu0 %1498
      %v1500 = vmul.f32 %v1496, %v817
      %v1501 = vmul.f32 %v1499, %v817
      %v1502 = vsub.f32 %v1490, %v1500
      %v1503 = vsub.f32 %v1491, %v1501
      %v1504 = vmul.f32 %v1502, %v1502
      %v1505 = vmul.f32 %v1503, %v1503
      %v1506 = vsel %vm760, %v1504, 0.0
      %1507 = vadd.xlane.f32.xlu0 %v1506
      %v1508 = vpop.xlane.xlu0 %1507
      %v1509 = vsel %vm760, %v1505, 0.0
      %1510 = vadd.xlane.f32.xlu0 %v1509
      %v1511 = vpop.xlane.xlu0 %1510
      %v1512 = vmul.f32 %v1508, %v817
      %v1513 = vmul.f32 %v1511, %v817
      %v1514 = vadd.f32 %v1512, 1e-05
      %v1515 = vadd.f32 %v1513, 1e-05
      %v1516 = vrsqrt.pop %v1514
      %v1517 = vrsqrt.pop %v1515
      %v1518 = vmul.f32 %v1502, %v1516
      %v1519 = vmul.f32 %v1503, %v1517
      %v1521 = vlaneseq
      %v1522 = vshrl.u32 %v1521, 7
      %v1523 = vsub.s32 0, %v1522
      %v1524 = vrot.slane %v1492, %v1523
      %v1526 = vmul.f32 %v1518, %v1524
      %v1527 = vmul.f32 %v1519, %v1524
      %v1529 = vlaneseq
      %v1530 = vshrl.u32 %v1529, 7
      %v1531 = vsub.s32 0, %v1530
      %v1532 = vrot.slane %v1493, %v1531
      %v1534 = vadd.f32 %v1526, %v1532
      %v1535 = vadd.f32 %v1527, %v1532
      %v1536 = vld [vmem:[%s14] sm:$0xff]
      %v1537 = vld [vmem:[%s14 + $0x8] sm:$0xff]
      %v1538 = vld [vmem:[%s14 + $0x10] sm:$0xff]
      %v1539 = vld [vmem:[%s14 + $0x18] sm:$0xff]
      %v1540 = vld [vmem:[%s15] sm:$0x1]
      %v1541 = vpack.c.bf16 %v1535, %v1534
      %v1542 = vpack.c.bf16 %v1537, %v1536
      %v1543 = vpack.c.bf16 %v1539, %v1538
      %v1545 = vlaneseq
      %v1546 = vshrl.u32 %v1545, 7
      %v1547 = vsub.s32 0, %v1546
      %v1548 = vrot.slane %v1540, %v1547
      %v1551 = vsel %vm760, %v1541, 0
      %1553 = vmatprep.subr.bf16.mxu0 0
      %1554 = vmatpush1.bf16.msra.mxu0 %v1542
      %1555 = vmatprep.subr.bf16.mxu0 0
      %1556 = vmatpush1.bf16.msra.mxu0 %v1543
      %1557 = vmatprep.subr.bf16.mxu0 0
      %1558 = vmatpush1.bf16.msra.mxu0 0
      %1559 = vmatprep.subr.bf16.mxu0 0
      %1560 = vmatpush1.bf16.msra.mxu0 0
      %1561 = vmatprep.subr.bf16.mxu0 0
      %1562 = vmatpush1.bf16.msra.mxu0 0
      %1563 = vmatprep.subr.bf16.mxu0 0
      %1564 = vmatpush1.bf16.msra.mxu0 0
      %1565 = vmatprep.subr.bf16.mxu0 0
      %1566 = vmatpush1.bf16.msra.mxu0 0
      %1567 = vmatprep.subr.bf16.mxu0 0
      %1568 = vmatpush1.bf16.msra.mxu0 0
      %1569 = vmatprep.subr.bf16.mxu0 0
      %1570 = vmatpush1.bf16.msra.mxu0 0
      %1571 = vmatprep.subr.bf16.mxu0 0
      %1572 = vmatpush1.bf16.msra.mxu0 0
      %1573 = vmatprep.subr.bf16.mxu0 0
      %1574 = vmatpush1.bf16.msra.mxu0 0
      %1575 = vmatprep.subr.bf16.mxu0 0
      %1576 = vmatpush1.bf16.msra.mxu0 0
      %1577 = vmatprep.subr.bf16.mxu0 0
      %1578 = vmatpush1.bf16.msra.mxu0 0
      %1579 = vmatprep.subr.bf16.mxu0 0
      %1580 = vmatpush1.bf16.msra.mxu0 0
      %1581 = vmatprep.subr.bf16.mxu0 0
      %1582 = vmatpush1.bf16.msra.mxu0 0
      %1583 = vmatprep.subr.bf16.mxu0 0
      %1584 = vmatpush1.bf16.msra.mxu0 0
      %1585 = vmatprep.mubr.bf16.mxu0 0
      %1586 = vmatmul.mubr.bf16.gmra.mrb[0].mxu0 %v1551
      %v1587 = vpop.f32.mrb[0].mxu0
      %v1588 = vadd.f32 %v1548, %v1587
      %v1589 = vpop.f32.mrb[0].mxu0
      %v1590 = vpop.f32.mrb[0].mxu0
      %v1591 = vadd.f32 %v1548, %v1590
      %v1592 = vpop.f32.mrb[0].mxu0
      %1593 = vdwg.mxu0
      %v1594 = vmul.f32 %v1588, %v1588
      %v1595 = vmul.f32 %v1591, %v1591
      %v1596 = vmul.f32 %v1588, %v1594
      %v1597 = vmul.f32 %v1591, %v1595
      %v1598 = vmul.f32 %v1596, 0.044715
      %v1599 = vmul.f32 %v1597, 0.044715
      %v1600 = vadd.f32 %v1588, %v1598
      %v1601 = vadd.f32 %v1591, %v1599
      %v1602 = vmul.f32 %v1600, 0.7978846
      %v1603 = vmul.f32 %v1601, 0.7978846
      %v1604 = vtanh.pop %v1602
      %v1605 = vtanh.pop %v1603
      %v1606 = vadd.f32 %v1604, 1.0
      %v1607 = vadd.f32 %v1605, 1.0
      %v1608 = vmul.f32 %v1606, 0.5
      %v1609 = vmul.f32 %v1607, 0.5
      %v1610 = vmul.f32 %v1588, %v1608
      %v1611 = vmul.f32 %v1591, %v1609
      %v1612 = vld [vmem:[%s16] sm:$0xff]
      %v1613 = vld [vmem:[%s16 + $0x8] sm:$0xff]
      %v1614 = vld [vmem:[%s16 + $0x10] sm:$0xff]
      %v1615 = vld [vmem:[%s16 + $0x18] sm:$0xff]
      %v1616 = vld [vmem:[%s16 + $0x20] sm:$0xff]
      %v1617 = vld [vmem:[%s16 + $0x28] sm:$0xff]
      %v1618 = vld [vmem:[%s16 + $0x30] sm:$0xff]
      %v1619 = vld [vmem:[%s16 + $0x38] sm:$0xff]
      %v1620 = vld [vmem:[%s16 + $0x40] sm:$0xff]
      %v1621 = vld [vmem:[%s16 + $0x48] sm:$0xff]
      %v1622 = vld [vmem:[%s16 + $0x50] sm:$0xff]
      %v1623 = vld [vmem:[%s16 + $0x58] sm:$0xff]
      %v1624 = vld [vmem:[%s16 + $0x60] sm:$0xff]
      %v1625 = vld [vmem:[%s16 + $0x68] sm:$0xff]
      %v1626 = vld [vmem:[%s16 + $0x70] sm:$0xff]
      %v1627 = vld [vmem:[%s16 + $0x78] sm:$0xff]
      %v1628 = vld [vmem:[%s17] sm:$0x1]
      %v1629 = vpack.c.bf16 %v1611, %v1610
      %v1630 = vpack.c.bf16 %v1613, %v1612
      %v1631 = vpack.c.bf16 %v1615, %v1614
      %v1632 = vpack.c.bf16 %v1617, %v1616
      %v1633 = vpack.c.bf16 %v1619, %v1618
      %v1634 = vpack.c.bf16 %v1621, %v1620
      %v1635 = vpack.c.bf16 %v1623, %v1622
      %v1636 = vpack.c.bf16 %v1625, %v1624
      %v1637 = vpack.c.bf16 %v1627, %v1626
      %v1639 = vlaneseq
      %v1640 = vshrl.u32 %v1639, 7
      %v1641 = vsub.s32 0, %v1640
      %v1642 = vrot.slane %v1628, %v1641
      %1644 = vmatprep.subr.bf16.mxu0 0
      %1645 = vmatpush1.bf16.msra.mxu0 %v1630
      %1646 = vmatprep.subr.bf16.mxu0 0
      %1647 = vmatpush1.bf16.msra.mxu0 %v1631
      %1648 = vmatprep.subr.bf16.mxu0 0
      %1649 = vmatpush1.bf16.msra.mxu0 %v1632
      %1650 = vmatprep.subr.bf16.mxu0 0
      %1651 = vmatpush1.bf16.msra.mxu0 %v1633
      %1652 = vmatprep.subr.bf16.mxu0 0
      %1653 = vmatpush1.bf16.msra.mxu0 %v1634
      %1654 = vmatprep.subr.bf16.mxu0 0
      %1655 = vmatpush1.bf16.msra.mxu0 %v1635
      %1656 = vmatprep.subr.bf16.mxu0 0
      %1657 = vmatpush1.bf16.msra.mxu0 %v1636
      %1658 = vmatprep.subr.bf16.mxu0 0
      %1659 = vmatpush1.bf16.msra.mxu0 %v1637
      %1660 = vmatprep.subr.bf16.mxu0 0
      %1661 = vmatpush1.bf16.msra.mxu0 0
      %1662 = vmatprep.subr.bf16.mxu0 0
      %1663 = vmatpush1.bf16.msra.mxu0 0
      %1664 = vmatprep.subr.bf16.mxu0 0
      %1665 = vmatpush1.bf16.msra.mxu0 0
      %1666 = vmatprep.subr.bf16.mxu0 0
      %1667 = vmatpush1.bf16.msra.mxu0 0
      %1668 = vmatprep.subr.bf16.mxu0 0
      %1669 = vmatpush1.bf16.msra.mxu0 0
      %1670 = vmatprep.subr.bf16.mxu0 0
      %1671 = vmatpush1.bf16.msra.mxu0 0
      %1672 = vmatprep.subr.bf16.mxu0 0
      %1673 = vmatpush1.bf16.msra.mxu0 0
      %1674 = vmatprep.subr.bf16.mxu0 0
      %1675 = vmatpush1.bf16.msra.mxu0 0
      %1676 = vmatprep.mubr.bf16.mxu0 0
      %1677 = vmatmul.mubr.bf16.gmra.mrb[0].mxu0 %v1629
      %v1678 = vpop.f32.mrb[0].mxu0
      %v1679 = vadd.f32 %v1642, %v1678
      %v1680 = vpop.f32.mrb[0].mxu0
      %v1681 = vpop.f32.mrb[0].mxu0
      %v1682 = vadd.f32 %v1642, %v1681
      %v1683 = vpop.f32.mrb[0].mxu0
      %1684 = vdwg.mxu0
      %v1685 = vadd.f32 %v1490, %v1679
      %v1686 = vadd.f32 %v1491, %v1682
      %s1687 = scalar_lea.vmem %s6, 1
      %v1688 = vld [vmem:[%s1687] sm:$0x1]
      %s1689 = scalar_lea.vmem %s7, 1
      %v1690 = vld [vmem:[%s1689] sm:$0x1]
      %v1691 = vsel %vm760, %v1685, 0.0
      %1692 = vadd.xlane.f32.xlu0 %v1691
      %v1693 = vpop.xlane.xlu0 %1692
      %v1694 = vsel %vm760, %v1686, 0.0
      %1695 = vadd.xlane.f32.xlu0 %v1694
      %v1696 = vpop.xlane.xlu0 %1695
      %v1697 = vmul.f32 %v1693, %v817
      %v1698 = vmul.f32 %v1696, %v817
      %v1699 = vsub.f32 %v1685, %v1697
      %v1700 = vsub.f32 %v1686, %v1698
      %v1701 = vmul.f32 %v1699, %v1699
      %v1702 = vmul.f32 %v1700, %v1700
      %v1703 = vsel %vm760, %v1701, 0.0
      %1704 = vadd.xlane.f32.xlu0 %v1703
      %v1705 = vpop.xlane.xlu0 %1704
      %v1706 = vsel %vm760, %v1702, 0.0
      %1707 = vadd.xlane.f32.xlu0 %v1706
      %v1708 = vpop.xlane.xlu0 %1707
      %v1709 = vmul.f32 %v1705, %v817
      %v1710 = vmul.f32 %v1708, %v817
      %v1711 = vadd.f32 %v1709, 1e-05
      %v1712 = vadd.f32 %v1710, 1e-05
      %v1713 = vrsqrt.pop %v1711
      %v1714 = vrsqrt.pop %v1712
      %v1715 = vmul.f32 %v1699, %v1713
      %v1716 = vmul.f32 %v1700, %v1714
      %v1718 = vlaneseq
      %v1719 = vshrl.u32 %v1718, 7
      %v1720 = vsub.s32 0, %v1719
      %v1721 = vrot.slane %v1688, %v1720
      %v1723 = vmul.f32 %v1715, %v1721
      %v1724 = vmul.f32 %v1716, %v1721
      %v1726 = vlaneseq
      %v1727 = vshrl.u32 %v1726, 7
      %v1728 = vsub.s32 0, %v1727
      %v1729 = vrot.slane %v1690, %v1728
      %v1731 = vadd.f32 %v1723, %v1729
      %v1732 = vadd.f32 %v1724, %v1729
      %s1733 = scalar_lea.vmem %s8, 32
      %v1734 = vld [vmem:[%s1733] sm:$0xff]
      %v1735 = vld [vmem:[%s1733 + $0x8] sm:$0xff]
      %v1736 = vld [vmem:[%s1733 + $0x10] sm:$0xff]
      %v1737 = vld [vmem:[%s1733 + $0x18] sm:$0xff]
      %s1738 = scalar_lea.vmem %s9, 1
      %v1739 = vld [vmem:[%s1738] sm:$0x1]
      %v1740 = vpack.c.bf16 %v1732, %v1731
      %v1741 = vpack.c.bf16 %v1735, %v1734
      %v1742 = vpack.c.bf16 %v1737, %v1736
      %v1744 = vlaneseq
      %v1745 = vshrl.u32 %v1744, 7
      %v1746 = vsub.s32 0, %v1745
      %v1747 = vrot.slane %v1739, %v1746
      %v1750 = vsel %vm760, %v1740, 0
      %1752 = vmatprep.subr.bf16.mxu0 0
      %1753 = vmatpush1.bf16.msra.mxu0 %v1741
      %1754 = vmatprep.subr.bf16.mxu0 0
      %1755 = vmatpush1.bf16.msra.mxu0 %v1742
      %1756 = vmatprep.subr.bf16.mxu0 0
      %1757 = vmatpush1.bf16.msra.mxu0 0
      %1758 = vmatprep.subr.bf16.mxu0 0
      %1759 = vmatpush1.bf16.msra.mxu0 0
      %1760 = vmatprep.subr.bf16.mxu0 0
      %1761 = vmatpush1.bf16.msra.mxu0 0
      %1762 = vmatprep.subr.bf16.mxu0 0
      %1763 = vmatpush1.bf16.msra.mxu0 0
      %1764 = vmatprep.subr.bf16.mxu0 0
      %1765 = vmatpush1.bf16.msra.mxu0 0
      %1766 = vmatprep.subr.bf16.mxu0 0
      %1767 = vmatpush1.bf16.msra.mxu0 0
      %1768 = vmatprep.subr.bf16.mxu0 0
      %1769 = vmatpush1.bf16.msra.mxu0 0
      %1770 = vmatprep.subr.bf16.mxu0 0
      %1771 = vmatpush1.bf16.msra.mxu0 0
      %1772 = vmatprep.subr.bf16.mxu0 0
      %1773 = vmatpush1.bf16.msra.mxu0 0
      %1774 = vmatprep.subr.bf16.mxu0 0
      %1775 = vmatpush1.bf16.msra.mxu0 0
      %1776 = vmatprep.subr.bf16.mxu0 0
      %1777 = vmatpush1.bf16.msra.mxu0 0
      %1778 = vmatprep.subr.bf16.mxu0 0
      %1779 = vmatpush1.bf16.msra.mxu0 0
      %1780 = vmatprep.subr.bf16.mxu0 0
      %1781 = vmatpush1.bf16.msra.mxu0 0
      %1782 = vmatprep.subr.bf16.mxu0 0
      %1783 = vmatpush1.bf16.msra.mxu0 0
      %1784 = vmatprep.mubr.bf16.mxu0 0
      %1785 = vmatmul.mubr.bf16.gmra.mrb[0].mxu0 %v1750
      %v1786 = vpop.f32.mrb[0].mxu0
      %v1787 = vadd.f32 %v1747, %v1786
      %v1788 = vpop.f32.mrb[0].mxu0
      %v1789 = vpop.f32.mrb[0].mxu0
      %v1790 = vadd.f32 %v1747, %v1789
      %v1791 = vpop.f32.mrb[0].mxu0
      %1792 = vdwg.mxu0
      %v1793 = vmul.f32 %v1787, 0.35355338
      %v1794 = vmul.f32 %v1790, 0.35355338
      %v1795 = vpack.c.bf16 %v1794, %v1793
      %v1796 = vpack.c.bf16 %v1790, %v1787
      %1798 = vrot.lane.b32.xlu0 %v1796, 96
      %v1799 = vpop.permute.xlu0 %1798
      %v1801 = vsel %vm697, %v1795, 0
      %v1804 = vsel %vm697, %v1799, 0
      %1806 = vmatprep.subr.bf16.mxu0 0
      %1807 = vmatpush1.bf16.xpose.msra.mxu0 %v1804
      %1808 = vmatprep.subr.bf16.mxu0 0
      %1809 = vmatpush1.bf16.xpose.msra.mxu0 0
      %1810 = vmatprep.subr.bf16.mxu0 0
      %1811 = vmatpush1.bf16.xpose.msra.mxu0 0
      %1812 = vmatprep.subr.bf16.mxu0 0
      %1813 = vmatpush1.bf16.xpose.msra.mxu0 0
      %1814 = vmatprep.subr.bf16.mxu0 0
      %1815 = vmatpush1.bf16.xpose.msra.mxu0 0
      %1816 = vmatprep.subr.bf16.mxu0 0
      %1817 = vmatpush1.bf16.xpose.msra.mxu0 0
      %1818 = vmatprep.subr.bf16.mxu0 0
      %1819 = vmatpush1.bf16.xpose.msra.mxu0 0
      %1820 = vmatprep.subr.bf16.mxu0 0
      %1821 = vmatpush1.bf16.xpose.msra.mxu0 0
      %1822 = vmatprep.subr.bf16.mxu0 0
      %1823 = vmatpush1.bf16.xpose.msra.mxu0 0
      %1824 = vmatprep.subr.bf16.mxu0 0
      %1825 = vmatpush1.bf16.xpose.msra.mxu0 0
      %1826 = vmatprep.subr.bf16.mxu0 0
      %1827 = vmatpush1.bf16.xpose.msra.mxu0 0
      %1828 = vmatprep.subr.bf16.mxu0 0
      %1829 = vmatpush1.bf16.xpose.msra.mxu0 0
      %1830 = vmatprep.subr.bf16.mxu0 0
      %1831 = vmatpush1.bf16.xpose.msra.mxu0 0
      %1832 = vmatprep.subr.bf16.mxu0 0
      %1833 = vmatpush1.bf16.xpose.msra.mxu0 0
      %1834 = vmatprep.subr.bf16.mxu0 0
      %1835 = vmatpush1.bf16.xpose.msra.mxu0 0
      %1836 = vmatprep.subr.bf16.mxu0 0
      %1837 = vmatpush1.bf16.xpose.msra.mxu0 0
      %1838 = vmatprep.mubr.bf16.mxu0 0
      %1839 = vmatmul.mubr.bf16.gmra.mrb[0].mxu0 %v1801
      %v1840 = vpop.f32.mrb[0].mxu0
      %v1841 = vadd.f32 0.0, %v1840
      %v1842 = vpop.f32.mrb[0].mxu0
      %v1843 = vpop.f32.mrb[0].mxu0
      %v1844 = vadd.f32 0.0, %v1843
      %v1845 = vpop.f32.mrb[0].mxu0
      %1846 = vdwg.mxu0
      %v1847 = vsel %vm966, %v1841, -inf
      %1848 = vmax.xlane.f32.xlu0 %v1847
      %v1849 = vpop.xlane.xlu0 %1848
      %v1850 = vsel %vm966, %v1844, -inf
      %1851 = vmax.xlane.f32.xlu0 %v1850
      %v1852 = vpop.xlane.xlu0 %1851
      %v1853 = vsub.f32 %v1841, %v1849
      %v1854 = vsub.f32 %v1844, %v1852
      %v1855 = vmul.f32 %v1853, 1.442695
      %v1856 = vpow.pop %v1855
      %v1857 = vmul.f32 %v1854, 1.442695
      %v1858 = vpow.pop %v1857
      %v1859 = vsel %vm966, %v1856, 0.0
      %1860 = vadd.xlane.f32.xlu0 %v1859
      %v1861 = vpop.xlane.xlu0 %1860
      %v1862 = vsel %vm966, %v1858, 0.0
      %1863 = vadd.xlane.f32.xlu0 %v1862
      %v1864 = vpop.xlane.xlu0 %1863
      %v1865 = vrcp.pop %v1861
      %v1866 = vrcp.pop %v1864
      %v1867 = vmul.f32 %v1856, %v1865
      %v1868 = vmul.f32 %v1858, %v1866
      %v1869 = vpack.c.bf16 %v1868, %v1867
      %1870 = vrot.lane.b32.xlu0 %v1796, 64
      %v1871 = vpop.permute.xlu0 %1870
      %v1874 = vsel %vm966, %v1869, 0
      %1876 = vmatprep.subr.bf16.mxu0 0
      %1877 = vmatpush1.bf16.msra.mxu0 %v1871
      %1878 = vmatprep.subr.bf16.mxu0 0
      %1879 = vmatpush1.bf16.msra.mxu0 0
      %1880 = vmatprep.subr.bf16.mxu0 0
      %1881 = vmatpush1.bf16.msra.mxu0 0
      %1882 = vmatprep.subr.bf16.mxu0 0
      %1883 = vmatpush1.bf16.msra.mxu0 0
      %1884 = vmatprep.subr.bf16.mxu0 0
      %1885 = vmatpush1.bf16.msra.mxu0 0
      %1886 = vmatprep.subr.bf16.mxu0 0
      %1887 = vmatpush1.bf16.msra.mxu0 0
      %1888 = vmatprep.subr.bf16.mxu0 0
      %1889 = vmatpush1.bf16.msra.mxu0 0
      %1890 = vmatprep.subr.bf16.mxu0 0
      %1891 = vmatpush1.bf16.msra.mxu0 0
      %1892 = vmatprep.subr.bf16.mxu0 0
      %1893 = vmatpush1.bf16.msra.mxu0 0
      %1894 = vmatprep.subr.bf16.mxu0 0
      %1895 = vmatpush1.bf16.msra.mxu0 0
      %1896 = vmatprep.subr.bf16.mxu0 0
      %1897 = vmatpush1.bf16.msra.mxu0 0
      %1898 = vmatprep.subr.bf16.mxu0 0
      %1899 = vmatpush1.bf16.msra.mxu0 0
      %1900 = vmatprep.subr.bf16.mxu0 0
      %1901 = vmatpush1.bf16.msra.mxu0 0
      %1902 = vmatprep.subr.bf16.mxu0 0
      %1903 = vmatpush1.bf16.msra.mxu0 0
      %1904 = vmatprep.subr.bf16.mxu0 0
      %1905 = vmatpush1.bf16.msra.mxu0 0
      %1906 = vmatprep.subr.bf16.mxu0 0
      %1907 = vmatpush1.bf16.msra.mxu0 0
      %1908 = vmatprep.mubr.bf16.mxu0 0
      %1909 = vmatmul.mubr.bf16.gmra.mrb[0].mxu0 %v1874
      %v1910 = vpop.f32.mrb[0].mxu0
      %v1911 = vadd.f32 0.0, %v1910
      %v1912 = vpop.f32.mrb[0].mxu0
      %v1913 = vpop.f32.mrb[0].mxu0
      %v1914 = vadd.f32 0.0, %v1913
      %v1915 = vpop.f32.mrb[0].mxu0
      %1916 = vdwg.mxu0
      %1918 = vrot.lane.b32.xlu0 %v1795, 120
      %v1919 = vpop.permute.xlu0 %1918
      %1920 = vrot.lane.b32.xlu0 %v1796, 88
      %v1921 = vpop.permute.xlu0 %1920
      %v1923 = vsel %vm697, %v1919, 0
      %v1926 = vsel %vm697, %v1921, 0
      %1928 = vmatprep.subr.bf16.mxu0 0
      %1929 = vmatpush1.bf16.xpose.msra.mxu0 %v1926
      %1930 = vmatprep.subr.bf16.mxu0 0
      %1931 = vmatpush1.bf16.xpose.msra.mxu0 0
      %1932 = vmatprep.subr.bf16.mxu0 0
      %1933 = vmatpush1.bf16.xpose.msra.mxu0 0
      %1934 = vmatprep.subr.bf16.mxu0 0
      %1935 = vmatpush1.bf16.xpose.msra.mxu0 0
      %1936 = vmatprep.subr.bf16.mxu0 0
      %1937 = vmatpush1.bf16.xpose.msra.mxu0 0
      %1938 = vmatprep.subr.bf16.mxu0 0
      %1939 = vmatpush1.bf16.xpose.msra.mxu0 0
      %1940 = vmatprep.subr.bf16.mxu0 0
      %1941 = vmatpush1.bf16.xpose.msra.mxu0 0
      %1942 = vmatprep.subr.bf16.mxu0 0
      %1943 = vmatpush1.bf16.xpose.msra.mxu0 0
      %1944 = vmatprep.subr.bf16.mxu0 0
      %1945 = vmatpush1.bf16.xpose.msra.mxu0 0
      %1946 = vmatprep.subr.bf16.mxu0 0
      %1947 = vmatpush1.bf16.xpose.msra.mxu0 0
      %1948 = vmatprep.subr.bf16.mxu0 0
      %1949 = vmatpush1.bf16.xpose.msra.mxu0 0
      %1950 = vmatprep.subr.bf16.mxu0 0
      %1951 = vmatpush1.bf16.xpose.msra.mxu0 0
      %1952 = vmatprep.subr.bf16.mxu0 0
      %1953 = vmatpush1.bf16.xpose.msra.mxu0 0
      %1954 = vmatprep.subr.bf16.mxu0 0
      %1955 = vmatpush1.bf16.xpose.msra.mxu0 0
      %1956 = vmatprep.subr.bf16.mxu0 0
      %1957 = vmatpush1.bf16.xpose.msra.mxu0 0
      %1958 = vmatprep.subr.bf16.mxu0 0
      %1959 = vmatpush1.bf16.xpose.msra.mxu0 0
      %1960 = vmatprep.mubr.bf16.mxu0 0
      %1961 = vmatmul.mubr.bf16.gmra.mrb[0].mxu0 %v1923
      %v1962 = vpop.f32.mrb[0].mxu0
      %v1963 = vadd.f32 0.0, %v1962
      %v1964 = vpop.f32.mrb[0].mxu0
      %v1965 = vpop.f32.mrb[0].mxu0
      %v1966 = vadd.f32 0.0, %v1965
      %v1967 = vpop.f32.mrb[0].mxu0
      %1968 = vdwg.mxu0
      %v1969 = vsel %vm966, %v1963, -inf
      %1970 = vmax.xlane.f32.xlu0 %v1969
      %v1971 = vpop.xlane.xlu0 %1970
      %v1972 = vsel %vm966, %v1966, -inf
      %1973 = vmax.xlane.f32.xlu0 %v1972
      %v1974 = vpop.xlane.xlu0 %1973
      %v1975 = vsub.f32 %v1963, %v1971
      %v1976 = vsub.f32 %v1966, %v1974
      %v1977 = vmul.f32 %v1975, 1.442695
      %v1978 = vpow.pop %v1977
      %v1979 = vmul.f32 %v1976, 1.442695
      %v1980 = vpow.pop %v1979
      %v1981 = vsel %vm966, %v1978, 0.0
      %1982 = vadd.xlane.f32.xlu0 %v1981
      %v1983 = vpop.xlane.xlu0 %1982
      %v1984 = vsel %vm966, %v1980, 0.0
      %1985 = vadd.xlane.f32.xlu0 %v1984
      %v1986 = vpop.xlane.xlu0 %1985
      %v1987 = vrcp.pop %v1983
      %v1988 = vrcp.pop %v1986
      %v1989 = vmul.f32 %v1978, %v1987
      %v1990 = vmul.f32 %v1980, %v1988
      %v1991 = vpack.c.bf16 %v1990, %v1989
      %1992 = vrot.lane.b32.xlu0 %v1796, 56
      %v1993 = vpop.permute.xlu0 %1992
      %v1996 = vsel %vm966, %v1991, 0
      %1998 = vmatprep.subr.bf16.mxu0 0
      %1999 = vmatpush1.bf16.msra.mxu0 %v1993
      %2000 = vmatprep.subr.bf16.mxu0 0
      %2001 = vmatpush1.bf16.msra.mxu0 0
      %2002 = vmatprep.subr.bf16.mxu0 0
      %2003 = vmatpush1.bf16.msra.mxu0 0
      %2004 = vmatprep.subr.bf16.mxu0 0
      %2005 = vmatpush1.bf16.msra.mxu0 0
      %2006 = vmatprep.subr.bf16.mxu0 0
      %2007 = vmatpush1.bf16.msra.mxu0 0
      %2008 = vmatprep.subr.bf16.mxu0 0
      %2009 = vmatpush1.bf16.msra.mxu0 0
      %2010 = vmatprep.subr.bf16.mxu0 0
      %2011 = vmatpush1.bf16.msra.mxu0 0
      %2012 = vmatprep.subr.bf16.mxu0 0
      %2013 = vmatpush1.bf16.msra.mxu0 0
      %2014 = vmatprep.subr.bf16.mxu0 0
      %2015 = vmatpush1.bf16.msra.mxu0 0
      %2016 = vmatprep.subr.bf16.mxu0 0
      %2017 = vmatpush1.bf16.msra.mxu0 0
      %2018 = vmatprep.subr.bf16.mxu0 0
      %2019 = vmatpush1.bf16.msra.mxu0 0
      %2020 = vmatprep.subr.bf16.mxu0 0
      %2021 = vmatpush1.bf16.msra.mxu0 0
      %2022 = vmatprep.subr.bf16.mxu0 0
      %2023 = vmatpush1.bf16.msra.mxu0 0
      %2024 = vmatprep.subr.bf16.mxu0 0
      %2025 = vmatpush1.bf16.msra.mxu0 0
      %2026 = vmatprep.subr.bf16.mxu0 0
      %2027 = vmatpush1.bf16.msra.mxu0 0
      %2028 = vmatprep.subr.bf16.mxu0 0
      %2029 = vmatpush1.bf16.msra.mxu0 0
      %2030 = vmatprep.mubr.bf16.mxu0 0
      %2031 = vmatmul.mubr.bf16.gmra.mrb[0].mxu0 %v1996
      %v2032 = vpop.f32.mrb[0].mxu0
      %v2033 = vadd.f32 0.0, %v2032
      %v2034 = vpop.f32.mrb[0].mxu0
      %v2035 = vpop.f32.mrb[0].mxu0
      %v2036 = vadd.f32 0.0, %v2035
      %v2037 = vpop.f32.mrb[0].mxu0
      %2038 = vdwg.mxu0
      %2039 = vrot.lane.b32.xlu0 %v1795, 112
      %v2040 = vpop.permute.xlu0 %2039
      %2041 = vrot.lane.b32.xlu0 %v1796, 80
      %v2042 = vpop.permute.xlu0 %2041
      %v2044 = vsel %vm697, %v2040, 0
      %v2047 = vsel %vm697, %v2042, 0
      %2049 = vmatprep.subr.bf16.mxu0 0
      %2050 = vmatpush1.bf16.xpose.msra.mxu0 %v2047
      %2051 = vmatprep.subr.bf16.mxu0 0
      %2052 = vmatpush1.bf16.xpose.msra.mxu0 0
      %2053 = vmatprep.subr.bf16.mxu0 0
      %2054 = vmatpush1.bf16.xpose.msra.mxu0 0
      %2055 = vmatprep.subr.bf16.mxu0 0
      %2056 = vmatpush1.bf16.xpose.msra.mxu0 0
      %2057 = vmatprep.subr.bf16.mxu0 0
      %2058 = vmatpush1.bf16.xpose.msra.mxu0 0
      %2059 = vmatprep.subr.bf16.mxu0 0
      %2060 = vmatpush1.bf16.xpose.msra.mxu0 0
      %2061 = vmatprep.subr.bf16.mxu0 0
      %2062 = vmatpush1.bf16.xpose.msra.mxu0 0
      %2063 = vmatprep.subr.bf16.mxu0 0
      %2064 = vmatpush1.bf16.xpose.msra.mxu0 0
      %2065 = vmatprep.subr.bf16.mxu0 0
      %2066 = vmatpush1.bf16.xpose.msra.mxu0 0
      %2067 = vmatprep.subr.bf16.mxu0 0
      %2068 = vmatpush1.bf16.xpose.msra.mxu0 0
      %2069 = vmatprep.subr.bf16.mxu0 0
      %2070 = vmatpush1.bf16.xpose.msra.mxu0 0
      %2071 = vmatprep.subr.bf16.mxu0 0
      %2072 = vmatpush1.bf16.xpose.msra.mxu0 0
      %2073 = vmatprep.subr.bf16.mxu0 0
      %2074 = vmatpush1.bf16.xpose.msra.mxu0 0
      %2075 = vmatprep.subr.bf16.mxu0 0
      %2076 = vmatpush1.bf16.xpose.msra.mxu0 0
      %2077 = vmatprep.subr.bf16.mxu0 0
      %2078 = vmatpush1.bf16.xpose.msra.mxu0 0
      %2079 = vmatprep.subr.bf16.mxu0 0
      %2080 = vmatpush1.bf16.xpose.msra.mxu0 0
      %2081 = vmatprep.mubr.bf16.mxu0 0
      %2082 = vmatmul.mubr.bf16.gmra.mrb[0].mxu0 %v2044
      %v2083 = vpop.f32.mrb[0].mxu0
      %v2084 = vadd.f32 0.0, %v2083
      %v2085 = vpop.f32.mrb[0].mxu0
      %v2086 = vpop.f32.mrb[0].mxu0
      %v2087 = vadd.f32 0.0, %v2086
      %v2088 = vpop.f32.mrb[0].mxu0
      %2089 = vdwg.mxu0
      %v2090 = vsel %vm966, %v2084, -inf
      %2091 = vmax.xlane.f32.xlu0 %v2090
      %v2092 = vpop.xlane.xlu0 %2091
      %v2093 = vsel %vm966, %v2087, -inf
      %2094 = vmax.xlane.f32.xlu0 %v2093
      %v2095 = vpop.xlane.xlu0 %2094
      %v2096 = vsub.f32 %v2084, %v2092
      %v2097 = vsub.f32 %v2087, %v2095
      %v2098 = vmul.f32 %v2096, 1.442695
      %v2099 = vpow.pop %v2098
      %v2100 = vmul.f32 %v2097, 1.442695
      %v2101 = vpow.pop %v2100
      %v2102 = vsel %vm966, %v2099, 0.0
      %2103 = vadd.xlane.f32.xlu0 %v2102
      %v2104 = vpop.xlane.xlu0 %2103
      %v2105 = vsel %vm966, %v2101, 0.0
      %2106 = vadd.xlane.f32.xlu0 %v2105
      %v2107 = vpop.xlane.xlu0 %2106
      %v2108 = vrcp.pop %v2104
      %v2109 = vrcp.pop %v2107
      %v2110 = vmul.f32 %v2099, %v2108
      %v2111 = vmul.f32 %v2101, %v2109
      %v2112 = vpack.c.bf16 %v2111, %v2110
      %2113 = vrot.lane.b32.xlu0 %v1796, 48
      %v2114 = vpop.permute.xlu0 %2113
      %v2117 = vsel %vm966, %v2112, 0
      %2119 = vmatprep.subr.bf16.mxu0 0
      %2120 = vmatpush1.bf16.msra.mxu0 %v2114
      %2121 = vmatprep.subr.bf16.mxu0 0
      %2122 = vmatpush1.bf16.msra.mxu0 0
      %2123 = vmatprep.subr.bf16.mxu0 0
      %2124 = vmatpush1.bf16.msra.mxu0 0
      %2125 = vmatprep.subr.bf16.mxu0 0
      %2126 = vmatpush1.bf16.msra.mxu0 0
      %2127 = vmatprep.subr.bf16.mxu0 0
      %2128 = vmatpush1.bf16.msra.mxu0 0
      %2129 = vmatprep.subr.bf16.mxu0 0
      %2130 = vmatpush1.bf16.msra.mxu0 0
      %2131 = vmatprep.subr.bf16.mxu0 0
      %2132 = vmatpush1.bf16.msra.mxu0 0
      %2133 = vmatprep.subr.bf16.mxu0 0
      %2134 = vmatpush1.bf16.msra.mxu0 0
      %2135 = vmatprep.subr.bf16.mxu0 0
      %2136 = vmatpush1.bf16.msra.mxu0 0
      %2137 = vmatprep.subr.bf16.mxu0 0
      %2138 = vmatpush1.bf16.msra.mxu0 0
      %2139 = vmatprep.subr.bf16.mxu0 0
      %2140 = vmatpush1.bf16.msra.mxu0 0
      %2141 = vmatprep.subr.bf16.mxu0 0
      %2142 = vmatpush1.bf16.msra.mxu0 0
      %2143 = vmatprep.subr.bf16.mxu0 0
      %2144 = vmatpush1.bf16.msra.mxu0 0
      %2145 = vmatprep.subr.bf16.mxu0 0
      %2146 = vmatpush1.bf16.msra.mxu0 0
      %2147 = vmatprep.subr.bf16.mxu0 0
      %2148 = vmatpush1.bf16.msra.mxu0 0
      %2149 = vmatprep.subr.bf16.mxu0 0
      %2150 = vmatpush1.bf16.msra.mxu0 0
      %2151 = vmatprep.mubr.bf16.mxu0 0
      %2152 = vmatmul.mubr.bf16.gmra.mrb[0].mxu0 %v2117
      %v2153 = vpop.f32.mrb[0].mxu0
      %v2154 = vadd.f32 0.0, %v2153
      %v2155 = vpop.f32.mrb[0].mxu0
      %v2156 = vpop.f32.mrb[0].mxu0
      %v2157 = vadd.f32 0.0, %v2156
      %v2158 = vpop.f32.mrb[0].mxu0
      %2159 = vdwg.mxu0
      %2160 = vrot.lane.b32.xlu0 %v1795, 104
      %v2161 = vpop.permute.xlu0 %2160
      %2162 = vrot.lane.b32.xlu0 %v1796, 72
      %v2163 = vpop.permute.xlu0 %2162
      %v2165 = vsel %vm697, %v2161, 0
      %v2168 = vsel %vm697, %v2163, 0
      %2170 = vmatprep.subr.bf16.mxu0 0
      %2171 = vmatpush1.bf16.xpose.msra.mxu0 %v2168
      %2172 = vmatprep.subr.bf16.mxu0 0
      %2173 = vmatpush1.bf16.xpose.msra.mxu0 0
      %2174 = vmatprep.subr.bf16.mxu0 0
      %2175 = vmatpush1.bf16.xpose.msra.mxu0 0
      %2176 = vmatprep.subr.bf16.mxu0 0
      %2177 = vmatpush1.bf16.xpose.msra.mxu0 0
      %2178 = vmatprep.subr.bf16.mxu0 0
      %2179 = vmatpush1.bf16.xpose.msra.mxu0 0
      %2180 = vmatprep.subr.bf16.mxu0 0
      %2181 = vmatpush1.bf16.xpose.msra.mxu0 0
      %2182 = vmatprep.subr.bf16.mxu0 0
      %2183 = vmatpush1.bf16.xpose.msra.mxu0 0
      %2184 = vmatprep.subr.bf16.mxu0 0
      %2185 = vmatpush1.bf16.xpose.msra.mxu0 0
      %2186 = vmatprep.subr.bf16.mxu0 0
      %2187 = vmatpush1.bf16.xpose.msra.mxu0 0
      %2188 = vmatprep.subr.bf16.mxu0 0
      %2189 = vmatpush1.bf16.xpose.msra.mxu0 0
      %2190 = vmatprep.subr.bf16.mxu0 0
      %2191 = vmatpush1.bf16.xpose.msra.mxu0 0
      %2192 = vmatprep.subr.bf16.mxu0 0
      %2193 = vmatpush1.bf16.xpose.msra.mxu0 0
      %2194 = vmatprep.subr.bf16.mxu0 0
      %2195 = vmatpush1.bf16.xpose.msra.mxu0 0
      %2196 = vmatprep.subr.bf16.mxu0 0
      %2197 = vmatpush1.bf16.xpose.msra.mxu0 0
      %2198 = vmatprep.subr.bf16.mxu0 0
      %2199 = vmatpush1.bf16.xpose.msra.mxu0 0
      %2200 = vmatprep.subr.bf16.mxu0 0
      %2201 = vmatpush1.bf16.xpose.msra.mxu0 0
      %2202 = vmatprep.mubr.bf16.mxu0 0
      %2203 = vmatmul.mubr.bf16.gmra.mrb[0].mxu0 %v2165
      %v2204 = vpop.f32.mrb[0].mxu0
      %v2205 = vadd.f32 0.0, %v2204
      %v2206 = vpop.f32.mrb[0].mxu0
      %v2207 = vpop.f32.mrb[0].mxu0
      %v2208 = vadd.f32 0.0, %v2207
      %v2209 = vpop.f32.mrb[0].mxu0
      %2210 = vdwg.mxu0
      %v2211 = vsel %vm966, %v2205, -inf
      %2212 = vmax.xlane.f32.xlu0 %v2211
      %v2213 = vpop.xlane.xlu0 %2212
      %v2214 = vsel %vm966, %v2208, -inf
      %2215 = vmax.xlane.f32.xlu0 %v2214
      %v2216 = vpop.xlane.xlu0 %2215
      %v2217 = vsub.f32 %v2205, %v2213
      %v2218 = vsub.f32 %v2208, %v2216
      %v2219 = vmul.f32 %v2217, 1.442695
      %v2220 = vpow.pop %v2219
      %v2221 = vmul.f32 %v2218, 1.442695
      %v2222 = vpow.pop %v2221
      %v2223 = vsel %vm966, %v2220, 0.0
      %2224 = vadd.xlane.f32.xlu0 %v2223
      %v2225 = vpop.xlane.xlu0 %2224
      %v2226 = vsel %vm966, %v2222, 0.0
      %2227 = vadd.xlane.f32.xlu0 %v2226
      %v2228 = vpop.xlane.xlu0 %2227
      %v2229 = vrcp.pop %v2225
      %v2230 = vrcp.pop %v2228
      %v2231 = vmul.f32 %v2220, %v2229
      %v2232 = vmul.f32 %v2222, %v2230
      %v2233 = vpack.c.bf16 %v2232, %v2231
      %2234 = vrot.lane.b32.xlu0 %v1796, 40
      %v2235 = vpop.permute.xlu0 %2234
      %v2238 = vsel %vm966, %v2233, 0
      %2240 = vmatprep.subr.bf16.mxu0 0
      %2241 = vmatpush1.bf16.msra.mxu0 %v2235
      %2242 = vmatprep.subr.bf16.mxu0 0
      %2243 = vmatpush1.bf16.msra.mxu0 0
      %2244 = vmatprep.subr.bf16.mxu0 0
      %2245 = vmatpush1.bf16.msra.mxu0 0
      %2246 = vmatprep.subr.bf16.mxu0 0
      %2247 = vmatpush1.bf16.msra.mxu0 0
      %2248 = vmatprep.subr.bf16.mxu0 0
      %2249 = vmatpush1.bf16.msra.mxu0 0
      %2250 = vmatprep.subr.bf16.mxu0 0
      %2251 = vmatpush1.bf16.msra.mxu0 0
      %2252 = vmatprep.subr.bf16.mxu0 0
      %2253 = vmatpush1.bf16.msra.mxu0 0
      %2254 = vmatprep.subr.bf16.mxu0 0
      %2255 = vmatpush1.bf16.msra.mxu0 0
      %2256 = vmatprep.subr.bf16.mxu0 0
      %2257 = vmatpush1.bf16.msra.mxu0 0
      %2258 = vmatprep.subr.bf16.mxu0 0
      %2259 = vmatpush1.bf16.msra.mxu0 0
      %2260 = vmatprep.subr.bf16.mxu0 0
      %2261 = vmatpush1.bf16.msra.mxu0 0
      %2262 = vmatprep.subr.bf16.mxu0 0
      %2263 = vmatpush1.bf16.msra.mxu0 0
      %2264 = vmatprep.subr.bf16.mxu0 0
      %2265 = vmatpush1.bf16.msra.mxu0 0
      %2266 = vmatprep.subr.bf16.mxu0 0
      %2267 = vmatpush1.bf16.msra.mxu0 0
      %2268 = vmatprep.subr.bf16.mxu0 0
      %2269 = vmatpush1.bf16.msra.mxu0 0
      %2270 = vmatprep.subr.bf16.mxu0 0
      %2271 = vmatpush1.bf16.msra.mxu0 0
      %2272 = vmatprep.mubr.bf16.mxu0 0
      %2273 = vmatmul.mubr.bf16.gmra.mrb[0].mxu0 %v2238
      %v2274 = vpop.f32.mrb[0].mxu0
      %v2275 = vadd.f32 0.0, %v2274
      %v2276 = vpop.f32.mrb[0].mxu0
      %v2277 = vpop.f32.mrb[0].mxu0
      %v2278 = vadd.f32 0.0, %v2277
      %v2279 = vpop.f32.mrb[0].mxu0
      %2280 = vdwg.mxu0
      %2283 = vrot.lane.b32.xlu0 %v2033, 8
      %v2284 = vpop.permute.xlu0 %2283
      %2285 = vrot.lane.b32.xlu0 %v2036, 8
      %v2286 = vpop.permute.xlu0 %2285
      %2291 = vrot.lane.b32.xlu0 %v2154, 16
      %v2292 = vpop.permute.xlu0 %2291
      %2293 = vrot.lane.b32.xlu0 %v2157, 16
      %v2294 = vpop.permute.xlu0 %2293
      %2299 = vrot.lane.b32.xlu0 %v2275, 24
      %v2300 = vpop.permute.xlu0 %2299
      %2301 = vrot.lane.b32.xlu0 %v2278, 24
      %v2302 = vpop.permute.xlu0 %2301
      %v2305 = vsel %vm697, %v1911, %v2284
      %v2306 = vsel %vm697, %v1914, %v2286
      %v2307 = vsel %vm966, %v2305, %v2292
      %v2308 = vsel %vm966, %v2306, %v2294
      %v2309 = vsel %vm1429, %v2307, %v2300
      %v2310 = vsel %vm1429, %v2308, %v2302
      %s2311 = scalar_lea.vmem %s10, 32
      %v2312 = vld [vmem:[%s2311] sm:$0xff]
      %v2313 = vld [vmem:[%s2311 + $0x8] sm:$0xff]
      %v2314 = vld [vmem:[%s2311 + $0x10] sm:$0xff]
      %v2315 = vld [vmem:[%s2311 + $0x18] sm:$0xff]
      %s2316 = scalar_lea.vmem %s11, 1
      %v2317 = vld [vmem:[%s2316] sm:$0x1]
      %v2318 = vpack.c.bf16 %v2310, %v2309
      %v2319 = vpack.c.bf16 %v2313, %v2312
      %v2320 = vpack.c.bf16 %v2315, %v2314
      %v2322 = vlaneseq
      %v2323 = vshrl.u32 %v2322, 7
      %v2324 = vsub.s32 0, %v2323
      %v2325 = vrot.slane %v2317, %v2324
      %v2328 = vsel %vm760, %v2318, 0
      %2330 = vmatprep.subr.bf16.mxu0 0
      %2331 = vmatpush1.bf16.msra.mxu0 %v2319
      %2332 = vmatprep.subr.bf16.mxu0 0
      %2333 = vmatpush1.bf16.msra.mxu0 %v2320
      %2334 = vmatprep.subr.bf16.mxu0 0
      %2335 = vmatpush1.bf16.msra.mxu0 0
      %2336 = vmatprep.subr.bf16.mxu0 0
      %2337 = vmatpush1.bf16.msra.mxu0 0
      %2338 = vmatprep.subr.bf16.mxu0 0
      %2339 = vmatpush1.bf16.msra.mxu0 0
      %2340 = vmatprep.subr.bf16.mxu0 0
      %2341 = vmatpush1.bf16.msra.mxu0 0
      %2342 = vmatprep.subr.bf16.mxu0 0
      %2343 = vmatpush1.bf16.msra.mxu0 0
      %2344 = vmatprep.subr.bf16.mxu0 0
      %2345 = vmatpush1.bf16.msra.mxu0 0
      %2346 = vmatprep.subr.bf16.mxu0 0
      %2347 = vmatpush1.bf16.msra.mxu0 0
      %2348 = vmatprep.subr.bf16.mxu0 0
      %2349 = vmatpush1.bf16.msra.mxu0 0
      %2350 = vmatprep.subr.bf16.mxu0 0
      %2351 = vmatpush1.bf16.msra.mxu0 0
      %2352 = vmatprep.subr.bf16.mxu0 0
      %2353 = vmatpush1.bf16.msra.mxu0 0
      %2354 = vmatprep.subr.bf16.mxu0 0
      %2355 = vmatpush1.bf16.msra.mxu0 0
      %2356 = vmatprep.subr.bf16.mxu0 0
      %2357 = vmatpush1.bf16.msra.mxu0 0
      %2358 = vmatprep.subr.bf16.mxu0 0
      %2359 = vmatpush1.bf16.msra.mxu0 0
      %2360 = vmatprep.subr.bf16.mxu0 0
      %2361 = vmatpush1.bf16.msra.mxu0 0
      %2362 = vmatprep.mubr.bf16.mxu0 0
      %2363 = vmatmul.mubr.bf16.gmra.mrb[0].mxu0 %v2328
      %v2364 = vpop.f32.mrb[0].mxu0
      %v2365 = vadd.f32 %v2325, %v2364
      %v2366 = vpop.f32.mrb[0].mxu0
      %v2367 = vpop.f32.mrb[0].mxu0
      %v2368 = vadd.f32 %v2325, %v2367
      %v2369 = vpop.f32.mrb[0].mxu0
      %2370 = vdwg.mxu0
      %v2371 = vadd.f32 %v1685, %v2365
      %v2372 = vadd.f32 %v1686, %v2368
      %s2373 = scalar_lea.vmem %s12, 1
      %v2374 = vld [vmem:[%s2373] sm:$0x1]
      %s2375 = scalar_lea.vmem %s13, 1
      %v2376 = vld [vmem:[%s2375] sm:$0x1]
      %v2377 = vsel %vm760, %v2371, 0.0
      %2378 = vadd.xlane.f32.xlu0 %v2377
      %v2379 = vpop.xlane.xlu0 %2378
      %v2380 = vsel %vm760, %v2372, 0.0
      %2381 = vadd.xlane.f32.xlu0 %v2380
      %v2382 = vpop.xlane.xlu0 %2381
      %v2383 = vmul.f32 %v2379, %v817
      %v2384 = vmul.f32 %v2382, %v817
      %v2385 = vsub.f32 %v2371, %v2383
      %v2386 = vsub.f32 %v2372, %v2384
      %v2387 = vmul.f32 %v2385, %v2385
      %v2388 = vmul.f32 %v2386, %v2386
      %v2389 = vsel %vm760, %v2387, 0.0
      %2390 = vadd.xlane.f32.xlu0 %v2389
      %v2391 = vpop.xlane.xlu0 %2390
      %v2392 = vsel %vm760, %v2388, 0.0
      %2393 = vadd.xlane.f32.xlu0 %v2392
      %v2394 = vpop.xlane.xlu0 %2393
      %v2395 = vmul.f32 %v2391, %v817
      %v2396 = vmul.f32 %v2394, %v817
      %v2397 = vadd.f32 %v2395, 1e-05
      %v2398 = vadd.f32 %v2396, 1e-05
      %v2399 = vrsqrt.pop %v2397
      %v2400 = vrsqrt.pop %v2398
      %v2401 = vmul.f32 %v2385, %v2399
      %v2402 = vmul.f32 %v2386, %v2400
      %v2404 = vlaneseq
      %v2405 = vshrl.u32 %v2404, 7
      %v2406 = vsub.s32 0, %v2405
      %v2407 = vrot.slane %v2374, %v2406
      %v2409 = vmul.f32 %v2401, %v2407
      %v2410 = vmul.f32 %v2402, %v2407
      %v2412 = vlaneseq
      %v2413 = vshrl.u32 %v2412, 7
      %v2414 = vsub.s32 0, %v2413
      %v2415 = vrot.slane %v2376, %v2414
      %v2417 = vadd.f32 %v2409, %v2415
      %v2418 = vadd.f32 %v2410, %v2415
      %s2419 = scalar_lea.vmem %s14, 32
      %v2420 = vld [vmem:[%s2419] sm:$0xff]
      %v2421 = vld [vmem:[%s2419 + $0x8] sm:$0xff]
      %v2422 = vld [vmem:[%s2419 + $0x10] sm:$0xff]
      %v2423 = vld [vmem:[%s2419 + $0x18] sm:$0xff]
      %s2424 = scalar_lea.vmem %s15, 1
      %v2425 = vld [vmem:[%s2424] sm:$0x1]
      %v2426 = vpack.c.bf16 %v2418, %v2417
      %v2427 = vpack.c.bf16 %v2421, %v2420
      %v2428 = vpack.c.bf16 %v2423, %v2422
      %v2430 = vlaneseq
      %v2431 = vshrl.u32 %v2430, 7
      %v2432 = vsub.s32 0, %v2431
      %v2433 = vrot.slane %v2425, %v2432
      %v2436 = vsel %vm760, %v2426, 0
      %2438 = vmatprep.subr.bf16.mxu0 0
      %2439 = vmatpush1.bf16.msra.mxu0 %v2427
      %2440 = vmatprep.subr.bf16.mxu0 0
      %2441 = vmatpush1.bf16.msra.mxu0 %v2428
      %2442 = vmatprep.subr.bf16.mxu0 0
      %2443 = vmatpush1.bf16.msra.mxu0 0
      %2444 = vmatprep.subr.bf16.mxu0 0
      %2445 = vmatpush1.bf16.msra.mxu0 0
      %2446 = vmatprep.subr.bf16.mxu0 0
      %2447 = vmatpush1.bf16.msra.mxu0 0
      %2448 = vmatprep.subr.bf16.mxu0 0
      %2449 = vmatpush1.bf16.msra.mxu0 0
      %2450 = vmatprep.subr.bf16.mxu0 0
      %2451 = vmatpush1.bf16.msra.mxu0 0
      %2452 = vmatprep.subr.bf16.mxu0 0
      %2453 = vmatpush1.bf16.msra.mxu0 0
      %2454 = vmatprep.subr.bf16.mxu0 0
      %2455 = vmatpush1.bf16.msra.mxu0 0
      %2456 = vmatprep.subr.bf16.mxu0 0
      %2457 = vmatpush1.bf16.msra.mxu0 0
      %2458 = vmatprep.subr.bf16.mxu0 0
      %2459 = vmatpush1.bf16.msra.mxu0 0
      %2460 = vmatprep.subr.bf16.mxu0 0
      %2461 = vmatpush1.bf16.msra.mxu0 0
      %2462 = vmatprep.subr.bf16.mxu0 0
      %2463 = vmatpush1.bf16.msra.mxu0 0
      %2464 = vmatprep.subr.bf16.mxu0 0
      %2465 = vmatpush1.bf16.msra.mxu0 0
      %2466 = vmatprep.subr.bf16.mxu0 0
      %2467 = vmatpush1.bf16.msra.mxu0 0
      %2468 = vmatprep.subr.bf16.mxu0 0
      %2469 = vmatpush1.bf16.msra.mxu0 0
      %2470 = vmatprep.mubr.bf16.mxu0 0
      %2471 = vmatmul.mubr.bf16.gmra.mrb[0].mxu0 %v2436
      %v2472 = vpop.f32.mrb[0].mxu0
      %v2473 = vadd.f32 %v2433, %v2472
      %v2474 = vpop.f32.mrb[0].mxu0
      %v2475 = vpop.f32.mrb[0].mxu0
      %v2476 = vadd.f32 %v2433, %v2475
      %v2477 = vpop.f32.mrb[0].mxu0
      %2478 = vdwg.mxu0
      %v2479 = vmul.f32 %v2473, %v2473
      %v2480 = vmul.f32 %v2476, %v2476
      %v2481 = vmul.f32 %v2473, %v2479
      %v2482 = vmul.f32 %v2476, %v2480
      %v2483 = vmul.f32 %v2481, 0.044715
      %v2484 = vmul.f32 %v2482, 0.044715
      %v2485 = vadd.f32 %v2473, %v2483
      %v2486 = vadd.f32 %v2476, %v2484
      %v2487 = vmul.f32 %v2485, 0.7978846
      %v2488 = vmul.f32 %v2486, 0.7978846
      %v2489 = vtanh.pop %v2487
      %v2490 = vtanh.pop %v2488
      %v2491 = vadd.f32 %v2489, 1.0
      %v2492 = vadd.f32 %v2490, 1.0
      %v2493 = vmul.f32 %v2491, 0.5
      %v2494 = vmul.f32 %v2492, 0.5
      %v2495 = vmul.f32 %v2473, %v2493
      %v2496 = vmul.f32 %v2476, %v2494
      %s2497 = scalar_lea.vmem %s16, 128
      %v2498 = vld [vmem:[%s2497] sm:$0xff]
      %v2499 = vld [vmem:[%s2497 + $0x8] sm:$0xff]
      %v2500 = vld [vmem:[%s2497 + $0x10] sm:$0xff]
      %v2501 = vld [vmem:[%s2497 + $0x18] sm:$0xff]
      %v2502 = vld [vmem:[%s2497 + $0x20] sm:$0xff]
      %v2503 = vld [vmem:[%s2497 + $0x28] sm:$0xff]
      %v2504 = vld [vmem:[%s2497 + $0x30] sm:$0xff]
      %v2505 = vld [vmem:[%s2497 + $0x38] sm:$0xff]
      %v2506 = vld [vmem:[%s2497 + $0x40] sm:$0xff]
      %v2507 = vld [vmem:[%s2497 + $0x48] sm:$0xff]
      %v2508 = vld [vmem:[%s2497 + $0x50] sm:$0xff]
      %v2509 = vld [vmem:[%s2497 + $0x58] sm:$0xff]
      %v2510 = vld [vmem:[%s2497 + $0x60] sm:$0xff]
      %v2511 = vld [vmem:[%s2497 + $0x68] sm:$0xff]
      %v2512 = vld [vmem:[%s2497 + $0x70] sm:$0xff]
      %v2513 = vld [vmem:[%s2497 + $0x78] sm:$0xff]
      %s2514 = scalar_lea.vmem %s17, 1
      %v2515 = vld [vmem:[%s2514] sm:$0x1]
      %v2516 = vpack.c.bf16 %v2496, %v2495
      %v2517 = vpack.c.bf16 %v2499, %v2498
      %v2518 = vpack.c.bf16 %v2501, %v2500
      %v2519 = vpack.c.bf16 %v2503, %v2502
      %v2520 = vpack.c.bf16 %v2505, %v2504
      %v2521 = vpack.c.bf16 %v2507, %v2506
      %v2522 = vpack.c.bf16 %v2509, %v2508
      %v2523 = vpack.c.bf16 %v2511, %v2510
      %v2524 = vpack.c.bf16 %v2513, %v2512
      %v2526 = vlaneseq
      %v2527 = vshrl.u32 %v2526, 7
      %v2528 = vsub.s32 0, %v2527
      %v2529 = vrot.slane %v2515, %v2528
      %2531 = vmatprep.subr.bf16.mxu0 0
      %2532 = vmatpush1.bf16.msra.mxu0 %v2517
      %2533 = vmatprep.subr.bf16.mxu0 0
      %2534 = vmatpush1.bf16.msra.mxu0 %v2518
      %2535 = vmatprep.subr.bf16.mxu0 0
      %2536 = vmatpush1.bf16.msra.mxu0 %v2519
      %2537 = vmatprep.subr.bf16.mxu0 0
      %2538 = vmatpush1.bf16.msra.mxu0 %v2520
      %2539 = vmatprep.subr.bf16.mxu0 0
      %2540 = vmatpush1.bf16.msra.mxu0 %v2521
      %2541 = vmatprep.subr.bf16.mxu0 0
      %2542 = vmatpush1.bf16.msra.mxu0 %v2522
      %2543 = vmatprep.subr.bf16.mxu0 0
      %2544 = vmatpush1.bf16.msra.mxu0 %v2523
      %2545 = vmatprep.subr.bf16.mxu0 0
      %2546 = vmatpush1.bf16.msra.mxu0 %v2524
      %2547 = vmatprep.subr.bf16.mxu0 0
      %2548 = vmatpush1.bf16.msra.mxu0 0
      %2549 = vmatprep.subr.bf16.mxu0 0
      %2550 = vmatpush1.bf16.msra.mxu0 0
      %2551 = vmatprep.subr.bf16.mxu0 0
      %2552 = vmatpush1.bf16.msra.mxu0 0
      %2553 = vmatprep.subr.bf16.mxu0 0
      %2554 = vmatpush1.bf16.msra.mxu0 0
      %2555 = vmatprep.subr.bf16.mxu0 0
      %2556 = vmatpush1.bf16.msra.mxu0 0
      %2557 = vmatprep.subr.bf16.mxu0 0
      %2558 = vmatpush1.bf16.msra.mxu0 0
      %2559 = vmatprep.subr.bf16.mxu0 0
      %2560 = vmatpush1.bf16.msra.mxu0 0
      %2561 = vmatprep.subr.bf16.mxu0 0
      %2562 = vmatpush1.bf16.msra.mxu0 0
      %2563 = vmatprep.mubr.bf16.mxu0 0
      %2564 = vmatmul.mubr.bf16.gmra.mrb[0].mxu0 %v2516
      %v2565 = vpop.f32.mrb[0].mxu0
      %v2566 = vadd.f32 %v2529, %v2565
      %v2567 = vpop.f32.mrb[0].mxu0
      %v2568 = vpop.f32.mrb[0].mxu0
      %v2569 = vadd.f32 %v2529, %v2568
      %v2570 = vpop.f32.mrb[0].mxu0
      %2571 = vdwg.mxu0
      %v2572 = vadd.f32 %v2371, %v2566
      %v2573 = vadd.f32 %v2372, %v2569
      %v2574 = vld [vmem:[%s18] sm:$0x1]
      %v2575 = vld [vmem:[%s19] sm:$0x1]
      %v2576 = vsel %vm760, %v2572, 0.0
      %2577 = vadd.xlane.f32.xlu0 %v2576
      %v2578 = vpop.xlane.xlu0 %2577
      %v2579 = vsel %vm760, %v2573, 0.0
      %2580 = vadd.xlane.f32.xlu0 %v2579
      %v2581 = vpop.xlane.xlu0 %2580
      %v2582 = vmul.f32 %v2578, %v817
      %v2583 = vmul.f32 %v2581, %v817
      %v2584 = vsub.f32 %v2572, %v2582
      %v2585 = vsub.f32 %v2573, %v2583
      %v2586 = vmul.f32 %v2584, %v2584
      %v2587 = vmul.f32 %v2585, %v2585
      %v2588 = vsel %vm760, %v2586, 0.0
      %2589 = vadd.xlane.f32.xlu0 %v2588
      %v2590 = vpop.xlane.xlu0 %2589
      %v2591 = vsel %vm760, %v2587, 0.0
      %2592 = vadd.xlane.f32.xlu0 %v2591
      %v2593 = vpop.xlane.xlu0 %2592
      %v2594 = vmul.f32 %v2590, %v817
      %v2595 = vmul.f32 %v2593, %v817
      %v2596 = vadd.f32 %v2594, 1e-05
      %v2597 = vadd.f32 %v2595, 1e-05
      %v2598 = vrsqrt.pop %v2596
      %v2599 = vrsqrt.pop %v2597
      %v2600 = vmul.f32 %v2584, %v2598
      %v2601 = vmul.f32 %v2585, %v2599
      %v2603 = vlaneseq
      %v2604 = vshrl.u32 %v2603, 7
      %v2605 = vsub.s32 0, %v2604
      %v2606 = vrot.slane %v2574, %v2605
      %v2608 = vmul.f32 %v2600, %v2606
      %v2609 = vmul.f32 %v2601, %v2606
      %v2611 = vlaneseq
      %v2612 = vshrl.u32 %v2611, 7
      %v2613 = vsub.s32 0, %v2612
      %v2614 = vrot.slane %v2575, %v2613
      %v2616 = vadd.f32 %v2608, %v2614
      %v2617 = vadd.f32 %v2609, %v2614
      %v2618 = vld [vmem:[%s20] sm:$0xff]
      %v2619 = vld [vmem:[%s20 + $0x8] sm:$0xff]
      %v2620 = vld [vmem:[%s20 + $0x10] sm:$0xff]
      %v2621 = vld [vmem:[%s20 + $0x18] sm:$0xff]
      %v2622 = vld [vmem:[%s21] sm:$0x1]
      %v2623 = vpack.c.bf16 %v2617, %v2616
      %v2624 = vpack.c.bf16 %v2619, %v2618
      %v2625 = vpack.c.bf16 %v2621, %v2620
      %v2627 = vlaneseq
      %v2628 = vshrl.u32 %v2627, 7
      %v2629 = vsub.s32 0, %v2628
      %v2630 = vrot.slane %v2622, %v2629
      %v2633 = vsel %vm760, %v2623, 0
      %2635 = vmatprep.subr.bf16.mxu0 0
      %2636 = vmatpush1.bf16.msra.mxu0 %v2624
      %2637 = vmatprep.subr.bf16.mxu0 0
      %2638 = vmatpush1.bf16.msra.mxu0 %v2625
      %2639 = vmatprep.subr.bf16.mxu0 0
      %2640 = vmatpush1.bf16.msra.mxu0 0
      %2641 = vmatprep.subr.bf16.mxu0 0
      %2642 = vmatpush1.bf16.msra.mxu0 0
      %2643 = vmatprep.subr.bf16.mxu0 0
      %2644 = vmatpush1.bf16.msra.mxu0 0
      %2645 = vmatprep.subr.bf16.mxu0 0
      %2646 = vmatpush1.bf16.msra.mxu0 0
      %2647 = vmatprep.subr.bf16.mxu0 0
      %2648 = vmatpush1.bf16.msra.mxu0 0
      %2649 = vmatprep.subr.bf16.mxu0 0
      %2650 = vmatpush1.bf16.msra.mxu0 0
      %2651 = vmatprep.subr.bf16.mxu0 0
      %2652 = vmatpush1.bf16.msra.mxu0 0
      %2653 = vmatprep.subr.bf16.mxu0 0
      %2654 = vmatpush1.bf16.msra.mxu0 0
      %2655 = vmatprep.subr.bf16.mxu0 0
      %2656 = vmatpush1.bf16.msra.mxu0 0
      %2657 = vmatprep.subr.bf16.mxu0 0
      %2658 = vmatpush1.bf16.msra.mxu0 0
      %2659 = vmatprep.subr.bf16.mxu0 0
      %2660 = vmatpush1.bf16.msra.mxu0 0
      %2661 = vmatprep.subr.bf16.mxu0 0
      %2662 = vmatpush1.bf16.msra.mxu0 0
      %2663 = vmatprep.subr.bf16.mxu0 0
      %2664 = vmatpush1.bf16.msra.mxu0 0
      %2665 = vmatprep.subr.bf16.mxu0 0
      %2666 = vmatpush1.bf16.msra.mxu0 0
      %2667 = vmatprep.mubr.bf16.mxu0 0
      %2668 = vmatmul.mubr.bf16.gmra.mrb[0].mxu0 %v2633
      %v2669 = vpop.f32.mrb[0].mxu0
      %v2670 = vadd.f32 %v2630, %v2669
      %v2671 = vpop.f32.mrb[0].mxu0
      %v2672 = vpop.f32.mrb[0].mxu0
      %v2673 = vadd.f32 %v2630, %v2672
      %v2674 = vpop.f32.mrb[0].mxu0
      %2675 = vdwg.mxu0
      %vm2676 = vcmask 392192
      %2677 = vst.msk [vmem:[%s683] sm:$0xff] %vm2676, %v2670
      %2678 = vst.msk [vmem:[%s683 + $0x8] sm:$0xff] %vm2676, %v2673
      %p2679 = scmp.lt.s32.totalorder %s33, 1
      %s2680 = scalar_select %p2679, %s33, 1
      %s2681 = smul.addr %s2680, 2
      %s2682 = smul.addr %s2681, 8
      %s2683 = scalar_lea.vmem %s22, %s2682
      // Predicated region
      $region109: #{_lambda_.1} parent=107 // pred_check
        %p2684 = pneg %p518
      $region110: #{_lambda_.1} parent=107 // pred_check_branch
        %2686 = sbr.rel (%p2684) target = $region112
      $region111: #{_lambda_.1} parent=107 // pred_region
        _
      $region112: #{_lambda_.1} parent=107 // pred_fallthru
        _
    $region108: #{_lambda_.1} parent=5 // pred_fallthru
      _
    %p2687 = scmp.le.s32.totalorder 2, %s28
    // Predicated region
    $region113: #{_lambda_.1} parent=5 // pred_check
      %p2688 = pneg %p2687
    $region114: #{_lambda_.1} parent=5 // pred_check_branch
      %2690 = sbr.rel (%p2688) target = $region116
    $region115: #{_lambda_.1} parent=5 // pred_region
      %s2691 = ssub.s32 %s28, 2
      // Predicated region
      $region117: #{_lambda_.1} parent=115 // pred_check
        %p2692 = pneg %p524
      $region118: #{_lambda_.1} parent=115 // pred_check_branch
        %2694 = sbr.rel (%p2692) target = $region120
      $region119: #{_lambda_.1} parent=115 // pred_region
        %p2695 = scmp.lt.s32.totalorder %s34, 1
        %s2696 = scalar_select %p2695, %s34, 1
        %s2697 = smul.addr %s2696, 2
        %s2698 = smul.addr %s2697, 8
        %s2699 = scalar_lea.vmem %s22, %s2698
      $region120: #{_lambda_.1} parent=115 // pred_fallthru
        _
    $region116: #{_lambda_.1} parent=5 // pred_fallthru
      _
  $region6: #{_lambda_.1} parent=0 // loop_footer
    %s32 = sadd.s32 1, %s28
  $region7: #{_lambda_.1} parent=0 // loop_footer_branch
    %27 = sbr.rel target = $region3
  $region8: #{_lambda_.1} parent=0 // loop_exit
    _

</llo_original>
